<compile_context>
chip_gen: v5e
topology: v5e:2x2
jax: 0.10.0
libtpu: 0.0.40
codegen_flags: <defaults>
</compile_context>

<pallas_src>
import jax
import jax.numpy as jnp
from jax.experimental import pallas as pl
from jax.experimental.pallas import tpu as pltpu


def _fused_lm_kernel(ids_ref, emb_ref, w1_ref, b1_ref, w2_ref, b2_ref,
                     w3_ref, b3_ref, o_ref, h2_ref):
    # ids: (TM, L) i32      emb: (V_in, E) bf16
    # w1: (L*E, H) bf16     w2: (H, H) bf16      w3: (H, TN) bf16
    # b1/b2: (1, H) f32     b3: (1, TN) f32      o: (TM, TN) f32
    # h2_ref: VMEM scratch (TM, H) bf16, cached across vocab (j) tiles.

    # fc1 + fc2 (and the fused embedding gather) run only on the first vocab
    # tile of each batch tile; the result is cached in h2_ref for j > 0.
    @pl.when(pl.program_id(1) == 0)
    def _():
        ids = ids_ref[...]                          # (TM, L) int32
        tm, L = ids.shape
        V_in, E = emb_ref.shape
        H = w1_ref.shape[1]
        emb = emb_ref[...]                          # (V_in, E) bf16

        # One-hot gather on the MXU: x_l = onehot(ids[:, l]) @ emb selects the
        # embedding rows for position l; fc1 is accumulated position-by-
        # position (x @ W1 == sum_l x_l @ W1[l*E:(l+1)*E, :]), so the flat
        # (TM, L*E) activation is never materialized.
        vocab_iota = jax.lax.broadcasted_iota(jnp.int32, (tm, V_in), 1)
        h1 = jnp.zeros((tm, H), jnp.float32)
        for l in range(L):                          # static, small L
            onehot = (ids[:, l:l + 1] == vocab_iota).astype(jnp.bfloat16)
            x_l = jnp.dot(onehot, emb,
                          preferred_element_type=jnp.float32)
            x_l = x_l.astype(jnp.bfloat16)          # exact: rows of bf16 emb
            h1 = h1 + jnp.dot(x_l, w1_ref[pl.ds(l * E, E), :],
                              preferred_element_type=jnp.float32)
        h1 = jnp.maximum(h1 + b1_ref[...], 0.0).astype(jnp.bfloat16)

        h2 = jnp.dot(h1, w2_ref[...], preferred_element_type=jnp.float32)
        h2_ref[...] = jnp.maximum(h2 + b2_ref[...], 0.0).astype(jnp.bfloat16)

    # fc3 vocab tile (runs every grid step), f32 epilogue.
    o_ref[...] = (
        jnp.dot(h2_ref[...], w3_ref[...], preferred_element_type=jnp.float32)
        + b3_ref[...]
    )


def neural_lm1_forward(context, params, *, vocab_size=None, tm=128, tn=512):
    """context: (B, L) int token ids.  Returns f32 logits (B, vocab_size).

    tm: batch tile (128 = native MXU rows on v5e; bump to 256 on v6e/v7x when
        B >= 256 and the kernel is MXU-bound).
    tn: vocab tile (lane-dense multiple of 256; clamped to the padded vocab).
    """
    emb, w1, b1, w2, b2, w3, b3 = params
    B, L = context.shape
    V_emb, E = emb.shape
    in_dim, H = w1.shape
    assert in_dim == L * E, "w1 input dim must equal max_length * embedding_dim"

    Vp = w3.shape[1]                     # already padded to a 256 multiple
    assert Vp % 256 == 0, "pad w3/b3 vocab dim at init time (init_params)"
    V = Vp if vocab_size is None else vocab_size

    tn = min(tn, Vp)
    if Vp % tn != 0:
        tn = 256                         # Vp is always a 256 multiple

    m_pad = pl.cdiv(B, tm) * tm
    ids = context.astype(jnp.int32)
    if m_pad != B:
        # Padded rows produce garbage logits and are sliced off below.
        ids = jnp.pad(ids, ((0, m_pad - B), (0, 0)))

    out = pl.pallas_call(
        _fused_lm_kernel,
        out_shape=jax.ShapeDtypeStruct((m_pad, Vp), jnp.float32),
        grid_spec=pltpu.PrefetchScalarGridSpec(
            num_scalar_prefetch=0,
            # Batch-major, vocab innermost: required for the h2 scratch reuse.
            grid=(m_pad // tm, Vp // tn),
            in_specs=[
                pl.BlockSpec((tm, L), lambda i, j: (i, 0)),        # ids tile
                pl.BlockSpec((V_emb, E), lambda i, j: (0, 0)),     # emb table
                pl.BlockSpec((in_dim, H), lambda i, j: (0, 0)),    # w1
                pl.BlockSpec((1, H), lambda i, j: (0, 0)),         # b1
                pl.BlockSpec((H, H), lambda i, j: (0, 0)),         # w2
                pl.BlockSpec((1, H), lambda i, j: (0, 0)),         # b2
                pl.BlockSpec((H, tn), lambda i, j: (0, j)),        # w3 tile
                pl.BlockSpec((1, tn), lambda i, j: (0, j)),        # b3 tile
            ],
            out_specs=pl.BlockSpec((tm, tn), lambda i, j: (i, j)),
            scratch_shapes=[pltpu.VMEM((tm, H), jnp.bfloat16)],
        ),
        compiler_params=pltpu.CompilerParams(
            # Batch axis shards across TCs (megacore / v7x); vocab axis is the
            # sequential reduction-style axis the h2 cache depends on.
            dimension_semantics=("parallel", "arbitrary"),
        ),
    )(ids, emb, w1, b1, w2, b2, w3, b3)
    return out[:B, :V]


def init_params(key, vocab_size, embedding_dim=64, hidden_dim=128,
                max_length=10, vocab_pad_multiple=256):
    """bf16 weights (MXU-native, half the DMA bytes), f32 biases.
    w3/b3 are padded to a vocab multiple of 256 here (once), not per call."""
    k = jax.random.split(key, 7)
    in_dim = embedding_dim * max_length
    emb = jax.random.normal(k[0], (vocab_size, embedding_dim), jnp.float32)
    w1 = jax.random.normal(k[1], (in_dim, hidden_dim), jnp.float32) * 0.02
    b1 = jax.random.normal(k[2], (1, hidden_dim), jnp.float32) * 0.02
    w2 = jax.random.normal(k[3], (hidden_dim, hidden_dim), jnp.float32) * 0.02
    b2 = jax.random.normal(k[4], (1, hidden_dim), jnp.float32) * 0.02
    w3 = jax.random.normal(k[5], (hidden_dim, vocab_size), jnp.float32) * 0.02
    b3 = jax.random.normal(k[6], (1, vocab_size), jnp.float32) * 0.02
    vp = pl.cdiv(vocab_size, vocab_pad_multiple) * vocab_pad_multiple
    if vp != vocab_size:
        w3 = jnp.pad(w3, ((0, 0), (0, vp - vocab_size)))
        b3 = jnp.pad(b3, ((0, 0), (0, vp - vocab_size)))
    return (emb.astype(jnp.bfloat16),
            w1.astype(jnp.bfloat16), b1,
            w2.astype(jnp.bfloat16), b2,
            w3.astype(jnp.bfloat16), b3)


def reference_forward(context, params, vocab_size):
    """Pure-JAX reference with identical bf16-weight / f32-accumulate math."""
    emb, w1, b1, w2, b2, w3, b3 = params
    B, _ = context.shape
    x = jnp.take(emb, context, axis=0).reshape(B, -1)
    h1 = jnp.maximum(jnp.dot(x, w1, preferred_element_type=jnp.float32) + b1, 0.0)
    h1 = h1.astype(jnp.bfloat16)
    h2 = jnp.maximum(jnp.dot(h1, w2, preferred_element_type=jnp.float32) + b2, 0.0)
    h2 = h2.astype(jnp.bfloat16)
    out = jnp.dot(h2, w3, preferred_element_type=jnp.float32) + b3
    return out[:, :vocab_size]


if __name__ == "__main__":
    vocab_size = 256
    embedding_dim = 64
    hidden_dim = 128
    max_length = 10
    batch = 256          # 2 batch tiles of 128 -> "parallel" axis has 2 programs

    key = jax.random.PRNGKey(0)
    pkey, ckey = jax.random.split(key)
    params = init_params(pkey, vocab_size, embedding_dim, hidden_dim, max_length)
    context = jax.random.randint(ckey, (batch, max_length), 0, vocab_size,
                                 jnp.int32)

    logits = neural_lm1_forward(context, params, vocab_size=vocab_size)
    logits = jax.block_until_ready(logits)

    ref = reference_forward(context, params, vocab_size)
    assert logits.shape == (batch, vocab_size)
    assert jnp.allclose(logits, ref, atol=1e-2, rtol=1e-2)

    print("KERNEL_OK")
</pallas_src>

<mosaic_0001>
module attributes {stable_mosaic.version = 11 : i64} {
  func.func @_fused_lm_kernel(%arg0: i32, %arg1: i32, %arg2: memref<128x10xi32, #tpu.memory_space<vmem>>, %arg3: memref<256x64xbf16, #tpu.memory_space<vmem>>, %arg4: memref<640x128xbf16, #tpu.memory_space<vmem>>, %arg5: memref<1x128xf32, #tpu.memory_space<vmem>>, %arg6: memref<128x128xbf16, #tpu.memory_space<vmem>>, %arg7: memref<1x128xf32, #tpu.memory_space<vmem>>, %arg8: memref<128x256xbf16, #tpu.memory_space<vmem>>, %arg9: memref<1x256xf32, #tpu.memory_space<vmem>>, %arg10: memref<128x256xf32, #tpu.memory_space<vmem>>, %arg11: memref<128x128xbf16, #tpu.memory_space<vmem>>) attributes {dimension_semantics = [#tpu.dimension_semantics<parallel>, #tpu.dimension_semantics<arbitrary>], iteration_bounds = array<i64: 2, 1>, scalar_prefetch = 0 : i64, scratch_operands = 1 : i64, tpu.core_type = #tpu.core_type<tc>, window_params = [{transform_indices = @transform_0, window_bounds = array<i64: 128, 10>}, {pipeline_mode = #tpu.pipeline_mode<synchronous>, transform_indices = @transform_1, window_bounds = array<i64: 256, 64>}, {pipeline_mode = #tpu.pipeline_mode<synchronous>, transform_indices = @transform_2, window_bounds = array<i64: 640, 128>}, {pipeline_mode = #tpu.pipeline_mode<synchronous>, transform_indices = @transform_3, window_bounds = array<i64: 1, 128>}, {pipeline_mode = #tpu.pipeline_mode<synchronous>, transform_indices = @transform_4, window_bounds = array<i64: 128, 128>}, {pipeline_mode = #tpu.pipeline_mode<synchronous>, transform_indices = @transform_5, window_bounds = array<i64: 1, 128>}, {transform_indices = @transform_6, window_bounds = array<i64: 128, 256>}, {transform_indices = @transform_7, window_bounds = array<i64: 1, 256>}, {transform_indices = @transform_8, window_bounds = array<i64: 128, 256>}]} {
    %c0_i32 = arith.constant 0 : i32
    %0 = arith.cmpi eq, %arg1, %c0_i32 : i32
    %1 = arith.extui %0 : i1 to i32
    %c0_i32_0 = arith.constant 0 : i32
    %2 = arith.cmpi ne, %1, %c0_i32_0 : i32
    scf.if %2 {
      %c0_8 = arith.constant 0 : index
      %c0_9 = arith.constant 0 : index
      %10 = vector.load %arg2[%c0_8, %c0_9] : memref<128x10xi32, #tpu.memory_space<vmem>>, vector<128x10xi32>
      %c0_10 = arith.constant 0 : index
      %c0_11 = arith.constant 0 : index
      %11 = vector.load %arg3[%c0_10, %c0_11] : memref<256x64xbf16, #tpu.memory_space<vmem>>, vector<256x64xbf16>
      %12 = tpu.iota {dimensions = array<i32: 1>} : vector<128x256xi32>
      %cst_12 = arith.constant 0.000000e+00 : f32
      %13 = vector.broadcast %cst_12 : f32 to vector<128x128xf32>
      %14 = vector.extract_strided_slice %10 {offsets = [0, 0], sizes = [128, 1], strides = [1, 1]} : vector<128x10xi32> to vector<128x1xi32>
      %15 = vector.broadcast %14 : vector<128x1xi32> to vector<128x256xi32>
      %16 = arith.cmpi eq, %15, %12 : vector<128x256xi32>
      %17 = arith.extui %16 : vector<128x256xi1> to vector<128x256xi32>
      %18 = arith.sitofp %17 : vector<128x256xi32> to vector<128x256xf32>
      %19 = arith.truncf %18 : vector<128x256xf32> to vector<128x256xbf16>
      %cst_13 = arith.constant dense<0.000000e+00> : vector<128x64xf32>
      %20 = tpu.matmul %19, %11, %cst_13 {dimension_numbers = #tpu.dot_dimension_numbers<[1], [0], [0], [1], [0, 0, 1, 1], [], []>} : vector<128x256xbf16>, vector<256x64xbf16>, vector<128x64xf32> -> vector<128x64xf32>
      %21 = arith.truncf %20 : vector<128x64xf32> to vector<128x64xbf16>
      %c0_14 = arith.constant 0 : index
      %c0_15 = arith.constant 0 : index
      %22 = vector.load %arg4[%c0_14, %c0_15] : memref<640x128xbf16, #tpu.memory_space<vmem>>, vector<64x128xbf16>
      %cst_16 = arith.constant dense<0.000000e+00> : vector<128x128xf32>
      %23 = tpu.matmul %21, %22, %cst_16 {dimension_numbers = #tpu.dot_dimension_numbers<[1], [0], [0], [1], [0, 0, 1, 1], [], []>} : vector<128x64xbf16>, vector<64x128xbf16>, vector<128x128xf32> -> vector<128x128xf32>
      %24 = arith.addf %13, %23 : vector<128x128xf32>
      %25 = vector.extract_strided_slice %10 {offsets = [0, 1], sizes = [128, 1], strides = [1, 1]} : vector<128x10xi32> to vector<128x1xi32>
      %26 = vector.broadcast %25 : vector<128x1xi32> to vector<128x256xi32>
      %27 = arith.cmpi eq, %26, %12 : vector<128x256xi32>
      %28 = arith.extui %27 : vector<128x256xi1> to vector<128x256xi32>
      %29 = arith.sitofp %28 : vector<128x256xi32> to vector<128x256xf32>
      %30 = arith.truncf %29 : vector<128x256xf32> to vector<128x256xbf16>
      %cst_17 = arith.constant dense<0.000000e+00> : vector<128x64xf32>
      %31 = tpu.matmul %30, %11, %cst_17 {dimension_numbers = #tpu.dot_dimension_numbers<[1], [0], [0], [1], [0, 0, 1, 1], [], []>} : vector<128x256xbf16>, vector<256x64xbf16>, vector<128x64xf32> -> vector<128x64xf32>
      %32 = arith.truncf %31 : vector<128x64xf32> to vector<128x64xbf16>
      %c64 = arith.constant 64 : index
      %c0_18 = arith.constant 0 : index
      %33 = vector.load %arg4[%c64, %c0_18] : memref<640x128xbf16, #tpu.memory_space<vmem>>, vector<64x128xbf16>
      %cst_19 = arith.constant dense<0.000000e+00> : vector<128x128xf32>
      %34 = tpu.matmul %32, %33, %cst_19 {dimension_numbers = #tpu.dot_dimension_numbers<[1], [0], [0], [1], [0, 0, 1, 1], [], []>} : vector<128x64xbf16>, vector<64x128xbf16>, vector<128x128xf32> -> vector<128x128xf32>
      %35 = arith.addf %24, %34 : vector<128x128xf32>
      %36 = vector.extract_strided_slice %10 {offsets = [0, 2], sizes = [128, 1], strides = [1, 1]} : vector<128x10xi32> to vector<128x1xi32>
      %37 = vector.broadcast %36 : vector<128x1xi32> to vector<128x256xi32>
      %38 = arith.cmpi eq, %37, %12 : vector<128x256xi32>
      %39 = arith.extui %38 : vector<128x256xi1> to vector<128x256xi32>
      %40 = arith.sitofp %39 : vector<128x256xi32> to vector<128x256xf32>
      %41 = arith.truncf %40 : vector<128x256xf32> to vector<128x256xbf16>
      %cst_20 = arith.constant dense<0.000000e+00> : vector<128x64xf32>
      %42 = tpu.matmul %41, %11, %cst_20 {dimension_numbers = #tpu.dot_dimension_numbers<[1], [0], [0], [1], [0, 0, 1, 1], [], []>} : vector<128x256xbf16>, vector<256x64xbf16>, vector<128x64xf32> -> vector<128x64xf32>
      %43 = arith.truncf %42 : vector<128x64xf32> to vector<128x64xbf16>
      %c128 = arith.constant 128 : index
      %c0_21 = arith.constant 0 : index
      %44 = vector.load %arg4[%c128, %c0_21] : memref<640x128xbf16, #tpu.memory_space<vmem>>, vector<64x128xbf16>
      %cst_22 = arith.constant dense<0.000000e+00> : vector<128x128xf32>
      %45 = tpu.matmul %43, %44, %cst_22 {dimension_numbers = #tpu.dot_dimension_numbers<[1], [0], [0], [1], [0, 0, 1, 1], [], []>} : vector<128x64xbf16>, vector<64x128xbf16>, vector<128x128xf32> -> vector<128x128xf32>
      %46 = arith.addf %35, %45 : vector<128x128xf32>
      %47 = vector.extract_strided_slice %10 {offsets = [0, 3], sizes = [128, 1], strides = [1, 1]} : vector<128x10xi32> to vector<128x1xi32>
      %48 = vector.broadcast %47 : vector<128x1xi32> to vector<128x256xi32>
      %49 = arith.cmpi eq, %48, %12 : vector<128x256xi32>
      %50 = arith.extui %49 : vector<128x256xi1> to vector<128x256xi32>
      %51 = arith.sitofp %50 : vector<128x256xi32> to vector<128x256xf32>
      %52 = arith.truncf %51 : vector<128x256xf32> to vector<128x256xbf16>
      %cst_23 = arith.constant dense<0.000000e+00> : vector<128x64xf32>
      %53 = tpu.matmul %52, %11, %cst_23 {dimension_numbers = #tpu.dot_dimension_numbers<[1], [0], [0], [1], [0, 0, 1, 1], [], []>} : vector<128x256xbf16>, vector<256x64xbf16>, vector<128x64xf32> -> vector<128x64xf32>
      %54 = arith.truncf %53 : vector<128x64xf32> to vector<128x64xbf16>
      %c192 = arith.constant 192 : index
      %c0_24 = arith.constant 0 : index
      %55 = vector.load %arg4[%c192, %c0_24] : memref<640x128xbf16, #tpu.memory_space<vmem>>, vector<64x128xbf16>
      %cst_25 = arith.constant dense<0.000000e+00> : vector<128x128xf32>
      %56 = tpu.matmul %54, %55, %cst_25 {dimension_numbers = #tpu.dot_dimension_numbers<[1], [0], [0], [1], [0, 0, 1, 1], [], []>} : vector<128x64xbf16>, vector<64x128xbf16>, vector<128x128xf32> -> vector<128x128xf32>
      %57 = arith.addf %46, %56 : vector<128x128xf32>
      %58 = vector.extract_strided_slice %10 {offsets = [0, 4], sizes = [128, 1], strides = [1, 1]} : vector<128x10xi32> to vector<128x1xi32>
      %59 = vector.broadcast %58 : vector<128x1xi32> to vector<128x256xi32>
      %60 = arith.cmpi eq, %59, %12 : vector<128x256xi32>
      %61 = arith.extui %60 : vector<128x256xi1> to vector<128x256xi32>
      %62 = arith.sitofp %61 : vector<128x256xi32> to vector<128x256xf32>
      %63 = arith.truncf %62 : vector<128x256xf32> to vector<128x256xbf16>
      %cst_26 = arith.constant dense<0.000000e+00> : vector<128x64xf32>
      %64 = tpu.matmul %63, %11, %cst_26 {dimension_numbers = #tpu.dot_dimension_numbers<[1], [0], [0], [1], [0, 0, 1, 1], [], []>} : vector<128x256xbf16>, vector<256x64xbf16>, vector<128x64xf32> -> vector<128x64xf32>
      %65 = arith.truncf %64 : vector<128x64xf32> to vector<128x64xbf16>
      %c256 = arith.constant 256 : index
      %c0_27 = arith.constant 0 : index
      %66 = vector.load %arg4[%c256, %c0_27] : memref<640x128xbf16, #tpu.memory_space<vmem>>, vector<64x128xbf16>
      %cst_28 = arith.constant dense<0.000000e+00> : vector<128x128xf32>
      %67 = tpu.matmul %65, %66, %cst_28 {dimension_numbers = #tpu.dot_dimension_numbers<[1], [0], [0], [1], [0, 0, 1, 1], [], []>} : vector<128x64xbf16>, vector<64x128xbf16>, vector<128x128xf32> -> vector<128x128xf32>
      %68 = arith.addf %57, %67 : vector<128x128xf32>
      %69 = vector.extract_strided_slice %10 {offsets = [0, 5], sizes = [128, 1], strides = [1, 1]} : vector<128x10xi32> to vector<128x1xi32>
      %70 = vector.broadcast %69 : vector<128x1xi32> to vector<128x256xi32>
      %71 = arith.cmpi eq, %70, %12 : vector<128x256xi32>
      %72 = arith.extui %71 : vector<128x256xi1> to vector<128x256xi32>
      %73 = arith.sitofp %72 : vector<128x256xi32> to vector<128x256xf32>
      %74 = arith.truncf %73 : vector<128x256xf32> to vector<128x256xbf16>
      %cst_29 = arith.constant dense<0.000000e+00> : vector<128x64xf32>
      %75 = tpu.matmul %74, %11, %cst_29 {dimension_numbers = #tpu.dot_dimension_numbers<[1], [0], [0], [1], [0, 0, 1, 1], [], []>} : vector<128x256xbf16>, vector<256x64xbf16>, vector<128x64xf32> -> vector<128x64xf32>
      %76 = arith.truncf %75 : vector<128x64xf32> to vector<128x64xbf16>
      %c320 = arith.constant 320 : index
      %c0_30 = arith.constant 0 : index
      %77 = vector.load %arg4[%c320, %c0_30] : memref<640x128xbf16, #tpu.memory_space<vmem>>, vector<64x128xbf16>
      %cst_31 = arith.constant dense<0.000000e+00> : vector<128x128xf32>
      %78 = tpu.matmul %76, %77, %cst_31 {dimension_numbers = #tpu.dot_dimension_numbers<[1], [0], [0], [1], [0, 0, 1, 1], [], []>} : vector<128x64xbf16>, vector<64x128xbf16>, vector<128x128xf32> -> vector<128x128xf32>
      %79 = arith.addf %68, %78 : vector<128x128xf32>
      %80 = vector.extract_strided_slice %10 {offsets = [0, 6], sizes = [128, 1], strides = [1, 1]} : vector<128x10xi32> to vector<128x1xi32>
      %81 = vector.broadcast %80 : vector<128x1xi32> to vector<128x256xi32>
      %82 = arith.cmpi eq, %81, %12 : vector<128x256xi32>
      %83 = arith.extui %82 : vector<128x256xi1> to vector<128x256xi32>
      %84 = arith.sitofp %83 : vector<128x256xi32> to vector<128x256xf32>
      %85 = arith.truncf %84 : vector<128x256xf32> to vector<128x256xbf16>
      %cst_32 = arith.constant dense<0.000000e+00> : vector<128x64xf32>
      %86 = tpu.matmul %85, %11, %cst_32 {dimension_numbers = #tpu.dot_dimension_numbers<[1], [0], [0], [1], [0, 0, 1, 1], [], []>} : vector<128x256xbf16>, vector<256x64xbf16>, vector<128x64xf32> -> vector<128x64xf32>
      %87 = arith.truncf %86 : vector<128x64xf32> to vector<128x64xbf16>
      %c384 = arith.constant 384 : index
      %c0_33 = arith.constant 0 : index
      %88 = vector.load %arg4[%c384, %c0_33] : memref<640x128xbf16, #tpu.memory_space<vmem>>, vector<64x128xbf16>
      %cst_34 = arith.constant dense<0.000000e+00> : vector<128x128xf32>
      %89 = tpu.matmul %87, %88, %cst_34 {dimension_numbers = #tpu.dot_dimension_numbers<[1], [0], [0], [1], [0, 0, 1, 1], [], []>} : vector<128x64xbf16>, vector<64x128xbf16>, vector<128x128xf32> -> vector<128x128xf32>
      %90 = arith.addf %79, %89 : vector<128x128xf32>
      %91 = vector.extract_strided_slice %10 {offsets = [0, 7], sizes = [128, 1], strides = [1, 1]} : vector<128x10xi32> to vector<128x1xi32>
      %92 = vector.broadcast %91 : vector<128x1xi32> to vector<128x256xi32>
      %93 = arith.cmpi eq, %92, %12 : vector<128x256xi32>
      %94 = arith.extui %93 : vector<128x256xi1> to vector<128x256xi32>
      %95 = arith.sitofp %94 : vector<128x256xi32> to vector<128x256xf32>
      %96 = arith.truncf %95 : vector<128x256xf32> to vector<128x256xbf16>
      %cst_35 = arith.constant dense<0.000000e+00> : vector<128x64xf32>
      %97 = tpu.matmul %96, %11, %cst_35 {dimension_numbers = #tpu.dot_dimension_numbers<[1], [0], [0], [1], [0, 0, 1, 1], [], []>} : vector<128x256xbf16>, vector<256x64xbf16>, vector<128x64xf32> -> vector<128x64xf32>
      %98 = arith.truncf %97 : vector<128x64xf32> to vector<128x64xbf16>
      %c448 = arith.constant 448 : index
      %c0_36 = arith.constant 0 : index
      %99 = vector.load %arg4[%c448, %c0_36] : memref<640x128xbf16, #tpu.memory_space<vmem>>, vector<64x128xbf16>
      %cst_37 = arith.constant dense<0.000000e+00> : vector<128x128xf32>
      %100 = tpu.matmul %98, %99, %cst_37 {dimension_numbers = #tpu.dot_dimension_numbers<[1], [0], [0], [1], [0, 0, 1, 1], [], []>} : vector<128x64xbf16>, vector<64x128xbf16>, vector<128x128xf32> -> vector<128x128xf32>
      %101 = arith.addf %90, %100 : vector<128x128xf32>
      %102 = vector.extract_strided_slice %10 {offsets = [0, 8], sizes = [128, 1], strides = [1, 1]} : vector<128x10xi32> to vector<128x1xi32>
      %103 = vector.broadcast %102 : vector<128x1xi32> to vector<128x256xi32>
      %104 = arith.cmpi eq, %103, %12 : vector<128x256xi32>
      %105 = arith.extui %104 : vector<128x256xi1> to vector<128x256xi32>
      %106 = arith.sitofp %105 : vector<128x256xi32> to vector<128x256xf32>
      %107 = arith.truncf %106 : vector<128x256xf32> to vector<128x256xbf16>
      %cst_38 = arith.constant dense<0.000000e+00> : vector<128x64xf32>
      %108 = tpu.matmul %107, %11, %cst_38 {dimension_numbers = #tpu.dot_dimension_numbers<[1], [0], [0], [1], [0, 0, 1, 1], [], []>} : vector<128x256xbf16>, vector<256x64xbf16>, vector<128x64xf32> -> vector<128x64xf32>
      %109 = arith.truncf %108 : vector<128x64xf32> to vector<128x64xbf16>
      %c512 = arith.constant 512 : index
      %c0_39 = arith.constant 0 : index
      %110 = vector.load %arg4[%c512, %c0_39] : memref<640x128xbf16, #tpu.memory_space<vmem>>, vector<64x128xbf16>
      %cst_40 = arith.constant dense<0.000000e+00> : vector<128x128xf32>
      %111 = tpu.matmul %109, %110, %cst_40 {dimension_numbers = #tpu.dot_dimension_numbers<[1], [0], [0], [1], [0, 0, 1, 1], [], []>} : vector<128x64xbf16>, vector<64x128xbf16>, vector<128x128xf32> -> vector<128x128xf32>
      %112 = arith.addf %101, %111 : vector<128x128xf32>
      %113 = vector.extract_strided_slice %10 {offsets = [0, 9], sizes = [128, 1], strides = [1, 1]} : vector<128x10xi32> to vector<128x1xi32>
      %114 = vector.broadcast %113 : vector<128x1xi32> to vector<128x256xi32>
      %115 = arith.cmpi eq, %114, %12 : vector<128x256xi32>
      %116 = arith.extui %115 : vector<128x256xi1> to vector<128x256xi32>
      %117 = arith.sitofp %116 : vector<128x256xi32> to vector<128x256xf32>
      %118 = arith.truncf %117 : vector<128x256xf32> to vector<128x256xbf16>
      %cst_41 = arith.constant dense<0.000000e+00> : vector<128x64xf32>
      %119 = tpu.matmul %118, %11, %cst_41 {dimension_numbers = #tpu.dot_dimension_numbers<[1], [0], [0], [1], [0, 0, 1, 1], [], []>} : vector<128x256xbf16>, vector<256x64xbf16>, vector<128x64xf32> -> vector<128x64xf32>
      %120 = arith.truncf %119 : vector<128x64xf32> to vector<128x64xbf16>
      %c576 = arith.constant 576 : index
      %c0_42 = arith.constant 0 : index
      %121 = vector.load %arg4[%c576, %c0_42] : memref<640x128xbf16, #tpu.memory_space<vmem>>, vector<64x128xbf16>
      %cst_43 = arith.constant dense<0.000000e+00> : vector<128x128xf32>
      %122 = tpu.matmul %120, %121, %cst_43 {dimension_numbers = #tpu.dot_dimension_numbers<[1], [0], [0], [1], [0, 0, 1, 1], [], []>} : vector<128x64xbf16>, vector<64x128xbf16>, vector<128x128xf32> -> vector<128x128xf32>
      %123 = arith.addf %112, %122 : vector<128x128xf32>
      %c0_44 = arith.constant 0 : index
      %c0_45 = arith.constant 0 : index
      %124 = vector.load %arg5[%c0_44, %c0_45] : memref<1x128xf32, #tpu.memory_space<vmem>>, vector<1x128xf32>
      %125 = vector.broadcast %124 : vector<1x128xf32> to vector<128x128xf32>
      %126 = arith.addf %123, %125 : vector<128x128xf32>
      %cst_46 = arith.constant 0.000000e+00 : f32
      %127 = vector.broadcast %cst_46 : f32 to vector<128x128xf32>
      %128 = arith.maximumf %126, %127 : vector<128x128xf32>
      %129 = arith.truncf %128 : vector<128x128xf32> to vector<128x128xbf16>
      %c0_47 = arith.constant 0 : index
      %c0_48 = arith.constant 0 : index
      %130 = vector.load %arg6[%c0_47, %c0_48] : memref<128x128xbf16, #tpu.memory_space<vmem>>, vector<128x128xbf16>
      %cst_49 = arith.constant dense<0.000000e+00> : vector<128x128xf32>
      %131 = tpu.matmul %129, %130, %cst_49 {dimension_numbers = #tpu.dot_dimension_numbers<[1], [0], [0], [1], [0, 0, 1, 1], [], []>} : vector<128x128xbf16>, vector<128x128xbf16>, vector<128x128xf32> -> vector<128x128xf32>
      %c0_50 = arith.constant 0 : index
      %c0_51 = arith.constant 0 : index
      %132 = vector.load %arg7[%c0_50, %c0_51] : memref<1x128xf32, #tpu.memory_space<vmem>>, vector<1x128xf32>
      %133 = vector.broadcast %132 : vector<1x128xf32> to vector<128x128xf32>
      %134 = arith.addf %131, %133 : vector<128x128xf32>
      %cst_52 = arith.constant 0.000000e+00 : f32
      %135 = vector.broadcast %cst_52 : f32 to vector<128x128xf32>
      %136 = arith.maximumf %134, %135 : vector<128x128xf32>
      %137 = arith.truncf %136 : vector<128x128xf32> to vector<128x128xbf16>
      %c0_53 = arith.constant 0 : index
      %c0_54 = arith.constant 0 : index
      %138 = vector.load %arg11[%c0_53, %c0_54] : memref<128x128xbf16, #tpu.memory_space<vmem>>, vector<128x128xbf16>
      tpu.vector_store %arg11[%c0_53, %c0_54], %137 {strides = array<i32>} : memref<128x128xbf16, #tpu.memory_space<vmem>>, vector<128x128xbf16>,
    } else {
    }
    %c0 = arith.constant 0 : index
    %c0_1 = arith.constant 0 : index
    %3 = vector.load %arg11[%c0, %c0_1] : memref<128x128xbf16, #tpu.memory_space<vmem>>, vector<128x128xbf16>
    %c0_2 = arith.constant 0 : index
    %c0_3 = arith.constant 0 : index
    %4 = vector.load %arg8[%c0_2, %c0_3] : memref<128x256xbf16, #tpu.memory_space<vmem>>, vector<128x256xbf16>
    %cst = arith.constant dense<0.000000e+00> : vector<128x256xf32>
    %5 = tpu.matmul %3, %4, %cst {dimension_numbers = #tpu.dot_dimension_numbers<[1], [0], [0], [1], [0, 0, 1, 1], [], []>} : vector<128x128xbf16>, vector<128x256xbf16>, vector<128x256xf32> -> vector<128x256xf32>
    %c0_4 = arith.constant 0 : index
    %c0_5 = arith.constant 0 : index
    %6 = vector.load %arg9[%c0_4, %c0_5] : memref<1x256xf32, #tpu.memory_space<vmem>>, vector<1x256xf32>
    %7 = vector.broadcast %6 : vector<1x256xf32> to vector<128x256xf32>
    %8 = arith.addf %5, %7 : vector<128x256xf32>
    %c0_6 = arith.constant 0 : index
    %c0_7 = arith.constant 0 : index
    %9 = vector.load %arg10[%c0_6, %c0_7] : memref<128x256xf32, #tpu.memory_space<vmem>>, vector<128x256xf32>
    tpu.vector_store %arg10[%c0_6, %c0_7], %8 {strides = array<i32>} : memref<128x256xf32, #tpu.memory_space<vmem>>, vector<128x256xf32>,
    return
  }
  func.func @transform_0(%arg0: i32, %arg1: i32) -> (i32, i32) {
    %c0_i32 = arith.constant 0 : i32
    %c0_i32_0 = arith.constant 0 : i32
    return %arg0, %c0_i32 : i32, i32
  }
  func.func @transform_1(%arg0: i32, %arg1: i32) -> (i32, i32) {
    %c0_i32 = arith.constant 0 : i32
    %c0_i32_0 = arith.constant 0 : i32
    %c0_i32_1 = arith.constant 0 : i32
    return %c0_i32, %c0_i32_0 : i32, i32
  }
  func.func @transform_2(%arg0: i32, %arg1: i32) -> (i32, i32) {
    %c0_i32 = arith.constant 0 : i32
    %c0_i32_0 = arith.constant 0 : i32
    %c0_i32_1 = arith.constant 0 : i32
    return %c0_i32, %c0_i32_0 : i32, i32
  }
  func.func @transform_3(%arg0: i32, %arg1: i32) -> (i32, i32) {
    %c0_i32 = arith.constant 0 : i32
    %c0_i32_0 = arith.constant 0 : i32
    %c0_i32_1 = arith.constant 0 : i32
    return %c0_i32, %c0_i32_0 : i32, i32
  }
  func.func @transform_4(%arg0: i32, %arg1: i32) -> (i32, i32) {
    %c0_i32 = arith.constant 0 : i32
    %c0_i32_0 = arith.constant 0 : i32
    %c0_i32_1 = arith.constant 0 : i32
    return %c0_i32, %c0_i32_0 : i32, i32
  }
  func.func @transform_5(%arg0: i32, %arg1: i32) -> (i32, i32) {
    %c0_i32 = arith.constant 0 : i32
    %c0_i32_0 = arith.constant 0 : i32
    %c0_i32_1 = arith.constant 0 : i32
    return %c0_i32, %c0_i32_0 : i32, i32
  }
  func.func @transform_6(%arg0: i32, %arg1: i32) -> (i32, i32) {
    %c0_i32 = arith.constant 0 : i32
    %c0_i32_0 = arith.constant 0 : i32
    return %c0_i32, %arg1 : i32, i32
  }
  func.func @transform_7(%arg0: i32, %arg1: i32) -> (i32, i32) {
    %c0_i32 = arith.constant 0 : i32
    %c0_i32_0 = arith.constant 0 : i32
    return %c0_i32, %arg1 : i32, i32
  }
  func.func @transform_8(%arg0: i32, %arg1: i32) -> (i32, i32) {
    %c0_i32 = arith.constant 0 : i32
    return %arg0, %arg1 : i32, i32
  }
}

</mosaic_0001>

<llo_original>
// kernel: tpu_custom_call.1
$region0: #{tpu_custom_call.1}
  #allocation0 [shape = 'u32[]', space=smem, size = 0x4, offset = 0x4, fixed_abs, tag = 'smem constant byte address 0x4 - core index']
  #allocation1 [shape = 'u32[72,128]{1,0:T(1,128)}', space=vmem, size = 0x9000, scoped, tag = 'internal scratch']
  #allocation2 [shape = 'bf16[128,128]{1,0:T(8,128)(2,1)}', space=vmem, size = 0x8000, scoped, tag = 'scratch operand']
  %s0 = inlined_call_operand.vmem [shape: s32[256,10], index: 0, kind: input, shape index: {}]
  %s1 = inlined_call_operand.vmem [shape: bf16[256,64], index: 1, kind: input, shape index: {}]
  %s2 = inlined_call_operand.vmem [shape: bf16[640,128], index: 2, kind: input, shape index: {}]
  %s3 = inlined_call_operand.hbm [shape: f32[1,128], index: 3, kind: input, shape index: {}]
  %s4 = inlined_call_operand.hbm [shape: bf16[128,128], index: 4, kind: input, shape index: {}]
  %s5 = inlined_call_operand.hbm [shape: f32[1,128], index: 5, kind: input, shape index: {}]
  %s6 = inlined_call_operand.vmem [shape: bf16[128,256], index: 6, kind: input, shape index: {}]
  %s7 = inlined_call_operand.vmem [shape: f32[1,256], index: 7, kind: input, shape index: {}]
  %s8 = inlined_call_operand.hbm [shape: f32[256,256], index: 8, kind: output, shape index: {}]
  %s9 = sld [smem:[#allocation0]]
  $region81: #{tpu_custom_call.1} parent=0
    _
  %s11 = ssub.s32 1, %s9
  %s12 = scalar_select 0, %s11, %s9
  $region1: #{tpu_custom_call.1} parent=0
    #allocation3 [shape = 'u8[512]{0}', space=vmem, size = 0x400, scoped, tag = 'input window, operand 3, single buffered']
    #allocation4 [shape = 's32[2]{0}', space=sflag, size = 0x8, scoped, tag = 'scoped memory for tpu_custom_call.1']
    #allocation5 [shape = 's32[2]{0}', space=sflag, size = 0x8, scoped, tag = 'scoped memory for tpu_custom_call.1']
    #allocation6 [shape = 'u8[32768]{0}', space=vmem, size = 0x8000, scoped, tag = 'input window, operand 4, single buffered']
    #allocation7 [shape = 's32[1]{0}', space=sflag, size = 0x4, scoped, tag = 'scoped memory for tpu_custom_call.1']
    #allocation8 [shape = 'u8[512]{0}', space=vmem, size = 0x400, scoped, tag = 'input window, operand 5, single buffered']
    #allocation9 [shape = 'u8[262144]{0}', space=vmem, size = 0x40000, scoped, tag = 'output window, operand 0']
    %13 = vsyncpa [#allocation4], 0
    %14 = vsyncpa [#allocation7], 0
    %15 = vsyncpa [#allocation5], 0
    %s16 = scalar_lea.sflag [#allocation5], 1
    %17 = vsyncpa %s16, 0
    loop: start=0, step=1, limit=4
    $region2: #{tpu_custom_call.1} parent=1 // loop_pre_header
      _
    $region3: #{tpu_custom_call.1} parent=1 // loop_header
      %s19 = sphi 0, %s23
      %p20 = scmp.ge.s32.totalorder %s19, 4
      %s26 = sphi 0, %s38
      %s27 = sphi 0, %s34
      %s28 = sphi 0, %s26
      %s29 = sphi 0, %s27
      %s30 = sphi 0, %s28
      %s31 = sphi 0, %s29
      %s41 = sphi 0, %s43
      %s44 = sphi 0, %s41
      %s45 = sphi 0, %s44
      %s61 = sphi 0, %s45
      %s65 = sphi 0, %s65
      %s67 = sphi 0, %s65
      %s68 = sphi 0, %s67
      %s82 = sphi 0, %s68
      %s86 = sphi 0, %s86
      %s88 = sphi 0, %s86
      %s89 = sphi 0, %s88
      %s103 = sphi 0, %s89
      %s107 = sphi 0, %s107
      %s109 = sphi 0, %s107
      %s110 = sphi 0, %s109
      %s124 = sphi 0, %s110
      %s128 = sphi 0, %s128
      %s130 = sphi 0, %s128
      %s131 = sphi 0, %s130
      %s145 = sphi 0, %s131
      %s149 = sphi 0, %s149
      %s151 = sphi 0, %s149
      %s152 = sphi 0, %s151
      %s166 = sphi 0, %s152
      %s172 = sphi 0, %s174
      %s175 = sphi 0, %s172
      %s176 = sphi 0, %s175
      %s192 = sphi 0, %s176
      %s198 = sphi 0, %s200
      %s201 = sphi 0, %s198
      %s202 = sphi 0, %s201
      %s218 = sphi 0, %s202
      %s226 = sphi 0, %s228
      %s229 = sphi 0, %s226
      %s230 = sphi 0, %s229
      %s246 = sphi 0, %s230
    $region4: #{tpu_custom_call.1} parent=1 // loop_header_branch
      %22 = sbr.rel (%p20) target = $region8
    $region5: #{tpu_custom_call.1} parent=1 // loop_body
      %s24 = ssub.s32 %s19, 1
      %s25 = ssub.s32 %s19, 2
      %s32 = sadd.s32 1, %s27
      %p33 = scmp.ge.s32.totalorder %s32, 1
      %s34 = scalar_select %p33, 0, %s32
      %s35 = sadd.s32 1, %s26
      %s36 = scalar_select %p33, %s35, %s26
      %p37 = scmp.ge.s32.totalorder %s36, 2
      %s38 = scalar_select %p37, 0, %s36
      %s39 = ssub.s32 %s26, %s38
      %p40 = scmp.eq.s32.totalorder %s39, 0
      %s42 = sadd.s32 %s41, 1
      %s43 = scalar_select %p40, %s41, %s42
      %p46 = pneg %p40
      %p47 = scmp.eq.s32.totalorder %s19, 1
      %p48 = por %p46, %p47
      %p49 = scmp.ne.s32.totalorder %s41, %s44
      %p50 = scmp.eq.s32.totalorder %s19, 0
      %p51 = por %p49, %p50
      %p52 = scmp.ne.s32.totalorder %s41, %s44
      %p53 = scmp.eq.s32.totalorder %s24, 1
      %p54 = por %p52, %p53
      %p55 = scmp.ne.s32.totalorder %s44, %s45
      %p56 = scmp.eq.s32.totalorder %s24, 0
      %p57 = por %p55, %p56
      %p58 = scmp.ne.s32.totalorder %s44, %s45
      %p59 = scmp.eq.s32.totalorder %s25, 1
      %p60 = por %p58, %p59
      %p62 = scmp.ne.s32.totalorder %s45, %s61
      %p63 = scmp.eq.s32.totalorder %s25, 0
      %p64 = por %p62, %p63
      %s66 = sadd.s32 %s65, 1
      %p69 = scmp.eq.s32.totalorder %s19, 1
      %p70 = scmp.ne.s32.totalorder %s65, %s67
      %p71 = scmp.eq.s32.totalorder %s19, 0
      %p72 = por %p70, %p71
      %p73 = scmp.ne.s32.totalorder %s65, %s67
      %p74 = scmp.eq.s32.totalorder %s24, 1
      %p75 = por %p73, %p74
      %p76 = scmp.ne.s32.totalorder %s67, %s68
      %p77 = scmp.eq.s32.totalorder %s24, 0
      %p78 = por %p76, %p77
      %p79 = scmp.ne.s32.totalorder %s67, %s68
      %p80 = scmp.eq.s32.totalorder %s25, 1
      %p81 = por %p79, %p80
      %p83 = scmp.ne.s32.totalorder %s68, %s82
      %p84 = scmp.eq.s32.totalorder %s25, 0
      %p85 = por %p83, %p84
      %s87 = sadd.s32 %s86, 1
      %p90 = scmp.eq.s32.totalorder %s19, 1
      %p91 = scmp.ne.s32.totalorder %s86, %s88
      %p92 = scmp.eq.s32.totalorder %s19, 0
      %p93 = por %p91, %p92
      %p94 = scmp.ne.s32.totalorder %s86, %s88
      %p95 = scmp.eq.s32.totalorder %s24, 1
      %p96 = por %p94, %p95
      %p97 = scmp.ne.s32.totalorder %s88, %s89
      %p98 = scmp.eq.s32.totalorder %s24, 0
      %p99 = por %p97, %p98
      %p100 = scmp.ne.s32.totalorder %s88, %s89
      %p101 = scmp.eq.s32.totalorder %s25, 1
      %p102 = por %p100, %p101
      %p104 = scmp.ne.s32.totalorder %s89, %s103
      %p105 = scmp.eq.s32.totalorder %s25, 0
      %p106 = por %p104, %p105
      %s108 = sadd.s32 %s107, 1
      %p111 = scmp.eq.s32.totalorder %s19, 1
      %p112 = scmp.ne.s32.totalorder %s107, %s109
      %p113 = scmp.eq.s32.totalorder %s19, 0
      %p114 = por %p112, %p113
      %p115 = scmp.ne.s32.totalorder %s107, %s109
      %p116 = scmp.eq.s32.totalorder %s24, 1
      %p117 = por %p115, %p116
      %p118 = scmp.ne.s32.totalorder %s109, %s110
      %p119 = scmp.eq.s32.totalorder %s24, 0
      %p120 = por %p118, %p119
      %p121 = scmp.ne.s32.totalorder %s109, %s110
      %p122 = scmp.eq.s32.totalorder %s25, 1
      %p123 = por %p121, %p122
      %p125 = scmp.ne.s32.totalorder %s110, %s124
      %p126 = scmp.eq.s32.totalorder %s25, 0
      %p127 = por %p125, %p126
      %s129 = sadd.s32 %s128, 1
      %p132 = scmp.eq.s32.totalorder %s19, 1
      %p133 = scmp.ne.s32.totalorder %s128, %s130
      %p134 = scmp.eq.s32.totalorder %s19, 0
      %p135 = por %p133, %p134
      %p136 = scmp.ne.s32.totalorder %s128, %s130
      %p137 = scmp.eq.s32.totalorder %s24, 1
      %p138 = por %p136, %p137
      %p139 = scmp.ne.s32.totalorder %s130, %s131
      %p140 = scmp.eq.s32.totalorder %s24, 0
      %p141 = por %p139, %p140
      %p142 = scmp.ne.s32.totalorder %s130, %s131
      %p143 = scmp.eq.s32.totalorder %s25, 1
      %p144 = por %p142, %p143
      %p146 = scmp.ne.s32.totalorder %s131, %s145
      %p147 = scmp.eq.s32.totalorder %s25, 0
      %p148 = por %p146, %p147
      %s150 = sadd.s32 %s149, 1
      %p153 = scmp.eq.s32.totalorder %s19, 1
      %p154 = scmp.ne.s32.totalorder %s149, %s151
      %p155 = scmp.eq.s32.totalorder %s19, 0
      %p156 = por %p154, %p155
      %p157 = scmp.ne.s32.totalorder %s149, %s151
      %p158 = scmp.eq.s32.totalorder %s24, 1
      %p159 = por %p157, %p158
      %p160 = scmp.ne.s32.totalorder %s151, %s152
      %p161 = scmp.eq.s32.totalorder %s24, 0
      %p162 = por %p160, %p161
      %p163 = scmp.ne.s32.totalorder %s151, %s152
      %p164 = scmp.eq.s32.totalorder %s25, 1
      %p165 = por %p163, %p164
      %p167 = scmp.ne.s32.totalorder %s152, %s166
      %p168 = scmp.eq.s32.totalorder %s25, 0
      %p169 = por %p167, %p168
      %s170 = ssub.s32 %s27, %s34
      %p171 = scmp.eq.s32.totalorder %s170, 0
      %s173 = sadd.s32 %s172, 1
      %s174 = scalar_select %p171, %s172, %s173
      %p177 = pneg %p171
      %p178 = scmp.eq.s32.totalorder %s19, 1
      %p179 = por %p177, %p178
      %p180 = scmp.ne.s32.totalorder %s172, %s175
      %p181 = scmp.eq.s32.totalorder %s19, 0
      %p182 = por %p180, %p181
      %p183 = scmp.ne.s32.totalorder %s172, %s175
      %p184 = scmp.eq.s32.totalorder %s24, 1
      %p185 = por %p183, %p184
      %p186 = scmp.ne.s32.totalorder %s175, %s176
      %p187 = scmp.eq.s32.totalorder %s24, 0
      %p188 = por %p186, %p187
      %p189 = scmp.ne.s32.totalorder %s175, %s176
      %p190 = scmp.eq.s32.totalorder %s25, 1
      %p191 = por %p189, %p190
      %p193 = scmp.ne.s32.totalorder %s176, %s192
      %p194 = scmp.eq.s32.totalorder %s25, 0
      %p195 = por %p193, %p194
      %s196 = ssub.s32 %s27, %s34
      %p197 = scmp.eq.s32.totalorder %s196, 0
      %s199 = sadd.s32 %s198, 1
      %s200 = scalar_select %p197, %s198, %s199
      %p203 = pneg %p197
      %p204 = scmp.eq.s32.totalorder %s19, 1
      %p205 = por %p203, %p204
      %p206 = scmp.ne.s32.totalorder %s198, %s201
      %p207 = scmp.eq.s32.totalorder %s19, 0
      %p208 = por %p206, %p207
      %p209 = scmp.ne.s32.totalorder %s198, %s201
      %p210 = scmp.eq.s32.totalorder %s24, 1
      %p211 = por %p209, %p210
      %p212 = scmp.ne.s32.totalorder %s201, %s202
      %p213 = scmp.eq.s32.totalorder %s24, 0
      %p214 = por %p212, %p213
      %p215 = scmp.ne.s32.totalorder %s201, %s202
      %p216 = scmp.eq.s32.totalorder %s25, 1
      %p217 = por %p215, %p216
      %p219 = scmp.ne.s32.totalorder %s202, %s218
      %p220 = scmp.eq.s32.totalorder %s25, 0
      %p221 = por %p219, %p220
      %s222 = ssub.s32 %s26, %s38
      %s223 = ssub.s32 %s27, %s34
      %s224 = sor.u32 %s222, %s223
      %p225 = scmp.eq.s32.totalorder %s224, 0
      %s227 = sadd.s32 %s226, 1
      %s228 = scalar_select %p225, %s226, %s227
      %p231 = pneg %p225
      %p232 = scmp.eq.s32.totalorder %s19, 1
      %p233 = por %p231, %p232
      %p234 = scmp.ne.s32.totalorder %s226, %s229
      %p235 = scmp.eq.s32.totalorder %s19, 0
      %p236 = por %p234, %p235
      %p237 = scmp.ne.s32.totalorder %s226, %s229
      %p238 = scmp.eq.s32.totalorder %s24, 1
      %p239 = por %p237, %p238
      %p240 = scmp.ne.s32.totalorder %s229, %s230
      %p241 = scmp.eq.s32.totalorder %s24, 0
      %p242 = por %p240, %p241
      %p243 = scmp.ne.s32.totalorder %s229, %s230
      %p244 = scmp.eq.s32.totalorder %s25, 1
      %p245 = por %p243, %p244
      %p247 = scmp.ne.s32.totalorder %s230, %s246
      %p248 = scmp.eq.s32.totalorder %s25, 0
      %p249 = por %p247, %p248
      %p250 = scmp.le.s32.totalorder 1, %s19
      %p251 = scmp.lt.s32.totalorder %s19, 3
      %p252 = pnand %p250, %p251
      %p253 = pneg %p252
      // Predicated region
      $region9: #{tpu_custom_call.1} parent=5 // pred_check
        _
      $region10: #{tpu_custom_call.1} parent=5 // pred_check_branch
        %255 = sbr.rel (%p252) target = $region12
      $region11: #{tpu_custom_call.1} parent=5 // pred_region
        %s256 = ssub.s32 %s19, 1
        // Predicated region
        $region13: #{tpu_custom_call.1} parent=11 // pred_check
          %p257 = pneg %p78
        $region14: #{tpu_custom_call.1} parent=11 // pred_check_branch
          %259 = sbr.rel (%p257) target = $region16
        $region15: #{tpu_custom_call.1} parent=11 // pred_region
          _
        $region16: #{tpu_custom_call.1} parent=11 // pred_fallthru
          _
        // Predicated region
        $region17: #{tpu_custom_call.1} parent=11 // pred_check
          %p260 = pneg %p99
        $region18: #{tpu_custom_call.1} parent=11 // pred_check_branch
          %262 = sbr.rel (%p260) target = $region20
        $region19: #{tpu_custom_call.1} parent=11 // pred_region
          _
        $region20: #{tpu_custom_call.1} parent=11 // pred_fallthru
          _
        // Predicated region
        $region21: #{tpu_custom_call.1} parent=11 // pred_check
          %p263 = pneg %p120
        $region22: #{tpu_custom_call.1} parent=11 // pred_check_branch
          %265 = sbr.rel (%p263) target = $region24
        $region23: #{tpu_custom_call.1} parent=11 // pred_region
          %267 = vsyncadd [#allocation4], 0
          %s269 = sshll.u32 %s3, 4
          %s270 = int_to_ptr.hbm [resolvable:$true] %s269
          %s271 = sshll.u32 [#allocation3], 4
          %s272 = int_to_ptr.vmem [resolvable:$true] %s271
          %274 = dma.hbm_to_vmem [thread:$0]  %s270, 16, %s272, [#allocation4]
        $region24: #{tpu_custom_call.1} parent=11 // pred_fallthru
          _
        // Predicated region
        $region25: #{tpu_custom_call.1} parent=11 // pred_check
          %p275 = pneg %p141
        $region26: #{tpu_custom_call.1} parent=11 // pred_check_branch
          %277 = sbr.rel (%p275) target = $region28
        $region27: #{tpu_custom_call.1} parent=11 // pred_region
          %279 = vsyncadd [#allocation7], 0
          %s280 = sshll.u32 %s4, 4
          %s281 = int_to_ptr.hbm [resolvable:$true] %s280
          %s282 = sshll.u32 [#allocation6], 4
          %s283 = int_to_ptr.vmem [resolvable:$true] %s282
          %288 = dma.hbm_to_vmem [thread:$0]  %s281, 1024, %s283, [#allocation7], 64, 64, 4
        $region28: #{tpu_custom_call.1} parent=11 // pred_fallthru
          _
        // Predicated region
        $region29: #{tpu_custom_call.1} parent=11 // pred_check
          %p289 = pneg %p162
        $region30: #{tpu_custom_call.1} parent=11 // pred_check_branch
          %291 = sbr.rel (%p289) target = $region32
        $region31: #{tpu_custom_call.1} parent=11 // pred_region
          %293 = vsyncadd [#allocation7], 0
          %s295 = sshll.u32 %s5, 4
          %s296 = int_to_ptr.hbm [resolvable:$true] %s295
          %s297 = sshll.u32 [#allocation8], 4
          %s298 = int_to_ptr.vmem [resolvable:$true] %s297
          %300 = dma.hbm_to_vmem [thread:$0]  %s296, 16, %s298, [#allocation7]
        $region32: #{tpu_custom_call.1} parent=11 // pred_fallthru
          _
        // Predicated region
        $region33: #{tpu_custom_call.1} parent=11 // pred_check
          %p301 = pneg %p188
        $region34: #{tpu_custom_call.1} parent=11 // pred_check_branch
          %303 = sbr.rel (%p301) target = $region36
        $region35: #{tpu_custom_call.1} parent=11 // pred_region
          %s304 = smul.u32 2, %s29
          %p305 = scmp.lt.s32.totalorder %s304, 1
          %s306 = scalar_select %p305, %s304, 1
          %s307 = smul.addr %s306, 4
          %s308 = scalar_lea.vmem %s6, %s307
          %s309 = smul.u32 2, %s29
        $region36: #{tpu_custom_call.1} parent=11 // pred_fallthru
          _
        // Predicated region
        $region37: #{tpu_custom_call.1} parent=11 // pred_check
          %p310 = pneg %p214
        $region38: #{tpu_custom_call.1} parent=11 // pred_check_branch
          %312 = sbr.rel (%p310) target = $region40
        $region39: #{tpu_custom_call.1} parent=11 // pred_region
          %s313 = smul.u32 2, %s29
          %p314 = scmp.lt.s32.totalorder %s313, 1
          %s315 = scalar_select %p314, %s313, 1
          %s316 = scalar_lea.vmem %s7, %s315
          %s317 = smul.u32 2, %s29
        $region40: #{tpu_custom_call.1} parent=11 // pred_fallthru
          _
      $region12: #{tpu_custom_call.1} parent=5 // pred_fallthru
        _
      %p318 = scmp.lt.s32.totalorder %s19, 2
      // Predicated region
      $region41: #{tpu_custom_call.1} parent=5 // pred_check
        %p319 = pneg %p318
      $region42: #{tpu_custom_call.1} parent=5 // pred_check_branch
        %321 = sbr.rel (%p319) target = $region44
      $region43: #{tpu_custom_call.1} parent=5 // pred_region
        // Predicated region
        $region45: #{tpu_custom_call.1} parent=43 // pred_check
          %p322 = pneg %p51
        $region46: #{tpu_custom_call.1} parent=43 // pred_check_branch
          %324 = sbr.rel (%p322) target = $region48
        $region47: #{tpu_custom_call.1} parent=43 // pred_region
          %s325 = smul.u32 16, %s26
          %p326 = scmp.lt.s32.totalorder %s325, 31
          %s327 = scalar_select %p326, %s325, 31
          %s328 = smul.addr %s327, 8
          %s329 = scalar_lea.vmem %s0, %s328
          %s330 = smul.u32 16, %s26
        $region48: #{tpu_custom_call.1} parent=43 // pred_fallthru
          _
      $region44: #{tpu_custom_call.1} parent=5 // pred_fallthru
        _
      %p331 = scmp.le.s32.totalorder 1, %s19
      %p332 = scmp.lt.s32.totalorder %s19, 3
      %p333 = pnand %p331, %p332
      %p334 = pneg %p333
      // Predicated region
      $region49: #{tpu_custom_call.1} parent=5 // pred_check
        _
      $region50: #{tpu_custom_call.1} parent=5 // pred_check_branch
        %336 = sbr.rel (%p333) target = $region52
      $region51: #{tpu_custom_call.1} parent=5 // pred_region
        %s337 = ssub.s32 %s19, 1
        // Predicated region
        $region53: #{tpu_custom_call.1} parent=51 // pred_check
          %p338 = pneg %p120
        $region54: #{tpu_custom_call.1} parent=51 // pred_check_branch
          %340 = sbr.rel (%p338) target = $region56
        $region55: #{tpu_custom_call.1} parent=51 // pred_region
          %342 = dma.done [#allocation4], 16
        $region56: #{tpu_custom_call.1} parent=51 // pred_fallthru
          _
        // Predicated region
        $region57: #{tpu_custom_call.1} parent=51 // pred_check
          %p343 = pneg %p141
        $region58: #{tpu_custom_call.1} parent=51 // pred_check_branch
          %345 = sbr.rel (%p343) target = $region60
        $region59: #{tpu_custom_call.1} parent=51 // pred_region
          %347 = dma.done [#allocation7], 1024
        $region60: #{tpu_custom_call.1} parent=51 // pred_fallthru
          _
        // Predicated region
        $region61: #{tpu_custom_call.1} parent=51 // pred_check
          %p348 = pneg %p162
        $region62: #{tpu_custom_call.1} parent=51 // pred_check_branch
          %350 = sbr.rel (%p348) target = $region64
        $region63: #{tpu_custom_call.1} parent=51 // pred_region
          %352 = dma.done [#allocation7], 16
        $region64: #{tpu_custom_call.1} parent=51 // pred_fallthru
          _
        %s353 = smul.u32 16, %s28
        %p354 = scmp.lt.s32.totalorder %s353, 31
        %s355 = scalar_select %p354, %s353, 31
        %s356 = smul.addr %s355, 8
        %s357 = scalar_lea.vmem %s0, %s356
        %p358 = pneg %p57
        %p359 = pneg %p54
        %p360 = pneg %p78
        %p361 = pneg %p75
        %p362 = pneg %p99
        %p363 = pneg %p96
        %p364 = pneg %p120
        %p365 = pneg %p117
        %p366 = pneg %p141
        %p367 = pneg %p138
        %p368 = pneg %p162
        %p369 = pneg %p159
        %s370 = smul.u32 2, %s29
        %p371 = scmp.lt.s32.totalorder %s370, 1
        %s372 = scalar_select %p371, %s370, 1
        %s373 = smul.addr %s372, 4
        %s374 = scalar_lea.vmem %s6, %s373
        %p375 = pneg %p188
        %p376 = pneg %p185
        %s377 = smul.u32 2, %s29
        %p378 = scmp.lt.s32.totalorder %s377, 1
        %s379 = scalar_select %p378, %s377, 1
        %s380 = scalar_lea.vmem %s7, %s379
        %p381 = pneg %p214
        %p382 = pneg %p211
        %p383 = pneg %p242
        %p384 = pneg %p239
        %s385 = sand.u32 %s229, 1
        %s386 = scalar_lea.sflag [#allocation5], %s385
        %s387 = sand.u32 %s229, 1
        %s388 = smul.addr %s387, 256
        %s389 = scalar_lea.vmem [#allocation9], %s388
        %s390 = smul.u32 16, %s28
        %p391 = scmp.lt.s32.totalorder %s390, 31
        %s392 = scalar_select %p391, %s390, 31
        %s393 = smul.addr %s392, 8
        %s394 = scalar_lea.vmem %s0, %s393
        %s395 = smul.u32 16, %s28
        %s396 = smul.u32 2, %s29
        %p397 = scmp.lt.s32.totalorder %s396, 1
        %s398 = scalar_select %p397, %s396, 1
        %s399 = smul.addr %s398, 4
        %s400 = scalar_lea.vmem %s6, %s399
        %s401 = smul.u32 2, %s29
        %s402 = smul.u32 2, %s29
        %p403 = scmp.lt.s32.totalorder %s402, 1
        %s404 = scalar_select %p403, %s402, 1
        %s405 = scalar_lea.vmem %s7, %s404
        %s406 = smul.u32 2, %s29
        %s407 = smul.u32 16, %s28
        %s408 = smul.u32 2, %s29
        %p410 = scmp.eq.s32.totalorder %s29, 0
        // Predicated region
        $region65: #{tpu_custom_call.1} parent=51 // pred_check
          %p411 = pneg %p410
        $region66: #{tpu_custom_call.1} parent=51 // pred_check_branch
          %413 = sbr.rel (%p411) target = $region68
        $region67: #{tpu_custom_call.1} parent=51 // pred_region
          %v414 = vld [vmem:[%s394] sm:$0xff]
          %v415 = vld [vmem:[%s394 + $0x8] sm:$0xff]
          %v416 = vld [vmem:[%s394 + $0x10] sm:$0xff]
          %v417 = vld [vmem:[%s394 + $0x18] sm:$0xff]
          %v418 = vld [vmem:[%s394 + $0x20] sm:$0xff]
          %v419 = vld [vmem:[%s394 + $0x28] sm:$0xff]
          %v420 = vld [vmem:[%s394 + $0x30] sm:$0xff]
          %v421 = vld [vmem:[%s394 + $0x38] sm:$0xff]
          %v422 = vld [vmem:[%s394 + $0x40] sm:$0xff]
          %v423 = vld [vmem:[%s394 + $0x48] sm:$0xff]
          %v424 = vld [vmem:[%s394 + $0x50] sm:$0xff]
          %v425 = vld [vmem:[%s394 + $0x58] sm:$0xff]
          %v426 = vld [vmem:[%s394 + $0x60] sm:$0xff]
          %v427 = vld [vmem:[%s394 + $0x68] sm:$0xff]
          %v428 = vld [vmem:[%s394 + $0x70] sm:$0xff]
          %v429 = vld [vmem:[%s394 + $0x78] sm:$0xff]
          %v430 = vld [vmem:[%s1] sm:$0xf]
          %v431 = vld [vmem:[%s1 + $0x4] sm:$0xf]
          %v432 = vld [vmem:[%s1 + $0x8] sm:$0xf]
          %v433 = vld [vmem:[%s1 + $0xc] sm:$0xf]
          %v434 = vld [vmem:[%s1 + $0x10] sm:$0xf]
          %v435 = vld [vmem:[%s1 + $0x14] sm:$0xf]
          %v436 = vld [vmem:[%s1 + $0x18] sm:$0xf]
          %v437 = vld [vmem:[%s1 + $0x1c] sm:$0xf]
          %v438 = vld [vmem:[%s1 + $0x20] sm:$0xf]
          %v439 = vld [vmem:[%s1 + $0x24] sm:$0xf]
          %v440 = vld [vmem:[%s1 + $0x28] sm:$0xf]
          %v441 = vld [vmem:[%s1 + $0x2c] sm:$0xf]
          %v442 = vld [vmem:[%s1 + $0x30] sm:$0xf]
          %v443 = vld [vmem:[%s1 + $0x34] sm:$0xf]
          %v444 = vld [vmem:[%s1 + $0x38] sm:$0xf]
          %v445 = vld [vmem:[%s1 + $0x3c] sm:$0xf]
          %v446 = vld [vmem:[%s1 + $0x40] sm:$0xf]
          %v447 = vld [vmem:[%s1 + $0x44] sm:$0xf]
          %v448 = vld [vmem:[%s1 + $0x48] sm:$0xf]
          %v449 = vld [vmem:[%s1 + $0x4c] sm:$0xf]
          %v450 = vld [vmem:[%s1 + $0x50] sm:$0xf]
          %v451 = vld [vmem:[%s1 + $0x54] sm:$0xf]
          %v452 = vld [vmem:[%s1 + $0x58] sm:$0xf]
          %v453 = vld [vmem:[%s1 + $0x5c] sm:$0xf]
          %v454 = vld [vmem:[%s1 + $0x60] sm:$0xf]
          %v455 = vld [vmem:[%s1 + $0x64] sm:$0xf]
          %v456 = vld [vmem:[%s1 + $0x68] sm:$0xf]
          %v457 = vld [vmem:[%s1 + $0x6c] sm:$0xf]
          %v458 = vld [vmem:[%s1 + $0x70] sm:$0xf]
          %v459 = vld [vmem:[%s1 + $0x74] sm:$0xf]
          %v460 = vld [vmem:[%s1 + $0x78] sm:$0xf]
          %v461 = vld [vmem:[%s1 + $0x7c] sm:$0xf]
          %v462 = vlaneseq
          %v463 = vand.u32 %v462, 127
          %v464 = vadd.s32 %v463, 128
          %465 = vset.pattern.permute.xlu0 0
          %466 = vperm.xlu0 %465, %v414
          %v467 = vpop.permute.xlu0 %466
          %468 = vset.pattern.permute.xlu0 0
          %469 = vperm.xlu0 %468, %v415
          %v470 = vpop.permute.xlu0 %469
          %471 = vset.pattern.permute.xlu0 0
          %472 = vperm.xlu0 %471, %v416
          %v473 = vpop.permute.xlu0 %472
          %474 = vset.pattern.permute.xlu0 0
          %475 = vperm.xlu0 %474, %v417
          %v476 = vpop.permute.xlu0 %475
          %477 = vset.pattern.permute.xlu0 0
          %478 = vperm.xlu0 %477, %v418
          %v479 = vpop.permute.xlu0 %478
          %480 = vset.pattern.permute.xlu0 0
          %481 = vperm.xlu0 %480, %v419
          %v482 = vpop.permute.xlu0 %481
          %483 = vset.pattern.permute.xlu0 0
          %484 = vperm.xlu0 %483, %v420
          %v485 = vpop.permute.xlu0 %484
          %486 = vset.pattern.permute.xlu0 0
          %487 = vperm.xlu0 %486, %v421
          %v488 = vpop.permute.xlu0 %487
          %489 = vset.pattern.permute.xlu0 0
          %490 = vperm.xlu0 %489, %v422
          %v491 = vpop.permute.xlu0 %490
          %492 = vset.pattern.permute.xlu0 0
          %493 = vperm.xlu0 %492, %v423
          %v494 = vpop.permute.xlu0 %493
          %495 = vset.pattern.permute.xlu0 0
          %496 = vperm.xlu0 %495, %v424
          %v497 = vpop.permute.xlu0 %496
          %498 = vset.pattern.permute.xlu0 0
          %499 = vperm.xlu0 %498, %v425
          %v500 = vpop.permute.xlu0 %499
          %501 = vset.pattern.permute.xlu0 0
          %502 = vperm.xlu0 %501, %v426
          %v503 = vpop.permute.xlu0 %502
          %504 = vset.pattern.permute.xlu0 0
          %505 = vperm.xlu0 %504, %v427
          %v506 = vpop.permute.xlu0 %505
          %507 = vset.pattern.permute.xlu0 0
          %508 = vperm.xlu0 %507, %v428
          %v509 = vpop.permute.xlu0 %508
          %510 = vset.pattern.permute.xlu0 0
          %511 = vperm.xlu0 %510, %v429
          %v512 = vpop.permute.xlu0 %511
          %vm513 = vcmp.eq.s32.totalorder %v467, %v463
          %vm514 = vcmp.eq.s32.totalorder %v467, %v464
          %vm515 = vcmp.eq.s32.totalorder %v470, %v463
          %vm516 = vcmp.eq.s32.totalorder %v470, %v464
          %vm517 = vcmp.eq.s32.totalorder %v473, %v463
          %vm518 = vcmp.eq.s32.totalorder %v473, %v464
          %vm519 = vcmp.eq.s32.totalorder %v476, %v463
          %vm520 = vcmp.eq.s32.totalorder %v476, %v464
          %vm521 = vcmp.eq.s32.totalorder %v479, %v463
          %vm522 = vcmp.eq.s32.totalorder %v479, %v464
          %vm523 = vcmp.eq.s32.totalorder %v482, %v463
          %vm524 = vcmp.eq.s32.totalorder %v482, %v464
          %vm525 = vcmp.eq.s32.totalorder %v485, %v463
          %vm526 = vcmp.eq.s32.totalorder %v485, %v464
          %vm527 = vcmp.eq.s32.totalorder %v488, %v463
          %vm528 = vcmp.eq.s32.totalorder %v488, %v464
          %vm529 = vcmp.eq.s32.totalorder %v491, %v463
          %vm530 = vcmp.eq.s32.totalorder %v491, %v464
          %vm531 = vcmp.eq.s32.totalorder %v494, %v463
          %vm532 = vcmp.eq.s32.totalorder %v494, %v464
          %vm533 = vcmp.eq.s32.totalorder %v497, %v463
          %vm534 = vcmp.eq.s32.totalorder %v497, %v464
          %vm535 = vcmp.eq.s32.totalorder %v500, %v463
          %vm536 = vcmp.eq.s32.totalorder %v500, %v464
          %vm537 = vcmp.eq.s32.totalorder %v503, %v463
          %vm538 = vcmp.eq.s32.totalorder %v503, %v464
          %vm539 = vcmp.eq.s32.totalorder %v506, %v463
          %vm540 = vcmp.eq.s32.totalorder %v506, %v464
          %vm541 = vcmp.eq.s32.totalorder %v509, %v463
          %vm542 = vcmp.eq.s32.totalorder %v509, %v464
          %vm543 = vcmp.eq.s32.totalorder %v512, %v463
          %vm544 = vcmp.eq.s32.totalorder %v512, %v464
          %v545 = vsel %vm513, 1, 0
          %v546 = vsel %vm514, 1, 0
          %v547 = vsel %vm515, 1, 0
          %v548 = vsel %vm516, 1, 0
          %v549 = vsel %vm517, 1, 0
          %v550 = vsel %vm518, 1, 0
          %v551 = vsel %vm519, 1, 0
          %v552 = vsel %vm520, 1, 0
          %v553 = vsel %vm521, 1, 0
          %v554 = vsel %vm522, 1, 0
          %v555 = vsel %vm523, 1, 0
          %v556 = vsel %vm524, 1, 0
          %v557 = vsel %vm525, 1, 0
          %v558 = vsel %vm526, 1, 0
          %v559 = vsel %vm527, 1, 0
          %v560 = vsel %vm528, 1, 0
          %v561 = vsel %vm529, 1, 0
          %v562 = vsel %vm530, 1, 0
          %v563 = vsel %vm531, 1, 0
          %v564 = vsel %vm532, 1, 0
          %v565 = vsel %vm533, 1, 0
          %v566 = vsel %vm534, 1, 0
          %v567 = vsel %vm535, 1, 0
          %v568 = vsel %vm536, 1, 0
          %v569 = vsel %vm537, 1, 0
          %v570 = vsel %vm538, 1, 0
          %v571 = vsel %vm539, 1, 0
          %v572 = vsel %vm540, 1, 0
          %v573 = vsel %vm541, 1, 0
          %v574 = vsel %vm542, 1, 0
          %v575 = vsel %vm543, 1, 0
          %v576 = vsel %vm544, 1, 0
          %v577 = vcvt.s32.f32 %v545
          %v578 = vcvt.s32.f32 %v546
          %v579 = vcvt.s32.f32 %v547
          %v580 = vcvt.s32.f32 %v548
          %v581 = vcvt.s32.f32 %v549
          %v582 = vcvt.s32.f32 %v550
          %v583 = vcvt.s32.f32 %v551
          %v584 = vcvt.s32.f32 %v552
          %v585 = vcvt.s32.f32 %v553
          %v586 = vcvt.s32.f32 %v554
          %v587 = vcvt.s32.f32 %v555
          %v588 = vcvt.s32.f32 %v556
          %v589 = vcvt.s32.f32 %v557
          %v590 = vcvt.s32.f32 %v558
          %v591 = vcvt.s32.f32 %v559
          %v592 = vcvt.s32.f32 %v560
          %v593 = vcvt.s32.f32 %v561
          %v594 = vcvt.s32.f32 %v562
          %v595 = vcvt.s32.f32 %v563
          %v596 = vcvt.s32.f32 %v564
          %v597 = vcvt.s32.f32 %v565
          %v598 = vcvt.s32.f32 %v566
          %v599 = vcvt.s32.f32 %v567
          %v600 = vcvt.s32.f32 %v568
          %v601 = vcvt.s32.f32 %v569
          %v602 = vcvt.s32.f32 %v570
          %v603 = vcvt.s32.f32 %v571
          %v604 = vcvt.s32.f32 %v572
          %v605 = vcvt.s32.f32 %v573
          %v606 = vcvt.s32.f32 %v574
          %v607 = vcvt.s32.f32 %v575
          %v608 = vcvt.s32.f32 %v576
          %v609 = vpack.c.bf16 %v579, %v577
          %v610 = vpack.c.bf16 %v580, %v578
          %v611 = vpack.c.bf16 %v583, %v581
          %v612 = vpack.c.bf16 %v584, %v582
          %v613 = vpack.c.bf16 %v587, %v585
          %v614 = vpack.c.bf16 %v588, %v586
          %v615 = vpack.c.bf16 %v591, %v589
          %v616 = vpack.c.bf16 %v592, %v590
          %v617 = vpack.c.bf16 %v595, %v593
          %v618 = vpack.c.bf16 %v596, %v594
          %v619 = vpack.c.bf16 %v599, %v597
          %v620 = vpack.c.bf16 %v600, %v598
          %v621 = vpack.c.bf16 %v603, %v601
          %v622 = vpack.c.bf16 %v604, %v602
          %v623 = vpack.c.bf16 %v607, %v605
          %v624 = vpack.c.bf16 %v608, %v606
          %v657 = vunpack.c.l.b16 %v430
          %v658 = vunpack.c.l.b16 %v431
          %v659 = vunpack.c.l.b16 %v432
          %v660 = vunpack.c.l.b16 %v433
          %v661 = vunpack.c.l.b16 %v434
          %v662 = vunpack.c.l.b16 %v435
          %v663 = vunpack.c.l.b16 %v436
          %v664 = vunpack.c.l.b16 %v437
          %v665 = vunpack.c.l.b16 %v438
          %v666 = vunpack.c.l.b16 %v439
          %v667 = vunpack.c.l.b16 %v440
          %v668 = vunpack.c.l.b16 %v441
          %v669 = vunpack.c.l.b16 %v442
          %v670 = vunpack.c.l.b16 %v443
          %v671 = vunpack.c.l.b16 %v444
          %v672 = vunpack.c.l.b16 %v445
          %v673 = vunpack.c.l.b16 %v446
          %v674 = vunpack.c.l.b16 %v447
          %v675 = vunpack.c.l.b16 %v448
          %v676 = vunpack.c.l.b16 %v449
          %v677 = vunpack.c.l.b16 %v450
          %v678 = vunpack.c.l.b16 %v451
          %v679 = vunpack.c.l.b16 %v452
          %v680 = vunpack.c.l.b16 %v453
          %v681 = vunpack.c.l.b16 %v454
          %v682 = vunpack.c.l.b16 %v455
          %v683 = vunpack.c.l.b16 %v456
          %v684 = vunpack.c.l.b16 %v457
          %v685 = vunpack.c.l.b16 %v458
          %v686 = vunpack.c.l.b16 %v459
          %v687 = vunpack.c.l.b16 %v460
          %v688 = vunpack.c.l.b16 %v461
          %v689 = vpack.c.b16 %v658, %v657
          %v690 = vpack.c.b16 %v660, %v659
          %v691 = vpack.c.b16 %v662, %v661
          %v692 = vpack.c.b16 %v664, %v663
          %v693 = vpack.c.b16 %v666, %v665
          %v694 = vpack.c.b16 %v668, %v667
          %v695 = vpack.c.b16 %v670, %v669
          %v696 = vpack.c.b16 %v672, %v671
          %v697 = vpack.c.b16 %v674, %v673
          %v698 = vpack.c.b16 %v676, %v675
          %v699 = vpack.c.b16 %v678, %v677
          %v700 = vpack.c.b16 %v680, %v679
          %v701 = vpack.c.b16 %v682, %v681
          %v702 = vpack.c.b16 %v684, %v683
          %v703 = vpack.c.b16 %v686, %v685
          %v704 = vpack.c.b16 %v688, %v687
          %721 = vmatpush.bf16.msra.mxu0 %v696
          %722 = vmatpush.bf16.msra.mxu0 %v695
          %723 = vmatpush.bf16.msra.mxu0 %v694
          %724 = vmatpush.bf16.msra.mxu0 %v693
          %725 = vmatpush.bf16.msra.mxu0 %v692
          %726 = vmatpush.bf16.msra.mxu0 %v691
          %727 = vmatpush.bf16.msra.mxu0 %v690
          %728 = vmatpush.bf16.msra.mxu0 %v689
          %729 = vmatmul.bf16.gmra.mxu0 %v609
          %v730 = vpop.f32.mrf.mxu0
          %v731 = vadd.f32 0.0, %v730
          %v732 = vpop.f32.mrf.mxu0
          %v733 = vadd.f32 0.0, %v732
          %734 = vmatmul.bf16.gmra.mxu0 %v611
          %v735 = vpop.f32.mrf.mxu0
          %v736 = vadd.f32 0.0, %v735
          %v737 = vpop.f32.mrf.mxu0
          %v738 = vadd.f32 0.0, %v737
          %739 = vmatmul.bf16.gmra.mxu0 %v613
          %v740 = vpop.f32.mrf.mxu0
          %v741 = vadd.f32 0.0, %v740
          %v742 = vpop.f32.mrf.mxu0
          %v743 = vadd.f32 0.0, %v742
          %744 = vmatmul.bf16.gmra.mxu0 %v615
          %v745 = vpop.f32.mrf.mxu0
          %v746 = vadd.f32 0.0, %v745
          %v747 = vpop.f32.mrf.mxu0
          %v748 = vadd.f32 0.0, %v747
          %749 = vmatmul.bf16.gmra.mxu0 %v617
          %v750 = vpop.f32.mrf.mxu0
          %v751 = vadd.f32 0.0, %v750
          %v752 = vpop.f32.mrf.mxu0
          %v753 = vadd.f32 0.0, %v752
          %754 = vmatmul.bf16.gmra.mxu0 %v619
          %v755 = vpop.f32.mrf.mxu0
          %v756 = vadd.f32 0.0, %v755
          %v757 = vpop.f32.mrf.mxu0
          %v758 = vadd.f32 0.0, %v757
          %759 = vmatmul.bf16.gmra.mxu0 %v621
          %v760 = vpop.f32.mrf.mxu0
          %v761 = vadd.f32 0.0, %v760
          %v762 = vpop.f32.mrf.mxu0
          %v763 = vadd.f32 0.0, %v762
          %764 = vmatmul.bf16.gmra.mxu0 %v623
          %v765 = vpop.f32.mrf.mxu0
          %v766 = vadd.f32 0.0, %v765
          %v767 = vpop.f32.mrf.mxu0
          %v768 = vadd.f32 0.0, %v767
          %769 = vdwg.mxu0
          %770 = vmatpush.bf16.msra.mxu0 %v704
          %771 = vmatpush.bf16.msra.mxu0 %v703
          %772 = vmatpush.bf16.msra.mxu0 %v702
          %773 = vmatpush.bf16.msra.mxu0 %v701
          %774 = vmatpush.bf16.msra.mxu0 %v700
          %775 = vmatpush.bf16.msra.mxu0 %v699
          %776 = vmatpush.bf16.msra.mxu0 %v698
          %777 = vmatpush.bf16.msra.mxu0 %v697
          %778 = vmatmul.bf16.gmra.mxu0 %v610
          %v779 = vpop.f32.mrf.mxu0
          %v780 = vadd.f32 %v731, %v779
          %v781 = vpop.f32.mrf.mxu0
          %v782 = vadd.f32 %v733, %v781
          %783 = vmatmul.bf16.gmra.mxu0 %v612
          %v784 = vpop.f32.mrf.mxu0
          %v785 = vadd.f32 %v736, %v784
          %v786 = vpop.f32.mrf.mxu0
          %v787 = vadd.f32 %v738, %v786
          %788 = vmatmul.bf16.gmra.mxu0 %v614
          %v789 = vpop.f32.mrf.mxu0
          %v790 = vadd.f32 %v741, %v789
          %v791 = vpop.f32.mrf.mxu0
          %v792 = vadd.f32 %v743, %v791
          %793 = vmatmul.bf16.gmra.mxu0 %v616
          %v794 = vpop.f32.mrf.mxu0
          %v795 = vadd.f32 %v746, %v794
          %v796 = vpop.f32.mrf.mxu0
          %v797 = vadd.f32 %v748, %v796
          %798 = vmatmul.bf16.gmra.mxu0 %v618
          %v799 = vpop.f32.mrf.mxu0
          %v800 = vadd.f32 %v751, %v799
          %v801 = vpop.f32.mrf.mxu0
          %v802 = vadd.f32 %v753, %v801
          %803 = vmatmul.bf16.gmra.mxu0 %v620
          %v804 = vpop.f32.mrf.mxu0
          %v805 = vadd.f32 %v756, %v804
          %v806 = vpop.f32.mrf.mxu0
          %v807 = vadd.f32 %v758, %v806
          %808 = vmatmul.bf16.gmra.mxu0 %v622
          %v809 = vpop.f32.mrf.mxu0
          %v810 = vadd.f32 %v761, %v809
          %v811 = vpop.f32.mrf.mxu0
          %v812 = vadd.f32 %v763, %v811
          %813 = vmatmul.bf16.gmra.mxu0 %v624
          %v814 = vpop.f32.mrf.mxu0
          %v815 = vadd.f32 %v766, %v814
          %v816 = vpop.f32.mrf.mxu0
          %v817 = vadd.f32 %v768, %v816
          %818 = vdwg.mxu0
          %v819 = vpack.c.bf16 %v782, %v780
          %v820 = vpack.c.bf16 %v787, %v785
          %v821 = vpack.c.bf16 %v792, %v790
          %v822 = vpack.c.bf16 %v797, %v795
          %v823 = vpack.c.bf16 %v802, %v800
          %v824 = vpack.c.bf16 %v807, %v805
          %v825 = vpack.c.bf16 %v812, %v810
          %v826 = vpack.c.bf16 %v817, %v815
          %v827 = vld [vmem:[%s2] sm:$0xf]
          %v828 = vld [vmem:[%s2 + $0x4] sm:$0xf]
          %v829 = vld [vmem:[%s2 + $0x8] sm:$0xf]
          %v830 = vld [vmem:[%s2 + $0xc] sm:$0xf]
          %v831 = vld [vmem:[%s2 + $0x10] sm:$0xf]
          %v832 = vld [vmem:[%s2 + $0x14] sm:$0xf]
          %v833 = vld [vmem:[%s2 + $0x18] sm:$0xf]
          %v834 = vld [vmem:[%s2 + $0x1c] sm:$0xf]
          %835 = vset.pattern.permute.xlu0 1
          %836 = vperm.xlu0 %835, %v414
          %v837 = vpop.permute.xlu0 %836
          %838 = vset.pattern.permute.xlu0 1
          %839 = vperm.xlu0 %838, %v415
          %v840 = vpop.permute.xlu0 %839
          %841 = vset.pattern.permute.xlu0 1
          %842 = vperm.xlu0 %841, %v416
          %v843 = vpop.permute.xlu0 %842
          %844 = vset.pattern.permute.xlu0 1
          %845 = vperm.xlu0 %844, %v417
          %v846 = vpop.permute.xlu0 %845
          %847 = vset.pattern.permute.xlu0 1
          %848 = vperm.xlu0 %847, %v418
          %v849 = vpop.permute.xlu0 %848
          %850 = vset.pattern.permute.xlu0 1
          %851 = vperm.xlu0 %850, %v419
          %v852 = vpop.permute.xlu0 %851
          %853 = vset.pattern.permute.xlu0 1
          %854 = vperm.xlu0 %853, %v420
          %v855 = vpop.permute.xlu0 %854
          %856 = vset.pattern.permute.xlu0 1
          %857 = vperm.xlu0 %856, %v421
          %v858 = vpop.permute.xlu0 %857
          %859 = vset.pattern.permute.xlu0 1
          %860 = vperm.xlu0 %859, %v422
          %v861 = vpop.permute.xlu0 %860
          %862 = vset.pattern.permute.xlu0 1
          %863 = vperm.xlu0 %862, %v423
          %v864 = vpop.permute.xlu0 %863
          %865 = vset.pattern.permute.xlu0 1
          %866 = vperm.xlu0 %865, %v424
          %v867 = vpop.permute.xlu0 %866
          %868 = vset.pattern.permute.xlu0 1
          %869 = vperm.xlu0 %868, %v425
          %v870 = vpop.permute.xlu0 %869
          %871 = vset.pattern.permute.xlu0 1
          %872 = vperm.xlu0 %871, %v426
          %v873 = vpop.permute.xlu0 %872
          %874 = vset.pattern.permute.xlu0 1
          %875 = vperm.xlu0 %874, %v427
          %v876 = vpop.permute.xlu0 %875
          %877 = vset.pattern.permute.xlu0 1
          %878 = vperm.xlu0 %877, %v428
          %v879 = vpop.permute.xlu0 %878
          %880 = vset.pattern.permute.xlu0 1
          %881 = vperm.xlu0 %880, %v429
          %v882 = vpop.permute.xlu0 %881
          %vm883 = vcmp.eq.s32.totalorder %v837, %v463
          %vm884 = vcmp.eq.s32.totalorder %v837, %v464
          %vm885 = vcmp.eq.s32.totalorder %v840, %v463
          %vm886 = vcmp.eq.s32.totalorder %v840, %v464
          %vm887 = vcmp.eq.s32.totalorder %v843, %v463
          %vm888 = vcmp.eq.s32.totalorder %v843, %v464
          %vm889 = vcmp.eq.s32.totalorder %v846, %v463
          %vm890 = vcmp.eq.s32.totalorder %v846, %v464
          %vm891 = vcmp.eq.s32.totalorder %v849, %v463
          %vm892 = vcmp.eq.s32.totalorder %v849, %v464
          %vm893 = vcmp.eq.s32.totalorder %v852, %v463
          %vm894 = vcmp.eq.s32.totalorder %v852, %v464
          %vm895 = vcmp.eq.s32.totalorder %v855, %v463
          %vm896 = vcmp.eq.s32.totalorder %v855, %v464
          %vm897 = vcmp.eq.s32.totalorder %v858, %v463
          %vm898 = vcmp.eq.s32.totalorder %v858, %v464
          %vm899 = vcmp.eq.s32.totalorder %v861, %v463
          %vm900 = vcmp.eq.s32.totalorder %v861, %v464
          %vm901 = vcmp.eq.s32.totalorder %v864, %v463
          %vm902 = vcmp.eq.s32.totalorder %v864, %v464
          %vm903 = vcmp.eq.s32.totalorder %v867, %v463
          %vm904 = vcmp.eq.s32.totalorder %v867, %v464
          %vm905 = vcmp.eq.s32.totalorder %v870, %v463
          %vm906 = vcmp.eq.s32.totalorder %v870, %v464
          %vm907 = vcmp.eq.s32.totalorder %v873, %v463
          %vm908 = vcmp.eq.s32.totalorder %v873, %v464
          %vm909 = vcmp.eq.s32.totalorder %v876, %v463
          %vm910 = vcmp.eq.s32.totalorder %v876, %v464
          %vm911 = vcmp.eq.s32.totalorder %v879, %v463
          %vm912 = vcmp.eq.s32.totalorder %v879, %v464
          %vm913 = vcmp.eq.s32.totalorder %v882, %v463
          %vm914 = vcmp.eq.s32.totalorder %v882, %v464
          %v915 = vsel %vm883, 1, 0
          %v916 = vsel %vm884, 1, 0
          %v917 = vsel %vm885, 1, 0
          %v918 = vsel %vm886, 1, 0
          %v919 = vsel %vm887, 1, 0
          %v920 = vsel %vm888, 1, 0
          %v921 = vsel %vm889, 1, 0
          %v922 = vsel %vm890, 1, 0
          %v923 = vsel %vm891, 1, 0
          %v924 = vsel %vm892, 1, 0
          %v925 = vsel %vm893, 1, 0
          %v926 = vsel %vm894, 1, 0
          %v927 = vsel %vm895, 1, 0
          %v928 = vsel %vm896, 1, 0
          %v929 = vsel %vm897, 1, 0
          %v930 = vsel %vm898, 1, 0
          %v931 = vsel %vm899, 1, 0
          %v932 = vsel %vm900, 1, 0
          %v933 = vsel %vm901, 1, 0
          %v934 = vsel %vm902, 1, 0
          %v935 = vsel %vm903, 1, 0
          %v936 = vsel %vm904, 1, 0
          %v937 = vsel %vm905, 1, 0
          %v938 = vsel %vm906, 1, 0
          %v939 = vsel %vm907, 1, 0
          %v940 = vsel %vm908, 1, 0
          %v941 = vsel %vm909, 1, 0
          %v942 = vsel %vm910, 1, 0
          %v943 = vsel %vm911, 1, 0
          %v944 = vsel %vm912, 1, 0
          %v945 = vsel %vm913, 1, 0
          %v946 = vsel %vm914, 1, 0
          %v947 = vcvt.s32.f32 %v915
          %v948 = vcvt.s32.f32 %v916
          %v949 = vcvt.s32.f32 %v917
          %v950 = vcvt.s32.f32 %v918
          %v951 = vcvt.s32.f32 %v919
          %v952 = vcvt.s32.f32 %v920
          %v953 = vcvt.s32.f32 %v921
          %v954 = vcvt.s32.f32 %v922
          %v955 = vcvt.s32.f32 %v923
          %v956 = vcvt.s32.f32 %v924
          %v957 = vcvt.s32.f32 %v925
          %v958 = vcvt.s32.f32 %v926
          %v959 = vcvt.s32.f32 %v927
          %v960 = vcvt.s32.f32 %v928
          %v961 = vcvt.s32.f32 %v929
          %v962 = vcvt.s32.f32 %v930
          %v963 = vcvt.s32.f32 %v931
          %v964 = vcvt.s32.f32 %v932
          %v965 = vcvt.s32.f32 %v933
          %v966 = vcvt.s32.f32 %v934
          %v967 = vcvt.s32.f32 %v935
          %v968 = vcvt.s32.f32 %v936
          %v969 = vcvt.s32.f32 %v937
          %v970 = vcvt.s32.f32 %v938
          %v971 = vcvt.s32.f32 %v939
          %v972 = vcvt.s32.f32 %v940
          %v973 = vcvt.s32.f32 %v941
          %v974 = vcvt.s32.f32 %v942
          %v975 = vcvt.s32.f32 %v943
          %v976 = vcvt.s32.f32 %v944
          %v977 = vcvt.s32.f32 %v945
          %v978 = vcvt.s32.f32 %v946
          %v979 = vpack.c.bf16 %v949, %v947
          %v980 = vpack.c.bf16 %v950, %v948
          %v981 = vpack.c.bf16 %v953, %v951
          %v982 = vpack.c.bf16 %v954, %v952
          %v983 = vpack.c.bf16 %v957, %v955
          %v984 = vpack.c.bf16 %v958, %v956
          %v985 = vpack.c.bf16 %v961, %v959
          %v986 = vpack.c.bf16 %v962, %v960
          %v987 = vpack.c.bf16 %v965, %v963
          %v988 = vpack.c.bf16 %v966, %v964
          %v989 = vpack.c.bf16 %v969, %v967
          %v990 = vpack.c.bf16 %v970, %v968
          %v991 = vpack.c.bf16 %v973, %v971
          %v992 = vpack.c.bf16 %v974, %v972
          %v993 = vpack.c.bf16 %v977, %v975
          %v994 = vpack.c.bf16 %v978, %v976
          %995 = vmatpush.bf16.msra.mxu0 %v696
          %996 = vmatpush.bf16.msra.mxu0 %v695
          %997 = vmatpush.bf16.msra.mxu0 %v694
          %998 = vmatpush.bf16.msra.mxu0 %v693
          %999 = vmatpush.bf16.msra.mxu0 %v692
          %1000 = vmatpush.bf16.msra.mxu0 %v691
          %1001 = vmatpush.bf16.msra.mxu0 %v690
          %1002 = vmatpush.bf16.msra.mxu0 %v689
          %1003 = vmatmul.bf16.gmra.mxu0 %v979
          %v1004 = vpop.f32.mrf.mxu0
          %v1005 = vadd.f32 0.0, %v1004
          %v1006 = vpop.f32.mrf.mxu0
          %v1007 = vadd.f32 0.0, %v1006
          %1008 = vmatmul.bf16.gmra.mxu0 %v981
          %v1009 = vpop.f32.mrf.mxu0
          %v1010 = vadd.f32 0.0, %v1009
          %v1011 = vpop.f32.mrf.mxu0
          %v1012 = vadd.f32 0.0, %v1011
          %1013 = vmatmul.bf16.gmra.mxu0 %v983
          %v1014 = vpop.f32.mrf.mxu0
          %v1015 = vadd.f32 0.0, %v1014
          %v1016 = vpop.f32.mrf.mxu0
          %v1017 = vadd.f32 0.0, %v1016
          %1018 = vmatmul.bf16.gmra.mxu0 %v985
          %v1019 = vpop.f32.mrf.mxu0
          %v1020 = vadd.f32 0.0, %v1019
          %v1021 = vpop.f32.mrf.mxu0
          %v1022 = vadd.f32 0.0, %v1021
          %1023 = vmatmul.bf16.gmra.mxu0 %v987
          %v1024 = vpop.f32.mrf.mxu0
          %v1025 = vadd.f32 0.0, %v1024
          %v1026 = vpop.f32.mrf.mxu0
          %v1027 = vadd.f32 0.0, %v1026
          %1028 = vmatmul.bf16.gmra.mxu0 %v989
          %v1029 = vpop.f32.mrf.mxu0
          %v1030 = vadd.f32 0.0, %v1029
          %v1031 = vpop.f32.mrf.mxu0
          %v1032 = vadd.f32 0.0, %v1031
          %1033 = vmatmul.bf16.gmra.mxu0 %v991
          %v1034 = vpop.f32.mrf.mxu0
          %v1035 = vadd.f32 0.0, %v1034
          %v1036 = vpop.f32.mrf.mxu0
          %v1037 = vadd.f32 0.0, %v1036
          %1038 = vmatmul.bf16.gmra.mxu0 %v993
          %v1039 = vpop.f32.mrf.mxu0
          %v1040 = vadd.f32 0.0, %v1039
          %v1041 = vpop.f32.mrf.mxu0
          %v1042 = vadd.f32 0.0, %v1041
          %1043 = vdwg.mxu0
          %1044 = vmatpush.bf16.msra.mxu0 %v704
          %1045 = vmatpush.bf16.msra.mxu0 %v703
          %1046 = vmatpush.bf16.msra.mxu0 %v702
          %1047 = vmatpush.bf16.msra.mxu0 %v701
          %1048 = vmatpush.bf16.msra.mxu0 %v700
          %1049 = vmatpush.bf16.msra.mxu0 %v699
          %1050 = vmatpush.bf16.msra.mxu0 %v698
          %1051 = vmatpush.bf16.msra.mxu0 %v697
          %1052 = vmatmul.bf16.gmra.mxu0 %v980
          %v1053 = vpop.f32.mrf.mxu0
          %v1054 = vadd.f32 %v1005, %v1053
          %v1055 = vpop.f32.mrf.mxu0
          %v1056 = vadd.f32 %v1007, %v1055
          %1057 = vmatmul.bf16.gmra.mxu0 %v982
          %v1058 = vpop.f32.mrf.mxu0
          %v1059 = vadd.f32 %v1010, %v1058
          %v1060 = vpop.f32.mrf.mxu0
          %v1061 = vadd.f32 %v1012, %v1060
          %1062 = vmatmul.bf16.gmra.mxu0 %v984
          %v1063 = vpop.f32.mrf.mxu0
          %v1064 = vadd.f32 %v1015, %v1063
          %v1065 = vpop.f32.mrf.mxu0
          %v1066 = vadd.f32 %v1017, %v1065
          %1067 = vmatmul.bf16.gmra.mxu0 %v986
          %v1068 = vpop.f32.mrf.mxu0
          %v1069 = vadd.f32 %v1020, %v1068
          %v1070 = vpop.f32.mrf.mxu0
          %v1071 = vadd.f32 %v1022, %v1070
          %1072 = vmatmul.bf16.gmra.mxu0 %v988
          %v1073 = vpop.f32.mrf.mxu0
          %v1074 = vadd.f32 %v1025, %v1073
          %v1075 = vpop.f32.mrf.mxu0
          %v1076 = vadd.f32 %v1027, %v1075
          %1077 = vmatmul.bf16.gmra.mxu0 %v990
          %v1078 = vpop.f32.mrf.mxu0
          %v1079 = vadd.f32 %v1030, %v1078
          %v1080 = vpop.f32.mrf.mxu0
          %v1081 = vadd.f32 %v1032, %v1080
          %1082 = vmatmul.bf16.gmra.mxu0 %v992
          %v1083 = vpop.f32.mrf.mxu0
          %v1084 = vadd.f32 %v1035, %v1083
          %v1085 = vpop.f32.mrf.mxu0
          %v1086 = vadd.f32 %v1037, %v1085
          %1087 = vmatmul.bf16.gmra.mxu0 %v994
          %v1088 = vpop.f32.mrf.mxu0
          %v1089 = vadd.f32 %v1040, %v1088
          %v1090 = vpop.f32.mrf.mxu0
          %v1091 = vadd.f32 %v1042, %v1090
          %1092 = vdwg.mxu0
          %v1093 = vpack.c.bf16 %v1056, %v1054
          %v1094 = vpack.c.bf16 %v1061, %v1059
          %v1095 = vpack.c.bf16 %v1066, %v1064
          %v1096 = vpack.c.bf16 %v1071, %v1069
          %v1097 = vpack.c.bf16 %v1076, %v1074
          %v1098 = vpack.c.bf16 %v1081, %v1079
          %v1099 = vpack.c.bf16 %v1086, %v1084
          %v1100 = vpack.c.bf16 %v1091, %v1089
          %v1101 = vld [vmem:[%s2 + $0x20] sm:$0xf]
          %v1102 = vld [vmem:[%s2 + $0x24] sm:$0xf]
          %v1103 = vld [vmem:[%s2 + $0x28] sm:$0xf]
          %v1104 = vld [vmem:[%s2 + $0x2c] sm:$0xf]
          %v1105 = vld [vmem:[%s2 + $0x30] sm:$0xf]
          %v1106 = vld [vmem:[%s2 + $0x34] sm:$0xf]
          %v1107 = vld [vmem:[%s2 + $0x38] sm:$0xf]
          %v1108 = vld [vmem:[%s2 + $0x3c] sm:$0xf]
          %v1117 = vunpack.c.l.b16 %v1101
          %v1118 = vunpack.c.l.b16 %v1102
          %v1119 = vunpack.c.l.b16 %v1103
          %v1120 = vunpack.c.l.b16 %v1104
          %v1121 = vunpack.c.l.b16 %v1105
          %v1122 = vunpack.c.l.b16 %v1106
          %v1123 = vunpack.c.l.b16 %v1107
          %v1124 = vunpack.c.l.b16 %v1108
          %v1125 = vpack.c.b16 %v1118, %v1117
          %v1126 = vpack.c.b16 %v1120, %v1119
          %v1127 = vpack.c.b16 %v1122, %v1121
          %v1128 = vpack.c.b16 %v1124, %v1123
          %vm1133 = vcmask 523264
          %v1135 = vsel %vm1133, %v1093, 0
          %v1138 = vsel %vm1133, %v1094, 0
          %v1141 = vsel %vm1133, %v1095, 0
          %v1144 = vsel %vm1133, %v1096, 0
          %v1147 = vsel %vm1133, %v1097, 0
          %v1150 = vsel %vm1133, %v1098, 0
          %v1153 = vsel %vm1133, %v1099, 0
          %v1156 = vsel %vm1133, %v1100, 0
          %1158 = vmatpush.bf16.msra.mxu0 0
          %1159 = vmatpush.bf16.msra.mxu0 0
          %1160 = vmatpush.bf16.msra.mxu0 0
          %1161 = vmatpush.bf16.msra.mxu0 0
          %1162 = vmatpush.bf16.msra.mxu0 %v1128
          %1163 = vmatpush.bf16.msra.mxu0 %v1127
          %1164 = vmatpush.bf16.msra.mxu0 %v1126
          %1165 = vmatpush.bf16.msra.mxu0 %v1125
          %1166 = vmatmul.bf16.gmra.mxu0 %v1135
          %v1167 = vpop.f32.mrf.mxu0
          %v1168 = vadd.f32 0.0, %v1167
          %v1169 = vpop.f32.mrf.mxu0
          %v1170 = vadd.f32 0.0, %v1169
          %1171 = vmatmul.bf16.gmra.mxu0 %v1138
          %v1172 = vpop.f32.mrf.mxu0
          %v1173 = vadd.f32 0.0, %v1172
          %v1174 = vpop.f32.mrf.mxu0
          %v1175 = vadd.f32 0.0, %v1174
          %1176 = vmatmul.bf16.gmra.mxu0 %v1141
          %v1177 = vpop.f32.mrf.mxu0
          %v1178 = vadd.f32 0.0, %v1177
          %v1179 = vpop.f32.mrf.mxu0
          %v1180 = vadd.f32 0.0, %v1179
          %1181 = vmatmul.bf16.gmra.mxu0 %v1144
          %v1182 = vpop.f32.mrf.mxu0
          %v1183 = vadd.f32 0.0, %v1182
          %v1184 = vpop.f32.mrf.mxu0
          %v1185 = vadd.f32 0.0, %v1184
          %1186 = vmatmul.bf16.gmra.mxu0 %v1147
          %v1187 = vpop.f32.mrf.mxu0
          %v1188 = vadd.f32 0.0, %v1187
          %v1189 = vpop.f32.mrf.mxu0
          %v1190 = vadd.f32 0.0, %v1189
          %1191 = vmatmul.bf16.gmra.mxu0 %v1150
          %v1192 = vpop.f32.mrf.mxu0
          %v1193 = vadd.f32 0.0, %v1192
          %v1194 = vpop.f32.mrf.mxu0
          %v1195 = vadd.f32 0.0, %v1194
          %1196 = vmatmul.bf16.gmra.mxu0 %v1153
          %v1197 = vpop.f32.mrf.mxu0
          %v1198 = vadd.f32 0.0, %v1197
          %v1199 = vpop.f32.mrf.mxu0
          %v1200 = vadd.f32 0.0, %v1199
          %1201 = vmatmul.bf16.gmra.mxu0 %v1156
          %v1202 = vpop.f32.mrf.mxu0
          %v1203 = vadd.f32 0.0, %v1202
          %v1204 = vpop.f32.mrf.mxu0
          %v1205 = vadd.f32 0.0, %v1204
          %1206 = vdwg.mxu0
          %v1215 = vunpack.c.l.b16 %v827
          %v1216 = vunpack.c.l.b16 %v828
          %v1217 = vunpack.c.l.b16 %v829
          %v1218 = vunpack.c.l.b16 %v830
          %v1219 = vunpack.c.l.b16 %v831
          %v1220 = vunpack.c.l.b16 %v832
          %v1221 = vunpack.c.l.b16 %v833
          %v1222 = vunpack.c.l.b16 %v834
          %v1223 = vpack.c.b16 %v1216, %v1215
          %v1224 = vpack.c.b16 %v1218, %v1217
          %v1225 = vpack.c.b16 %v1220, %v1219
          %v1226 = vpack.c.b16 %v1222, %v1221
          %v1232 = vsel %vm1133, %v819, 0
          %v1235 = vsel %vm1133, %v820, 0
          %v1238 = vsel %vm1133, %v821, 0
          %v1241 = vsel %vm1133, %v822, 0
          %v1244 = vsel %vm1133, %v823, 0
          %v1247 = vsel %vm1133, %v824, 0
          %v1250 = vsel %vm1133, %v825, 0
          %v1253 = vsel %vm1133, %v826, 0
          %1255 = vmatpush.bf16.msra.mxu0 0
          %1256 = vmatpush.bf16.msra.mxu0 0
          %1257 = vmatpush.bf16.msra.mxu0 0
          %1258 = vmatpush.bf16.msra.mxu0 0
          %1259 = vmatpush.bf16.msra.mxu0 %v1226
          %1260 = vmatpush.bf16.msra.mxu0 %v1225
          %1261 = vmatpush.bf16.msra.mxu0 %v1224
          %1262 = vmatpush.bf16.msra.mxu0 %v1223
          %1263 = vmatmul.bf16.gmra.mxu0 %v1232
          %v1264 = vpop.f32.mrf.mxu0
          %v1265 = vadd.f32 %v1168, %v1264
          %v1266 = vpop.f32.mrf.mxu0
          %v1267 = vadd.f32 %v1170, %v1266
          %1268 = vmatmul.bf16.gmra.mxu0 %v1235
          %v1269 = vpop.f32.mrf.mxu0
          %v1270 = vadd.f32 %v1173, %v1269
          %v1271 = vpop.f32.mrf.mxu0
          %v1272 = vadd.f32 %v1175, %v1271
          %1273 = vmatmul.bf16.gmra.mxu0 %v1238
          %v1274 = vpop.f32.mrf.mxu0
          %v1275 = vadd.f32 %v1178, %v1274
          %v1276 = vpop.f32.mrf.mxu0
          %v1277 = vadd.f32 %v1180, %v1276
          %1278 = vmatmul.bf16.gmra.mxu0 %v1241
          %v1279 = vpop.f32.mrf.mxu0
          %v1280 = vadd.f32 %v1183, %v1279
          %v1281 = vpop.f32.mrf.mxu0
          %v1282 = vadd.f32 %v1185, %v1281
          %1283 = vmatmul.bf16.gmra.mxu0 %v1244
          %v1284 = vpop.f32.mrf.mxu0
          %v1285 = vadd.f32 %v1188, %v1284
          %v1286 = vpop.f32.mrf.mxu0
          %v1287 = vadd.f32 %v1190, %v1286
          %1288 = vmatmul.bf16.gmra.mxu0 %v1247
          %v1289 = vpop.f32.mrf.mxu0
          %v1290 = vadd.f32 %v1193, %v1289
          %v1291 = vpop.f32.mrf.mxu0
          %v1292 = vadd.f32 %v1195, %v1291
          %1293 = vmatmul.bf16.gmra.mxu0 %v1250
          %v1294 = vpop.f32.mrf.mxu0
          %v1295 = vadd.f32 %v1198, %v1294
          %v1296 = vpop.f32.mrf.mxu0
          %v1297 = vadd.f32 %v1200, %v1296
          %1298 = vmatmul.bf16.gmra.mxu0 %v1253
          %v1299 = vpop.f32.mrf.mxu0
          %v1300 = vadd.f32 %v1203, %v1299
          %v1301 = vpop.f32.mrf.mxu0
          %v1302 = vadd.f32 %v1205, %v1301
          %1303 = vdwg.mxu0
          %1304 = vset.pattern.permute.xlu0 2
          %1305 = vperm.xlu0 %1304, %v414
          %v1306 = vpop.permute.xlu0 %1305
          %1307 = vset.pattern.permute.xlu0 2
          %1308 = vperm.xlu0 %1307, %v415
          %v1309 = vpop.permute.xlu0 %1308
          %1310 = vset.pattern.permute.xlu0 2
          %1311 = vperm.xlu0 %1310, %v416
          %v1312 = vpop.permute.xlu0 %1311
          %1313 = vset.pattern.permute.xlu0 2
          %1314 = vperm.xlu0 %1313, %v417
          %v1315 = vpop.permute.xlu0 %1314
          %1316 = vset.pattern.permute.xlu0 2
          %1317 = vperm.xlu0 %1316, %v418
          %v1318 = vpop.permute.xlu0 %1317
          %1319 = vset.pattern.permute.xlu0 2
          %1320 = vperm.xlu0 %1319, %v419
          %v1321 = vpop.permute.xlu0 %1320
          %1322 = vset.pattern.permute.xlu0 2
          %1323 = vperm.xlu0 %1322, %v420
          %v1324 = vpop.permute.xlu0 %1323
          %1325 = vset.pattern.permute.xlu0 2
          %1326 = vperm.xlu0 %1325, %v421
          %v1327 = vpop.permute.xlu0 %1326
          %1328 = vset.pattern.permute.xlu0 2
          %1329 = vperm.xlu0 %1328, %v422
          %v1330 = vpop.permute.xlu0 %1329
          %1331 = vset.pattern.permute.xlu0 2
          %1332 = vperm.xlu0 %1331, %v423
          %v1333 = vpop.permute.xlu0 %1332
          %1334 = vset.pattern.permute.xlu0 2
          %1335 = vperm.xlu0 %1334, %v424
          %v1336 = vpop.permute.xlu0 %1335
          %1337 = vset.pattern.permute.xlu0 2
          %1338 = vperm.xlu0 %1337, %v425
          %v1339 = vpop.permute.xlu0 %1338
          %1340 = vset.pattern.permute.xlu0 2
          %1341 = vperm.xlu0 %1340, %v426
          %v1342 = vpop.permute.xlu0 %1341
          %1343 = vset.pattern.permute.xlu0 2
          %1344 = vperm.xlu0 %1343, %v427
          %v1345 = vpop.permute.xlu0 %1344
          %1346 = vset.pattern.permute.xlu0 2
          %1347 = vperm.xlu0 %1346, %v428
          %v1348 = vpop.permute.xlu0 %1347
          %1349 = vset.pattern.permute.xlu0 2
          %1350 = vperm.xlu0 %1349, %v429
          %v1351 = vpop.permute.xlu0 %1350
          %vm1352 = vcmp.eq.s32.totalorder %v1306, %v463
          %vm1353 = vcmp.eq.s32.totalorder %v1306, %v464
          %vm1354 = vcmp.eq.s32.totalorder %v1309, %v463
          %vm1355 = vcmp.eq.s32.totalorder %v1309, %v464
          %vm1356 = vcmp.eq.s32.totalorder %v1312, %v463
          %vm1357 = vcmp.eq.s32.totalorder %v1312, %v464
          %vm1358 = vcmp.eq.s32.totalorder %v1315, %v463
          %vm1359 = vcmp.eq.s32.totalorder %v1315, %v464
          %vm1360 = vcmp.eq.s32.totalorder %v1318, %v463
          %vm1361 = vcmp.eq.s32.totalorder %v1318, %v464
          %vm1362 = vcmp.eq.s32.totalorder %v1321, %v463
          %vm1363 = vcmp.eq.s32.totalorder %v1321, %v464
          %vm1364 = vcmp.eq.s32.totalorder %v1324, %v463
          %vm1365 = vcmp.eq.s32.totalorder %v1324, %v464
          %vm1366 = vcmp.eq.s32.totalorder %v1327, %v463
          %vm1367 = vcmp.eq.s32.totalorder %v1327, %v464
          %vm1368 = vcmp.eq.s32.totalorder %v1330, %v463
          %vm1369 = vcmp.eq.s32.totalorder %v1330, %v464
          %vm1370 = vcmp.eq.s32.totalorder %v1333, %v463
          %vm1371 = vcmp.eq.s32.totalorder %v1333, %v464
          %vm1372 = vcmp.eq.s32.totalorder %v1336, %v463
          %vm1373 = vcmp.eq.s32.totalorder %v1336, %v464
          %vm1374 = vcmp.eq.s32.totalorder %v1339, %v463
          %vm1375 = vcmp.eq.s32.totalorder %v1339, %v464
          %vm1376 = vcmp.eq.s32.totalorder %v1342, %v463
          %vm1377 = vcmp.eq.s32.totalorder %v1342, %v464
          %vm1378 = vcmp.eq.s32.totalorder %v1345, %v463
          %vm1379 = vcmp.eq.s32.totalorder %v1345, %v464
          %vm1380 = vcmp.eq.s32.totalorder %v1348, %v463
          %vm1381 = vcmp.eq.s32.totalorder %v1348, %v464
          %vm1382 = vcmp.eq.s32.totalorder %v1351, %v463
          %vm1383 = vcmp.eq.s32.totalorder %v1351, %v464
          %v1384 = vsel %vm1352, 1, 0
          %v1385 = vsel %vm1353, 1, 0
          %v1386 = vsel %vm1354, 1, 0
          %v1387 = vsel %vm1355, 1, 0
          %v1388 = vsel %vm1356, 1, 0
          %v1389 = vsel %vm1357, 1, 0
          %v1390 = vsel %vm1358, 1, 0
          %v1391 = vsel %vm1359, 1, 0
          %v1392 = vsel %vm1360, 1, 0
          %v1393 = vsel %vm1361, 1, 0
          %v1394 = vsel %vm1362, 1, 0
          %v1395 = vsel %vm1363, 1, 0
          %v1396 = vsel %vm1364, 1, 0
          %v1397 = vsel %vm1365, 1, 0
          %v1398 = vsel %vm1366, 1, 0
          %v1399 = vsel %vm1367, 1, 0
          %v1400 = vsel %vm1368, 1, 0
          %v1401 = vsel %vm1369, 1, 0
          %v1402 = vsel %vm1370, 1, 0
          %v1403 = vsel %vm1371, 1, 0
          %v1404 = vsel %vm1372, 1, 0
          %v1405 = vsel %vm1373, 1, 0
          %v1406 = vsel %vm1374, 1, 0
          %v1407 = vsel %vm1375, 1, 0
          %v1408 = vsel %vm1376, 1, 0
          %v1409 = vsel %vm1377, 1, 0
          %v1410 = vsel %vm1378, 1, 0
          %v1411 = vsel %vm1379, 1, 0
          %v1412 = vsel %vm1380, 1, 0
          %v1413 = vsel %vm1381, 1, 0
          %v1414 = vsel %vm1382, 1, 0
          %v1415 = vsel %vm1383, 1, 0
          %v1416 = vcvt.s32.f32 %v1384
          %v1417 = vcvt.s32.f32 %v1385
          %v1418 = vcvt.s32.f32 %v1386
          %v1419 = vcvt.s32.f32 %v1387
          %v1420 = vcvt.s32.f32 %v1388
          %v1421 = vcvt.s32.f32 %v1389
          %v1422 = vcvt.s32.f32 %v1390
          %v1423 = vcvt.s32.f32 %v1391
          %v1424 = vcvt.s32.f32 %v1392
          %v1425 = vcvt.s32.f32 %v1393
          %v1426 = vcvt.s32.f32 %v1394
          %v1427 = vcvt.s32.f32 %v1395
          %v1428 = vcvt.s32.f32 %v1396
          %v1429 = vcvt.s32.f32 %v1397
          %v1430 = vcvt.s32.f32 %v1398
          %v1431 = vcvt.s32.f32 %v1399
          %v1432 = vcvt.s32.f32 %v1400
          %v1433 = vcvt.s32.f32 %v1401
          %v1434 = vcvt.s32.f32 %v1402
          %v1435 = vcvt.s32.f32 %v1403
          %v1436 = vcvt.s32.f32 %v1404
          %v1437 = vcvt.s32.f32 %v1405
          %v1438 = vcvt.s32.f32 %v1406
          %v1439 = vcvt.s32.f32 %v1407
          %v1440 = vcvt.s32.f32 %v1408
          %v1441 = vcvt.s32.f32 %v1409
          %v1442 = vcvt.s32.f32 %v1410
          %v1443 = vcvt.s32.f32 %v1411
          %v1444 = vcvt.s32.f32 %v1412
          %v1445 = vcvt.s32.f32 %v1413
          %v1446 = vcvt.s32.f32 %v1414
          %v1447 = vcvt.s32.f32 %v1415
          %v1448 = vpack.c.bf16 %v1418, %v1416
          %v1449 = vpack.c.bf16 %v1419, %v1417
          %v1450 = vpack.c.bf16 %v1422, %v1420
          %v1451 = vpack.c.bf16 %v1423, %v1421
          %v1452 = vpack.c.bf16 %v1426, %v1424
          %v1453 = vpack.c.bf16 %v1427, %v1425
          %v1454 = vpack.c.bf16 %v1430, %v1428
          %v1455 = vpack.c.bf16 %v1431, %v1429
          %v1456 = vpack.c.bf16 %v1434, %v1432
          %v1457 = vpack.c.bf16 %v1435, %v1433
          %v1458 = vpack.c.bf16 %v1438, %v1436
          %v1459 = vpack.c.bf16 %v1439, %v1437
          %v1460 = vpack.c.bf16 %v1442, %v1440
          %v1461 = vpack.c.bf16 %v1443, %v1441
          %v1462 = vpack.c.bf16 %v1446, %v1444
          %v1463 = vpack.c.bf16 %v1447, %v1445
          %1464 = vmatpush.bf16.msra.mxu0 %v696
          %1465 = vmatpush.bf16.msra.mxu0 %v695
          %1466 = vmatpush.bf16.msra.mxu0 %v694
          %1467 = vmatpush.bf16.msra.mxu0 %v693
          %1468 = vmatpush.bf16.msra.mxu0 %v692
          %1469 = vmatpush.bf16.msra.mxu0 %v691
          %1470 = vmatpush.bf16.msra.mxu0 %v690
          %1471 = vmatpush.bf16.msra.mxu0 %v689
          %1472 = vmatmul.bf16.gmra.mxu0 %v1448
          %v1473 = vpop.f32.mrf.mxu0
          %v1474 = vadd.f32 0.0, %v1473
          %v1475 = vpop.f32.mrf.mxu0
          %v1476 = vadd.f32 0.0, %v1475
          %1477 = vmatmul.bf16.gmra.mxu0 %v1450
          %v1478 = vpop.f32.mrf.mxu0
          %v1479 = vadd.f32 0.0, %v1478
          %v1480 = vpop.f32.mrf.mxu0
          %v1481 = vadd.f32 0.0, %v1480
          %1482 = vmatmul.bf16.gmra.mxu0 %v1452
          %v1483 = vpop.f32.mrf.mxu0
          %v1484 = vadd.f32 0.0, %v1483
          %v1485 = vpop.f32.mrf.mxu0
          %v1486 = vadd.f32 0.0, %v1485
          %1487 = vmatmul.bf16.gmra.mxu0 %v1454
          %v1488 = vpop.f32.mrf.mxu0
          %v1489 = vadd.f32 0.0, %v1488
          %v1490 = vpop.f32.mrf.mxu0
          %v1491 = vadd.f32 0.0, %v1490
          %1492 = vmatmul.bf16.gmra.mxu0 %v1456
          %v1493 = vpop.f32.mrf.mxu0
          %v1494 = vadd.f32 0.0, %v1493
          %v1495 = vpop.f32.mrf.mxu0
          %v1496 = vadd.f32 0.0, %v1495
          %1497 = vmatmul.bf16.gmra.mxu0 %v1458
          %v1498 = vpop.f32.mrf.mxu0
          %v1499 = vadd.f32 0.0, %v1498
          %v1500 = vpop.f32.mrf.mxu0
          %v1501 = vadd.f32 0.0, %v1500
          %1502 = vmatmul.bf16.gmra.mxu0 %v1460
          %v1503 = vpop.f32.mrf.mxu0
          %v1504 = vadd.f32 0.0, %v1503
          %v1505 = vpop.f32.mrf.mxu0
          %v1506 = vadd.f32 0.0, %v1505
          %1507 = vmatmul.bf16.gmra.mxu0 %v1462
          %v1508 = vpop.f32.mrf.mxu0
          %v1509 = vadd.f32 0.0, %v1508
          %v1510 = vpop.f32.mrf.mxu0
          %v1511 = vadd.f32 0.0, %v1510
          %1512 = vdwg.mxu0
          %1513 = vmatpush.bf16.msra.mxu0 %v704
          %1514 = vmatpush.bf16.msra.mxu0 %v703
          %1515 = vmatpush.bf16.msra.mxu0 %v702
          %1516 = vmatpush.bf16.msra.mxu0 %v701
          %1517 = vmatpush.bf16.msra.mxu0 %v700
          %1518 = vmatpush.bf16.msra.mxu0 %v699
          %1519 = vmatpush.bf16.msra.mxu0 %v698
          %1520 = vmatpush.bf16.msra.mxu0 %v697
          %1521 = vmatmul.bf16.gmra.mxu0 %v1449
          %v1522 = vpop.f32.mrf.mxu0
          %v1523 = vadd.f32 %v1474, %v1522
          %v1524 = vpop.f32.mrf.mxu0
          %v1525 = vadd.f32 %v1476, %v1524
          %1526 = vmatmul.bf16.gmra.mxu0 %v1451
          %v1527 = vpop.f32.mrf.mxu0
          %v1528 = vadd.f32 %v1479, %v1527
          %v1529 = vpop.f32.mrf.mxu0
          %v1530 = vadd.f32 %v1481, %v1529
          %1531 = vmatmul.bf16.gmra.mxu0 %v1453
          %v1532 = vpop.f32.mrf.mxu0
          %v1533 = vadd.f32 %v1484, %v1532
          %v1534 = vpop.f32.mrf.mxu0
          %v1535 = vadd.f32 %v1486, %v1534
          %1536 = vmatmul.bf16.gmra.mxu0 %v1455
          %v1537 = vpop.f32.mrf.mxu0
          %v1538 = vadd.f32 %v1489, %v1537
          %v1539 = vpop.f32.mrf.mxu0
          %v1540 = vadd.f32 %v1491, %v1539
          %1541 = vmatmul.bf16.gmra.mxu0 %v1457
          %v1542 = vpop.f32.mrf.mxu0
          %v1543 = vadd.f32 %v1494, %v1542
          %v1544 = vpop.f32.mrf.mxu0
          %v1545 = vadd.f32 %v1496, %v1544
          %1546 = vmatmul.bf16.gmra.mxu0 %v1459
          %v1547 = vpop.f32.mrf.mxu0
          %v1548 = vadd.f32 %v1499, %v1547
          %v1549 = vpop.f32.mrf.mxu0
          %v1550 = vadd.f32 %v1501, %v1549
          %1551 = vmatmul.bf16.gmra.mxu0 %v1461
          %v1552 = vpop.f32.mrf.mxu0
          %v1553 = vadd.f32 %v1504, %v1552
          %v1554 = vpop.f32.mrf.mxu0
          %v1555 = vadd.f32 %v1506, %v1554
          %1556 = vmatmul.bf16.gmra.mxu0 %v1463
          %v1557 = vpop.f32.mrf.mxu0
          %v1558 = vadd.f32 %v1509, %v1557
          %v1559 = vpop.f32.mrf.mxu0
          %v1560 = vadd.f32 %v1511, %v1559
          %1561 = vdwg.mxu0
          %v1562 = vpack.c.bf16 %v1525, %v1523
          %v1563 = vpack.c.bf16 %v1530, %v1528
          %v1564 = vpack.c.bf16 %v1535, %v1533
          %v1565 = vpack.c.bf16 %v1540, %v1538
          %v1566 = vpack.c.bf16 %v1545, %v1543
          %v1567 = vpack.c.bf16 %v1550, %v1548
          %v1568 = vpack.c.bf16 %v1555, %v1553
          %v1569 = vpack.c.bf16 %v1560, %v1558
          %v1570 = vld [vmem:[%s2 + $0x40] sm:$0xf]
          %v1571 = vld [vmem:[%s2 + $0x44] sm:$0xf]
          %v1572 = vld [vmem:[%s2 + $0x48] sm:$0xf]
          %v1573 = vld [vmem:[%s2 + $0x4c] sm:$0xf]
          %v1574 = vld [vmem:[%s2 + $0x50] sm:$0xf]
          %v1575 = vld [vmem:[%s2 + $0x54] sm:$0xf]
          %v1576 = vld [vmem:[%s2 + $0x58] sm:$0xf]
          %v1577 = vld [vmem:[%s2 + $0x5c] sm:$0xf]
          %v1586 = vunpack.c.l.b16 %v1570
          %v1587 = vunpack.c.l.b16 %v1571
          %v1588 = vunpack.c.l.b16 %v1572
          %v1589 = vunpack.c.l.b16 %v1573
          %v1590 = vunpack.c.l.b16 %v1574
          %v1591 = vunpack.c.l.b16 %v1575
          %v1592 = vunpack.c.l.b16 %v1576
          %v1593 = vunpack.c.l.b16 %v1577
          %v1594 = vpack.c.b16 %v1587, %v1586
          %v1595 = vpack.c.b16 %v1589, %v1588
          %v1596 = vpack.c.b16 %v1591, %v1590
          %v1597 = vpack.c.b16 %v1593, %v1592
          %v1603 = vsel %vm1133, %v1562, 0
          %v1606 = vsel %vm1133, %v1563, 0
          %v1609 = vsel %vm1133, %v1564, 0
          %v1612 = vsel %vm1133, %v1565, 0
          %v1615 = vsel %vm1133, %v1566, 0
          %v1618 = vsel %vm1133, %v1567, 0
          %v1621 = vsel %vm1133, %v1568, 0
          %v1624 = vsel %vm1133, %v1569, 0
          %1626 = vmatpush.bf16.msra.mxu0 0
          %1627 = vmatpush.bf16.msra.mxu0 0
          %1628 = vmatpush.bf16.msra.mxu0 0
          %1629 = vmatpush.bf16.msra.mxu0 0
          %1630 = vmatpush.bf16.msra.mxu0 %v1597
          %1631 = vmatpush.bf16.msra.mxu0 %v1596
          %1632 = vmatpush.bf16.msra.mxu0 %v1595
          %1633 = vmatpush.bf16.msra.mxu0 %v1594
          %1634 = vmatmul.bf16.gmra.mxu0 %v1603
          %v1635 = vpop.f32.mrf.mxu0
          %v1636 = vadd.f32 0.0, %v1635
          %v1637 = vpop.f32.mrf.mxu0
          %v1638 = vadd.f32 0.0, %v1637
          %1639 = vmatmul.bf16.gmra.mxu0 %v1606
          %v1640 = vpop.f32.mrf.mxu0
          %v1641 = vadd.f32 0.0, %v1640
          %v1642 = vpop.f32.mrf.mxu0
          %v1643 = vadd.f32 0.0, %v1642
          %1644 = vmatmul.bf16.gmra.mxu0 %v1609
          %v1645 = vpop.f32.mrf.mxu0
          %v1646 = vadd.f32 0.0, %v1645
          %v1647 = vpop.f32.mrf.mxu0
          %v1648 = vadd.f32 0.0, %v1647
          %1649 = vmatmul.bf16.gmra.mxu0 %v1612
          %v1650 = vpop.f32.mrf.mxu0
          %v1651 = vadd.f32 0.0, %v1650
          %v1652 = vpop.f32.mrf.mxu0
          %v1653 = vadd.f32 0.0, %v1652
          %1654 = vmatmul.bf16.gmra.mxu0 %v1615
          %v1655 = vpop.f32.mrf.mxu0
          %v1656 = vadd.f32 0.0, %v1655
          %v1657 = vpop.f32.mrf.mxu0
          %v1658 = vadd.f32 0.0, %v1657
          %1659 = vmatmul.bf16.gmra.mxu0 %v1618
          %v1660 = vpop.f32.mrf.mxu0
          %v1661 = vadd.f32 0.0, %v1660
          %v1662 = vpop.f32.mrf.mxu0
          %v1663 = vadd.f32 0.0, %v1662
          %1664 = vmatmul.bf16.gmra.mxu0 %v1621
          %v1665 = vpop.f32.mrf.mxu0
          %v1666 = vadd.f32 0.0, %v1665
          %v1667 = vpop.f32.mrf.mxu0
          %v1668 = vadd.f32 0.0, %v1667
          %1669 = vmatmul.bf16.gmra.mxu0 %v1624
          %v1670 = vpop.f32.mrf.mxu0
          %v1671 = vadd.f32 0.0, %v1670
          %v1672 = vpop.f32.mrf.mxu0
          %v1673 = vadd.f32 0.0, %v1672
          %1674 = vdwg.mxu0
          %v1675 = vadd.f32 %v1265, %v1636
          %v1676 = vadd.f32 %v1267, %v1638
          %v1677 = vadd.f32 %v1270, %v1641
          %v1678 = vadd.f32 %v1272, %v1643
          %v1679 = vadd.f32 %v1275, %v1646
          %v1680 = vadd.f32 %v1277, %v1648
          %v1681 = vadd.f32 %v1280, %v1651
          %v1682 = vadd.f32 %v1282, %v1653
          %v1683 = vadd.f32 %v1285, %v1656
          %v1684 = vadd.f32 %v1287, %v1658
          %v1685 = vadd.f32 %v1290, %v1661
          %v1686 = vadd.f32 %v1292, %v1663
          %v1687 = vadd.f32 %v1295, %v1666
          %v1688 = vadd.f32 %v1297, %v1668
          %v1689 = vadd.f32 %v1300, %v1671
          %v1690 = vadd.f32 %v1302, %v1673
          %1691 = vset.pattern.permute.xlu0 3
          %1692 = vperm.xlu0 %1691, %v414
          %v1693 = vpop.permute.xlu0 %1692
          %1694 = vset.pattern.permute.xlu0 3
          %1695 = vperm.xlu0 %1694, %v415
          %v1696 = vpop.permute.xlu0 %1695
          %1697 = vset.pattern.permute.xlu0 3
          %1698 = vperm.xlu0 %1697, %v416
          %v1699 = vpop.permute.xlu0 %1698
          %1700 = vset.pattern.permute.xlu0 3
          %1701 = vperm.xlu0 %1700, %v417
          %v1702 = vpop.permute.xlu0 %1701
          %1703 = vset.pattern.permute.xlu0 3
          %1704 = vperm.xlu0 %1703, %v418
          %v1705 = vpop.permute.xlu0 %1704
          %1706 = vset.pattern.permute.xlu0 3
          %1707 = vperm.xlu0 %1706, %v419
          %v1708 = vpop.permute.xlu0 %1707
          %1709 = vset.pattern.permute.xlu0 3
          %1710 = vperm.xlu0 %1709, %v420
          %v1711 = vpop.permute.xlu0 %1710
          %1712 = vset.pattern.permute.xlu0 3
          %1713 = vperm.xlu0 %1712, %v421
          %v1714 = vpop.permute.xlu0 %1713
          %1715 = vset.pattern.permute.xlu0 3
          %1716 = vperm.xlu0 %1715, %v422
          %v1717 = vpop.permute.xlu0 %1716
          %1718 = vset.pattern.permute.xlu0 3
          %1719 = vperm.xlu0 %1718, %v423
          %v1720 = vpop.permute.xlu0 %1719
          %1721 = vset.pattern.permute.xlu0 3
          %1722 = vperm.xlu0 %1721, %v424
          %v1723 = vpop.permute.xlu0 %1722
          %1724 = vset.pattern.permute.xlu0 3
          %1725 = vperm.xlu0 %1724, %v425
          %v1726 = vpop.permute.xlu0 %1725
          %1727 = vset.pattern.permute.xlu0 3
          %1728 = vperm.xlu0 %1727, %v426
          %v1729 = vpop.permute.xlu0 %1728
          %1730 = vset.pattern.permute.xlu0 3
          %1731 = vperm.xlu0 %1730, %v427
          %v1732 = vpop.permute.xlu0 %1731
          %1733 = vset.pattern.permute.xlu0 3
          %1734 = vperm.xlu0 %1733, %v428
          %v1735 = vpop.permute.xlu0 %1734
          %1736 = vset.pattern.permute.xlu0 3
          %1737 = vperm.xlu0 %1736, %v429
          %v1738 = vpop.permute.xlu0 %1737
          %vm1739 = vcmp.eq.s32.totalorder %v1693, %v463
          %vm1740 = vcmp.eq.s32.totalorder %v1693, %v464
          %vm1741 = vcmp.eq.s32.totalorder %v1696, %v463
          %vm1742 = vcmp.eq.s32.totalorder %v1696, %v464
          %vm1743 = vcmp.eq.s32.totalorder %v1699, %v463
          %vm1744 = vcmp.eq.s32.totalorder %v1699, %v464
          %vm1745 = vcmp.eq.s32.totalorder %v1702, %v463
          %vm1746 = vcmp.eq.s32.totalorder %v1702, %v464
          %vm1747 = vcmp.eq.s32.totalorder %v1705, %v463
          %vm1748 = vcmp.eq.s32.totalorder %v1705, %v464
          %vm1749 = vcmp.eq.s32.totalorder %v1708, %v463
          %vm1750 = vcmp.eq.s32.totalorder %v1708, %v464
          %vm1751 = vcmp.eq.s32.totalorder %v1711, %v463
          %vm1752 = vcmp.eq.s32.totalorder %v1711, %v464
          %vm1753 = vcmp.eq.s32.totalorder %v1714, %v463
          %vm1754 = vcmp.eq.s32.totalorder %v1714, %v464
          %vm1755 = vcmp.eq.s32.totalorder %v1717, %v463
          %vm1756 = vcmp.eq.s32.totalorder %v1717, %v464
          %vm1757 = vcmp.eq.s32.totalorder %v1720, %v463
          %vm1758 = vcmp.eq.s32.totalorder %v1720, %v464
          %vm1759 = vcmp.eq.s32.totalorder %v1723, %v463
          %vm1760 = vcmp.eq.s32.totalorder %v1723, %v464
          %vm1761 = vcmp.eq.s32.totalorder %v1726, %v463
          %vm1762 = vcmp.eq.s32.totalorder %v1726, %v464
          %vm1763 = vcmp.eq.s32.totalorder %v1729, %v463
          %vm1764 = vcmp.eq.s32.totalorder %v1729, %v464
          %vm1765 = vcmp.eq.s32.totalorder %v1732, %v463
          %vm1766 = vcmp.eq.s32.totalorder %v1732, %v464
          %vm1767 = vcmp.eq.s32.totalorder %v1735, %v463
          %vm1768 = vcmp.eq.s32.totalorder %v1735, %v464
          %vm1769 = vcmp.eq.s32.totalorder %v1738, %v463
          %vm1770 = vcmp.eq.s32.totalorder %v1738, %v464
          %v1771 = vsel %vm1739, 1, 0
          %v1772 = vsel %vm1740, 1, 0
          %v1773 = vsel %vm1741, 1, 0
          %v1774 = vsel %vm1742, 1, 0
          %v1775 = vsel %vm1743, 1, 0
          %v1776 = vsel %vm1744, 1, 0
          %v1777 = vsel %vm1745, 1, 0
          %v1778 = vsel %vm1746, 1, 0
          %v1779 = vsel %vm1747, 1, 0
          %v1780 = vsel %vm1748, 1, 0
          %v1781 = vsel %vm1749, 1, 0
          %v1782 = vsel %vm1750, 1, 0
          %v1783 = vsel %vm1751, 1, 0
          %v1784 = vsel %vm1752, 1, 0
          %v1785 = vsel %vm1753, 1, 0
          %v1786 = vsel %vm1754, 1, 0
          %v1787 = vsel %vm1755, 1, 0
          %v1788 = vsel %vm1756, 1, 0
          %v1789 = vsel %vm1757, 1, 0
          %v1790 = vsel %vm1758, 1, 0
          %v1791 = vsel %vm1759, 1, 0
          %v1792 = vsel %vm1760, 1, 0
          %v1793 = vsel %vm1761, 1, 0
          %v1794 = vsel %vm1762, 1, 0
          %v1795 = vsel %vm1763, 1, 0
          %v1796 = vsel %vm1764, 1, 0
          %v1797 = vsel %vm1765, 1, 0
          %v1798 = vsel %vm1766, 1, 0
          %v1799 = vsel %vm1767, 1, 0
          %v1800 = vsel %vm1768, 1, 0
          %v1801 = vsel %vm1769, 1, 0
          %v1802 = vsel %vm1770, 1, 0
          %v1803 = vcvt.s32.f32 %v1771
          %v1804 = vcvt.s32.f32 %v1772
          %v1805 = vcvt.s32.f32 %v1773
          %v1806 = vcvt.s32.f32 %v1774
          %v1807 = vcvt.s32.f32 %v1775
          %v1808 = vcvt.s32.f32 %v1776
          %v1809 = vcvt.s32.f32 %v1777
          %v1810 = vcvt.s32.f32 %v1778
          %v1811 = vcvt.s32.f32 %v1779
          %v1812 = vcvt.s32.f32 %v1780
          %v1813 = vcvt.s32.f32 %v1781
          %v1814 = vcvt.s32.f32 %v1782
          %v1815 = vcvt.s32.f32 %v1783
          %v1816 = vcvt.s32.f32 %v1784
          %v1817 = vcvt.s32.f32 %v1785
          %v1818 = vcvt.s32.f32 %v1786
          %v1819 = vcvt.s32.f32 %v1787
          %v1820 = vcvt.s32.f32 %v1788
          %v1821 = vcvt.s32.f32 %v1789
          %v1822 = vcvt.s32.f32 %v1790
          %v1823 = vcvt.s32.f32 %v1791
          %v1824 = vcvt.s32.f32 %v1792
          %v1825 = vcvt.s32.f32 %v1793
          %v1826 = vcvt.s32.f32 %v1794
          %v1827 = vcvt.s32.f32 %v1795
          %v1828 = vcvt.s32.f32 %v1796
          %v1829 = vcvt.s32.f32 %v1797
          %v1830 = vcvt.s32.f32 %v1798
          %v1831 = vcvt.s32.f32 %v1799
          %v1832 = vcvt.s32.f32 %v1800
          %v1833 = vcvt.s32.f32 %v1801
          %v1834 = vcvt.s32.f32 %v1802
          %v1835 = vpack.c.bf16 %v1805, %v1803
          %v1836 = vpack.c.bf16 %v1806, %v1804
          %v1837 = vpack.c.bf16 %v1809, %v1807
          %v1838 = vpack.c.bf16 %v1810, %v1808
          %v1839 = vpack.c.bf16 %v1813, %v1811
          %v1840 = vpack.c.bf16 %v1814, %v1812
          %v1841 = vpack.c.bf16 %v1817, %v1815
          %v1842 = vpack.c.bf16 %v1818, %v1816
          %v1843 = vpack.c.bf16 %v1821, %v1819
          %v1844 = vpack.c.bf16 %v1822, %v1820
          %v1845 = vpack.c.bf16 %v1825, %v1823
          %v1846 = vpack.c.bf16 %v1826, %v1824
          %v1847 = vpack.c.bf16 %v1829, %v1827
          %v1848 = vpack.c.bf16 %v1830, %v1828
          %v1849 = vpack.c.bf16 %v1833, %v1831
          %v1850 = vpack.c.bf16 %v1834, %v1832
          %1851 = vmatpush.bf16.msra.mxu0 %v696
          %1852 = vmatpush.bf16.msra.mxu0 %v695
          %1853 = vmatpush.bf16.msra.mxu0 %v694
          %1854 = vmatpush.bf16.msra.mxu0 %v693
          %1855 = vmatpush.bf16.msra.mxu0 %v692
          %1856 = vmatpush.bf16.msra.mxu0 %v691
          %1857 = vmatpush.bf16.msra.mxu0 %v690
          %1858 = vmatpush.bf16.msra.mxu0 %v689
          %1859 = vmatmul.bf16.gmra.mxu0 %v1835
          %v1860 = vpop.f32.mrf.mxu0
          %v1861 = vadd.f32 0.0, %v1860
          %v1862 = vpop.f32.mrf.mxu0
          %v1863 = vadd.f32 0.0, %v1862
          %1864 = vmatmul.bf16.gmra.mxu0 %v1837
          %v1865 = vpop.f32.mrf.mxu0
          %v1866 = vadd.f32 0.0, %v1865
          %v1867 = vpop.f32.mrf.mxu0
          %v1868 = vadd.f32 0.0, %v1867
          %1869 = vmatmul.bf16.gmra.mxu0 %v1839
          %v1870 = vpop.f32.mrf.mxu0
          %v1871 = vadd.f32 0.0, %v1870
          %v1872 = vpop.f32.mrf.mxu0
          %v1873 = vadd.f32 0.0, %v1872
          %1874 = vmatmul.bf16.gmra.mxu0 %v1841
          %v1875 = vpop.f32.mrf.mxu0
          %v1876 = vadd.f32 0.0, %v1875
          %v1877 = vpop.f32.mrf.mxu0
          %v1878 = vadd.f32 0.0, %v1877
          %1879 = vmatmul.bf16.gmra.mxu0 %v1843
          %v1880 = vpop.f32.mrf.mxu0
          %v1881 = vadd.f32 0.0, %v1880
          %v1882 = vpop.f32.mrf.mxu0
          %v1883 = vadd.f32 0.0, %v1882
          %1884 = vmatmul.bf16.gmra.mxu0 %v1845
          %v1885 = vpop.f32.mrf.mxu0
          %v1886 = vadd.f32 0.0, %v1885
          %v1887 = vpop.f32.mrf.mxu0
          %v1888 = vadd.f32 0.0, %v1887
          %1889 = vmatmul.bf16.gmra.mxu0 %v1847
          %v1890 = vpop.f32.mrf.mxu0
          %v1891 = vadd.f32 0.0, %v1890
          %v1892 = vpop.f32.mrf.mxu0
          %v1893 = vadd.f32 0.0, %v1892
          %1894 = vmatmul.bf16.gmra.mxu0 %v1849
          %v1895 = vpop.f32.mrf.mxu0
          %v1896 = vadd.f32 0.0, %v1895
          %v1897 = vpop.f32.mrf.mxu0
          %v1898 = vadd.f32 0.0, %v1897
          %1899 = vdwg.mxu0
          %1900 = vmatpush.bf16.msra.mxu0 %v704
          %1901 = vmatpush.bf16.msra.mxu0 %v703
          %1902 = vmatpush.bf16.msra.mxu0 %v702
          %1903 = vmatpush.bf16.msra.mxu0 %v701
          %1904 = vmatpush.bf16.msra.mxu0 %v700
          %1905 = vmatpush.bf16.msra.mxu0 %v699
          %1906 = vmatpush.bf16.msra.mxu0 %v698
          %1907 = vmatpush.bf16.msra.mxu0 %v697
          %1908 = vmatmul.bf16.gmra.mxu0 %v1836
          %v1909 = vpop.f32.mrf.mxu0
          %v1910 = vadd.f32 %v1861, %v1909
          %v1911 = vpop.f32.mrf.mxu0
          %v1912 = vadd.f32 %v1863, %v1911
          %1913 = vmatmul.bf16.gmra.mxu0 %v1838
          %v1914 = vpop.f32.mrf.mxu0
          %v1915 = vadd.f32 %v1866, %v1914
          %v1916 = vpop.f32.mrf.mxu0
          %v1917 = vadd.f32 %v1868, %v1916
          %1918 = vmatmul.bf16.gmra.mxu0 %v1840
          %v1919 = vpop.f32.mrf.mxu0
          %v1920 = vadd.f32 %v1871, %v1919
          %v1921 = vpop.f32.mrf.mxu0
          %v1922 = vadd.f32 %v1873, %v1921
          %1923 = vmatmul.bf16.gmra.mxu0 %v1842
          %v1924 = vpop.f32.mrf.mxu0
          %v1925 = vadd.f32 %v1876, %v1924
          %v1926 = vpop.f32.mrf.mxu0
          %v1927 = vadd.f32 %v1878, %v1926
          %1928 = vmatmul.bf16.gmra.mxu0 %v1844
          %v1929 = vpop.f32.mrf.mxu0
          %v1930 = vadd.f32 %v1881, %v1929
          %v1931 = vpop.f32.mrf.mxu0
          %v1932 = vadd.f32 %v1883, %v1931
          %1933 = vmatmul.bf16.gmra.mxu0 %v1846
          %v1934 = vpop.f32.mrf.mxu0
          %v1935 = vadd.f32 %v1886, %v1934
          %v1936 = vpop.f32.mrf.mxu0
          %v1937 = vadd.f32 %v1888, %v1936
          %1938 = vmatmul.bf16.gmra.mxu0 %v1848
          %v1939 = vpop.f32.mrf.mxu0
          %v1940 = vadd.f32 %v1891, %v1939
          %v1941 = vpop.f32.mrf.mxu0
          %v1942 = vadd.f32 %v1893, %v1941
          %1943 = vmatmul.bf16.gmra.mxu0 %v1850
          %v1944 = vpop.f32.mrf.mxu0
          %v1945 = vadd.f32 %v1896, %v1944
          %v1946 = vpop.f32.mrf.mxu0
          %v1947 = vadd.f32 %v1898, %v1946
          %1948 = vdwg.mxu0
          %v1949 = vpack.c.bf16 %v1912, %v1910
          %v1950 = vpack.c.bf16 %v1917, %v1915
          %v1951 = vpack.c.bf16 %v1922, %v1920
          %v1952 = vpack.c.bf16 %v1927, %v1925
          %v1953 = vpack.c.bf16 %v1932, %v1930
          %v1954 = vpack.c.bf16 %v1937, %v1935
          %v1955 = vpack.c.bf16 %v1942, %v1940
          %v1956 = vpack.c.bf16 %v1947, %v1945
          %v1957 = vld [vmem:[%s2 + $0x60] sm:$0xf]
          %v1958 = vld [vmem:[%s2 + $0x64] sm:$0xf]
          %v1959 = vld [vmem:[%s2 + $0x68] sm:$0xf]
          %v1960 = vld [vmem:[%s2 + $0x6c] sm:$0xf]
          %v1961 = vld [vmem:[%s2 + $0x70] sm:$0xf]
          %v1962 = vld [vmem:[%s2 + $0x74] sm:$0xf]
          %v1963 = vld [vmem:[%s2 + $0x78] sm:$0xf]
          %v1964 = vld [vmem:[%s2 + $0x7c] sm:$0xf]
          %v1973 = vunpack.c.l.b16 %v1957
          %v1974 = vunpack.c.l.b16 %v1958
          %v1975 = vunpack.c.l.b16 %v1959
          %v1976 = vunpack.c.l.b16 %v1960
          %v1977 = vunpack.c.l.b16 %v1961
          %v1978 = vunpack.c.l.b16 %v1962
          %v1979 = vunpack.c.l.b16 %v1963
          %v1980 = vunpack.c.l.b16 %v1964
          %v1981 = vpack.c.b16 %v1974, %v1973
          %v1982 = vpack.c.b16 %v1976, %v1975
          %v1983 = vpack.c.b16 %v1978, %v1977
          %v1984 = vpack.c.b16 %v1980, %v1979
          %v1990 = vsel %vm1133, %v1949, 0
          %v1993 = vsel %vm1133, %v1950, 0
          %v1996 = vsel %vm1133, %v1951, 0
          %v1999 = vsel %vm1133, %v1952, 0
          %v2002 = vsel %vm1133, %v1953, 0
          %v2005 = vsel %vm1133, %v1954, 0
          %v2008 = vsel %vm1133, %v1955, 0
          %v2011 = vsel %vm1133, %v1956, 0
          %2013 = vmatpush.bf16.msra.mxu0 0
          %2014 = vmatpush.bf16.msra.mxu0 0
          %2015 = vmatpush.bf16.msra.mxu0 0
          %2016 = vmatpush.bf16.msra.mxu0 0
          %2017 = vmatpush.bf16.msra.mxu0 %v1984
          %2018 = vmatpush.bf16.msra.mxu0 %v1983
          %2019 = vmatpush.bf16.msra.mxu0 %v1982
          %2020 = vmatpush.bf16.msra.mxu0 %v1981
          %2021 = vmatmul.bf16.gmra.mxu0 %v1990
          %v2022 = vpop.f32.mrf.mxu0
          %v2023 = vadd.f32 0.0, %v2022
          %v2024 = vpop.f32.mrf.mxu0
          %v2025 = vadd.f32 0.0, %v2024
          %2026 = vmatmul.bf16.gmra.mxu0 %v1993
          %v2027 = vpop.f32.mrf.mxu0
          %v2028 = vadd.f32 0.0, %v2027
          %v2029 = vpop.f32.mrf.mxu0
          %v2030 = vadd.f32 0.0, %v2029
          %2031 = vmatmul.bf16.gmra.mxu0 %v1996
          %v2032 = vpop.f32.mrf.mxu0
          %v2033 = vadd.f32 0.0, %v2032
          %v2034 = vpop.f32.mrf.mxu0
          %v2035 = vadd.f32 0.0, %v2034
          %2036 = vmatmul.bf16.gmra.mxu0 %v1999
          %v2037 = vpop.f32.mrf.mxu0
          %v2038 = vadd.f32 0.0, %v2037
          %v2039 = vpop.f32.mrf.mxu0
          %v2040 = vadd.f32 0.0, %v2039
          %2041 = vmatmul.bf16.gmra.mxu0 %v2002
          %v2042 = vpop.f32.mrf.mxu0
          %v2043 = vadd.f32 0.0, %v2042
          %v2044 = vpop.f32.mrf.mxu0
          %v2045 = vadd.f32 0.0, %v2044
          %2046 = vmatmul.bf16.gmra.mxu0 %v2005
          %v2047 = vpop.f32.mrf.mxu0
          %v2048 = vadd.f32 0.0, %v2047
          %v2049 = vpop.f32.mrf.mxu0
          %v2050 = vadd.f32 0.0, %v2049
          %2051 = vmatmul.bf16.gmra.mxu0 %v2008
          %v2052 = vpop.f32.mrf.mxu0
          %v2053 = vadd.f32 0.0, %v2052
          %v2054 = vpop.f32.mrf.mxu0
          %v2055 = vadd.f32 0.0, %v2054
          %2056 = vmatmul.bf16.gmra.mxu0 %v2011
          %v2057 = vpop.f32.mrf.mxu0
          %v2058 = vadd.f32 0.0, %v2057
          %v2059 = vpop.f32.mrf.mxu0
          %v2060 = vadd.f32 0.0, %v2059
          %2061 = vdwg.mxu0
          %v2062 = vadd.f32 %v1675, %v2023
          %v2063 = vadd.f32 %v1676, %v2025
          %v2064 = vadd.f32 %v1677, %v2028
          %v2065 = vadd.f32 %v1678, %v2030
          %v2066 = vadd.f32 %v1679, %v2033
          %v2067 = vadd.f32 %v1680, %v2035
          %v2068 = vadd.f32 %v1681, %v2038
          %v2069 = vadd.f32 %v1682, %v2040
          %v2070 = vadd.f32 %v1683, %v2043
          %v2071 = vadd.f32 %v1684, %v2045
          %v2072 = vadd.f32 %v1685, %v2048
          %v2073 = vadd.f32 %v1686, %v2050
          %v2074 = vadd.f32 %v1687, %v2053
          %v2075 = vadd.f32 %v1688, %v2055
          %v2076 = vadd.f32 %v1689, %v2058
          %v2077 = vadd.f32 %v1690, %v2060
          %2078 = vset.pattern.permute.xlu0 4
          %2079 = vperm.xlu0 %2078, %v414
          %v2080 = vpop.permute.xlu0 %2079
          %2081 = vset.pattern.permute.xlu0 4
          %2082 = vperm.xlu0 %2081, %v415
          %v2083 = vpop.permute.xlu0 %2082
          %2084 = vset.pattern.permute.xlu0 4
          %2085 = vperm.xlu0 %2084, %v416
          %v2086 = vpop.permute.xlu0 %2085
          %2087 = vset.pattern.permute.xlu0 4
          %2088 = vperm.xlu0 %2087, %v417
          %v2089 = vpop.permute.xlu0 %2088
          %2090 = vset.pattern.permute.xlu0 4
          %2091 = vperm.xlu0 %2090, %v418
          %v2092 = vpop.permute.xlu0 %2091
          %2093 = vset.pattern.permute.xlu0 4
          %2094 = vperm.xlu0 %2093, %v419
          %v2095 = vpop.permute.xlu0 %2094
          %2096 = vset.pattern.permute.xlu0 4
          %2097 = vperm.xlu0 %2096, %v420
          %v2098 = vpop.permute.xlu0 %2097
          %2099 = vset.pattern.permute.xlu0 4
          %2100 = vperm.xlu0 %2099, %v421
          %v2101 = vpop.permute.xlu0 %2100
          %2102 = vset.pattern.permute.xlu0 4
          %2103 = vperm.xlu0 %2102, %v422
          %v2104 = vpop.permute.xlu0 %2103
          %2105 = vset.pattern.permute.xlu0 4
          %2106 = vperm.xlu0 %2105, %v423
          %v2107 = vpop.permute.xlu0 %2106
          %2108 = vset.pattern.permute.xlu0 4
          %2109 = vperm.xlu0 %2108, %v424
          %v2110 = vpop.permute.xlu0 %2109
          %2111 = vset.pattern.permute.xlu0 4
          %2112 = vperm.xlu0 %2111, %v425
          %v2113 = vpop.permute.xlu0 %2112
          %2114 = vset.pattern.permute.xlu0 4
          %2115 = vperm.xlu0 %2114, %v426
          %v2116 = vpop.permute.xlu0 %2115
          %2117 = vset.pattern.permute.xlu0 4
          %2118 = vperm.xlu0 %2117, %v427
          %v2119 = vpop.permute.xlu0 %2118
          %2120 = vset.pattern.permute.xlu0 4
          %2121 = vperm.xlu0 %2120, %v428
          %v2122 = vpop.permute.xlu0 %2121
          %2123 = vset.pattern.permute.xlu0 4
          %2124 = vperm.xlu0 %2123, %v429
          %v2125 = vpop.permute.xlu0 %2124
          %vm2126 = vcmp.eq.s32.totalorder %v2080, %v463
          %vm2127 = vcmp.eq.s32.totalorder %v2080, %v464
          %vm2128 = vcmp.eq.s32.totalorder %v2083, %v463
          %vm2129 = vcmp.eq.s32.totalorder %v2083, %v464
          %vm2130 = vcmp.eq.s32.totalorder %v2086, %v463
          %vm2131 = vcmp.eq.s32.totalorder %v2086, %v464
          %vm2132 = vcmp.eq.s32.totalorder %v2089, %v463
          %vm2133 = vcmp.eq.s32.totalorder %v2089, %v464
          %vm2134 = vcmp.eq.s32.totalorder %v2092, %v463
          %vm2135 = vcmp.eq.s32.totalorder %v2092, %v464
          %vm2136 = vcmp.eq.s32.totalorder %v2095, %v463
          %vm2137 = vcmp.eq.s32.totalorder %v2095, %v464
          %vm2138 = vcmp.eq.s32.totalorder %v2098, %v463
          %vm2139 = vcmp.eq.s32.totalorder %v2098, %v464
          %vm2140 = vcmp.eq.s32.totalorder %v2101, %v463
          %vm2141 = vcmp.eq.s32.totalorder %v2101, %v464
          %vm2142 = vcmp.eq.s32.totalorder %v2104, %v463
          %vm2143 = vcmp.eq.s32.totalorder %v2104, %v464
          %vm2144 = vcmp.eq.s32.totalorder %v2107, %v463
          %vm2145 = vcmp.eq.s32.totalorder %v2107, %v464
          %vm2146 = vcmp.eq.s32.totalorder %v2110, %v463
          %vm2147 = vcmp.eq.s32.totalorder %v2110, %v464
          %vm2148 = vcmp.eq.s32.totalorder %v2113, %v463
          %vm2149 = vcmp.eq.s32.totalorder %v2113, %v464
          %vm2150 = vcmp.eq.s32.totalorder %v2116, %v463
          %vm2151 = vcmp.eq.s32.totalorder %v2116, %v464
          %vm2152 = vcmp.eq.s32.totalorder %v2119, %v463
          %vm2153 = vcmp.eq.s32.totalorder %v2119, %v464
          %vm2154 = vcmp.eq.s32.totalorder %v2122, %v463
          %vm2155 = vcmp.eq.s32.totalorder %v2122, %v464
          %vm2156 = vcmp.eq.s32.totalorder %v2125, %v463
          %vm2157 = vcmp.eq.s32.totalorder %v2125, %v464
          %v2158 = vsel %vm2126, 1, 0
          %v2159 = vsel %vm2127, 1, 0
          %v2160 = vsel %vm2128, 1, 0
          %v2161 = vsel %vm2129, 1, 0
          %v2162 = vsel %vm2130, 1, 0
          %v2163 = vsel %vm2131, 1, 0
          %v2164 = vsel %vm2132, 1, 0
          %v2165 = vsel %vm2133, 1, 0
          %v2166 = vsel %vm2134, 1, 0
          %v2167 = vsel %vm2135, 1, 0
          %v2168 = vsel %vm2136, 1, 0
          %v2169 = vsel %vm2137, 1, 0
          %v2170 = vsel %vm2138, 1, 0
          %v2171 = vsel %vm2139, 1, 0
          %v2172 = vsel %vm2140, 1, 0
          %v2173 = vsel %vm2141, 1, 0
          %v2174 = vsel %vm2142, 1, 0
          %v2175 = vsel %vm2143, 1, 0
          %v2176 = vsel %vm2144, 1, 0
          %v2177 = vsel %vm2145, 1, 0
          %v2178 = vsel %vm2146, 1, 0
          %v2179 = vsel %vm2147, 1, 0
          %v2180 = vsel %vm2148, 1, 0
          %v2181 = vsel %vm2149, 1, 0
          %v2182 = vsel %vm2150, 1, 0
          %v2183 = vsel %vm2151, 1, 0
          %v2184 = vsel %vm2152, 1, 0
          %v2185 = vsel %vm2153, 1, 0
          %v2186 = vsel %vm2154, 1, 0
          %v2187 = vsel %vm2155, 1, 0
          %v2188 = vsel %vm2156, 1, 0
          %v2189 = vsel %vm2157, 1, 0
          %v2190 = vcvt.s32.f32 %v2158
          %v2191 = vcvt.s32.f32 %v2159
          %v2192 = vcvt.s32.f32 %v2160
          %v2193 = vcvt.s32.f32 %v2161
          %v2194 = vcvt.s32.f32 %v2162
          %v2195 = vcvt.s32.f32 %v2163
          %v2196 = vcvt.s32.f32 %v2164
          %v2197 = vcvt.s32.f32 %v2165
          %v2198 = vcvt.s32.f32 %v2166
          %v2199 = vcvt.s32.f32 %v2167
          %v2200 = vcvt.s32.f32 %v2168
          %v2201 = vcvt.s32.f32 %v2169
          %v2202 = vcvt.s32.f32 %v2170
          %v2203 = vcvt.s32.f32 %v2171
          %v2204 = vcvt.s32.f32 %v2172
          %v2205 = vcvt.s32.f32 %v2173
          %v2206 = vcvt.s32.f32 %v2174
          %v2207 = vcvt.s32.f32 %v2175
          %v2208 = vcvt.s32.f32 %v2176
          %v2209 = vcvt.s32.f32 %v2177
          %v2210 = vcvt.s32.f32 %v2178
          %v2211 = vcvt.s32.f32 %v2179
          %v2212 = vcvt.s32.f32 %v2180
          %v2213 = vcvt.s32.f32 %v2181
          %v2214 = vcvt.s32.f32 %v2182
          %v2215 = vcvt.s32.f32 %v2183
          %v2216 = vcvt.s32.f32 %v2184
          %v2217 = vcvt.s32.f32 %v2185
          %v2218 = vcvt.s32.f32 %v2186
          %v2219 = vcvt.s32.f32 %v2187
          %v2220 = vcvt.s32.f32 %v2188
          %v2221 = vcvt.s32.f32 %v2189
          %v2222 = vpack.c.bf16 %v2192, %v2190
          %v2223 = vpack.c.bf16 %v2193, %v2191
          %v2224 = vpack.c.bf16 %v2196, %v2194
          %v2225 = vpack.c.bf16 %v2197, %v2195
          %v2226 = vpack.c.bf16 %v2200, %v2198
          %v2227 = vpack.c.bf16 %v2201, %v2199
          %v2228 = vpack.c.bf16 %v2204, %v2202
          %v2229 = vpack.c.bf16 %v2205, %v2203
          %v2230 = vpack.c.bf16 %v2208, %v2206
          %v2231 = vpack.c.bf16 %v2209, %v2207
          %v2232 = vpack.c.bf16 %v2212, %v2210
          %v2233 = vpack.c.bf16 %v2213, %v2211
          %v2234 = vpack.c.bf16 %v2216, %v2214
          %v2235 = vpack.c.bf16 %v2217, %v2215
          %v2236 = vpack.c.bf16 %v2220, %v2218
          %v2237 = vpack.c.bf16 %v2221, %v2219
          %2238 = vmatpush.bf16.msra.mxu0 %v696
          %2239 = vmatpush.bf16.msra.mxu0 %v695
          %2240 = vmatpush.bf16.msra.mxu0 %v694
          %2241 = vmatpush.bf16.msra.mxu0 %v693
          %2242 = vmatpush.bf16.msra.mxu0 %v692
          %2243 = vmatpush.bf16.msra.mxu0 %v691
          %2244 = vmatpush.bf16.msra.mxu0 %v690
          %2245 = vmatpush.bf16.msra.mxu0 %v689
          %2246 = vmatmul.bf16.gmra.mxu0 %v2222
          %v2247 = vpop.f32.mrf.mxu0
          %v2248 = vadd.f32 0.0, %v2247
          %v2249 = vpop.f32.mrf.mxu0
          %v2250 = vadd.f32 0.0, %v2249
          %2251 = vmatmul.bf16.gmra.mxu0 %v2224
          %v2252 = vpop.f32.mrf.mxu0
          %v2253 = vadd.f32 0.0, %v2252
          %v2254 = vpop.f32.mrf.mxu0
          %v2255 = vadd.f32 0.0, %v2254
          %2256 = vmatmul.bf16.gmra.mxu0 %v2226
          %v2257 = vpop.f32.mrf.mxu0
          %v2258 = vadd.f32 0.0, %v2257
          %v2259 = vpop.f32.mrf.mxu0
          %v2260 = vadd.f32 0.0, %v2259
          %2261 = vmatmul.bf16.gmra.mxu0 %v2228
          %v2262 = vpop.f32.mrf.mxu0
          %v2263 = vadd.f32 0.0, %v2262
          %v2264 = vpop.f32.mrf.mxu0
          %v2265 = vadd.f32 0.0, %v2264
          %2266 = vmatmul.bf16.gmra.mxu0 %v2230
          %v2267 = vpop.f32.mrf.mxu0
          %v2268 = vadd.f32 0.0, %v2267
          %v2269 = vpop.f32.mrf.mxu0
          %v2270 = vadd.f32 0.0, %v2269
          %2271 = vmatmul.bf16.gmra.mxu0 %v2232
          %v2272 = vpop.f32.mrf.mxu0
          %v2273 = vadd.f32 0.0, %v2272
          %v2274 = vpop.f32.mrf.mxu0
          %v2275 = vadd.f32 0.0, %v2274
          %2276 = vmatmul.bf16.gmra.mxu0 %v2234
          %v2277 = vpop.f32.mrf.mxu0
          %v2278 = vadd.f32 0.0, %v2277
          %v2279 = vpop.f32.mrf.mxu0
          %v2280 = vadd.f32 0.0, %v2279
          %2281 = vmatmul.bf16.gmra.mxu0 %v2236
          %v2282 = vpop.f32.mrf.mxu0
          %v2283 = vadd.f32 0.0, %v2282
          %v2284 = vpop.f32.mrf.mxu0
          %v2285 = vadd.f32 0.0, %v2284
          %2286 = vdwg.mxu0
          %2287 = vmatpush.bf16.msra.mxu0 %v704
          %2288 = vmatpush.bf16.msra.mxu0 %v703
          %2289 = vmatpush.bf16.msra.mxu0 %v702
          %2290 = vmatpush.bf16.msra.mxu0 %v701
          %2291 = vmatpush.bf16.msra.mxu0 %v700
          %2292 = vmatpush.bf16.msra.mxu0 %v699
          %2293 = vmatpush.bf16.msra.mxu0 %v698
          %2294 = vmatpush.bf16.msra.mxu0 %v697
          %2295 = vmatmul.bf16.gmra.mxu0 %v2223
          %v2296 = vpop.f32.mrf.mxu0
          %v2297 = vadd.f32 %v2248, %v2296
          %v2298 = vpop.f32.mrf.mxu0
          %v2299 = vadd.f32 %v2250, %v2298
          %2300 = vmatmul.bf16.gmra.mxu0 %v2225
          %v2301 = vpop.f32.mrf.mxu0
          %v2302 = vadd.f32 %v2253, %v2301
          %v2303 = vpop.f32.mrf.mxu0
          %v2304 = vadd.f32 %v2255, %v2303
          %2305 = vmatmul.bf16.gmra.mxu0 %v2227
          %v2306 = vpop.f32.mrf.mxu0
          %v2307 = vadd.f32 %v2258, %v2306
          %v2308 = vpop.f32.mrf.mxu0
          %v2309 = vadd.f32 %v2260, %v2308
          %2310 = vmatmul.bf16.gmra.mxu0 %v2229
          %v2311 = vpop.f32.mrf.mxu0
          %v2312 = vadd.f32 %v2263, %v2311
          %v2313 = vpop.f32.mrf.mxu0
          %v2314 = vadd.f32 %v2265, %v2313
          %2315 = vmatmul.bf16.gmra.mxu0 %v2231
          %v2316 = vpop.f32.mrf.mxu0
          %v2317 = vadd.f32 %v2268, %v2316
          %v2318 = vpop.f32.mrf.mxu0
          %v2319 = vadd.f32 %v2270, %v2318
          %2320 = vmatmul.bf16.gmra.mxu0 %v2233
          %v2321 = vpop.f32.mrf.mxu0
          %v2322 = vadd.f32 %v2273, %v2321
          %v2323 = vpop.f32.mrf.mxu0
          %v2324 = vadd.f32 %v2275, %v2323
          %2325 = vmatmul.bf16.gmra.mxu0 %v2235
          %v2326 = vpop.f32.mrf.mxu0
          %v2327 = vadd.f32 %v2278, %v2326
          %v2328 = vpop.f32.mrf.mxu0
          %v2329 = vadd.f32 %v2280, %v2328
          %2330 = vmatmul.bf16.gmra.mxu0 %v2237
          %v2331 = vpop.f32.mrf.mxu0
          %v2332 = vadd.f32 %v2283, %v2331
          %v2333 = vpop.f32.mrf.mxu0
          %v2334 = vadd.f32 %v2285, %v2333
          %2335 = vdwg.mxu0
          %v2336 = vpack.c.bf16 %v2299, %v2297
          %v2337 = vpack.c.bf16 %v2304, %v2302
          %v2338 = vpack.c.bf16 %v2309, %v2307
          %v2339 = vpack.c.bf16 %v2314, %v2312
          %v2340 = vpack.c.bf16 %v2319, %v2317
          %v2341 = vpack.c.bf16 %v2324, %v2322
          %v2342 = vpack.c.bf16 %v2329, %v2327
          %v2343 = vpack.c.bf16 %v2334, %v2332
          %v2344 = vld [vmem:[%s2 + $0x80] sm:$0xf]
          %v2345 = vld [vmem:[%s2 + $0x84] sm:$0xf]
          %v2346 = vld [vmem:[%s2 + $0x88] sm:$0xf]
          %v2347 = vld [vmem:[%s2 + $0x8c] sm:$0xf]
          %v2348 = vld [vmem:[%s2 + $0x90] sm:$0xf]
          %v2349 = vld [vmem:[%s2 + $0x94] sm:$0xf]
          %v2350 = vld [vmem:[%s2 + $0x98] sm:$0xf]
          %v2351 = vld [vmem:[%s2 + $0x9c] sm:$0xf]
          %v2360 = vunpack.c.l.b16 %v2344
          %v2361 = vunpack.c.l.b16 %v2345
          %v2362 = vunpack.c.l.b16 %v2346
          %v2363 = vunpack.c.l.b16 %v2347
          %v2364 = vunpack.c.l.b16 %v2348
          %v2365 = vunpack.c.l.b16 %v2349
          %v2366 = vunpack.c.l.b16 %v2350
          %v2367 = vunpack.c.l.b16 %v2351
          %v2368 = vpack.c.b16 %v2361, %v2360
          %v2369 = vpack.c.b16 %v2363, %v2362
          %v2370 = vpack.c.b16 %v2365, %v2364
          %v2371 = vpack.c.b16 %v2367, %v2366
          %v2377 = vsel %vm1133, %v2336, 0
          %v2380 = vsel %vm1133, %v2337, 0
          %v2383 = vsel %vm1133, %v2338, 0
          %v2386 = vsel %vm1133, %v2339, 0
          %v2389 = vsel %vm1133, %v2340, 0
          %v2392 = vsel %vm1133, %v2341, 0
          %v2395 = vsel %vm1133, %v2342, 0
          %v2398 = vsel %vm1133, %v2343, 0
          %2400 = vmatpush.bf16.msra.mxu0 0
          %2401 = vmatpush.bf16.msra.mxu0 0
          %2402 = vmatpush.bf16.msra.mxu0 0
          %2403 = vmatpush.bf16.msra.mxu0 0
          %2404 = vmatpush.bf16.msra.mxu0 %v2371
          %2405 = vmatpush.bf16.msra.mxu0 %v2370
          %2406 = vmatpush.bf16.msra.mxu0 %v2369
          %2407 = vmatpush.bf16.msra.mxu0 %v2368
          %2408 = vmatmul.bf16.gmra.mxu0 %v2377
          %v2409 = vpop.f32.mrf.mxu0
          %v2410 = vadd.f32 0.0, %v2409
          %v2411 = vpop.f32.mrf.mxu0
          %v2412 = vadd.f32 0.0, %v2411
          %2413 = vmatmul.bf16.gmra.mxu0 %v2380
          %v2414 = vpop.f32.mrf.mxu0
          %v2415 = vadd.f32 0.0, %v2414
          %v2416 = vpop.f32.mrf.mxu0
          %v2417 = vadd.f32 0.0, %v2416
          %2418 = vmatmul.bf16.gmra.mxu0 %v2383
          %v2419 = vpop.f32.mrf.mxu0
          %v2420 = vadd.f32 0.0, %v2419
          %v2421 = vpop.f32.mrf.mxu0
          %v2422 = vadd.f32 0.0, %v2421
          %2423 = vmatmul.bf16.gmra.mxu0 %v2386
          %v2424 = vpop.f32.mrf.mxu0
          %v2425 = vadd.f32 0.0, %v2424
          %v2426 = vpop.f32.mrf.mxu0
          %v2427 = vadd.f32 0.0, %v2426
          %2428 = vmatmul.bf16.gmra.mxu0 %v2389
          %v2429 = vpop.f32.mrf.mxu0
          %v2430 = vadd.f32 0.0, %v2429
          %v2431 = vpop.f32.mrf.mxu0
          %v2432 = vadd.f32 0.0, %v2431
          %2433 = vmatmul.bf16.gmra.mxu0 %v2392
          %v2434 = vpop.f32.mrf.mxu0
          %v2435 = vadd.f32 0.0, %v2434
          %v2436 = vpop.f32.mrf.mxu0
          %v2437 = vadd.f32 0.0, %v2436
          %2438 = vmatmul.bf16.gmra.mxu0 %v2395
          %v2439 = vpop.f32.mrf.mxu0
          %v2440 = vadd.f32 0.0, %v2439
          %v2441 = vpop.f32.mrf.mxu0
          %v2442 = vadd.f32 0.0, %v2441
          %2443 = vmatmul.bf16.gmra.mxu0 %v2398
          %v2444 = vpop.f32.mrf.mxu0
          %v2445 = vadd.f32 0.0, %v2444
          %v2446 = vpop.f32.mrf.mxu0
          %v2447 = vadd.f32 0.0, %v2446
          %2448 = vdwg.mxu0
          %v2449 = vadd.f32 %v2062, %v2410
          %v2450 = vadd.f32 %v2063, %v2412
          %v2451 = vadd.f32 %v2064, %v2415
          %v2452 = vadd.f32 %v2065, %v2417
          %v2453 = vadd.f32 %v2066, %v2420
          %v2454 = vadd.f32 %v2067, %v2422
          %v2455 = vadd.f32 %v2068, %v2425
          %v2456 = vadd.f32 %v2069, %v2427
          %v2457 = vadd.f32 %v2070, %v2430
          %v2458 = vadd.f32 %v2071, %v2432
          %v2459 = vadd.f32 %v2072, %v2435
          %v2460 = vadd.f32 %v2073, %v2437
          %v2461 = vadd.f32 %v2074, %v2440
          %v2462 = vadd.f32 %v2075, %v2442
          %v2463 = vadd.f32 %v2076, %v2445
          %v2464 = vadd.f32 %v2077, %v2447
          %2465 = vset.pattern.permute.xlu0 5
          %2466 = vperm.xlu0 %2465, %v414
          %v2467 = vpop.permute.xlu0 %2466
          %2468 = vset.pattern.permute.xlu0 5
          %2469 = vperm.xlu0 %2468, %v415
          %v2470 = vpop.permute.xlu0 %2469
          %2471 = vset.pattern.permute.xlu0 5
          %2472 = vperm.xlu0 %2471, %v416
          %v2473 = vpop.permute.xlu0 %2472
          %2474 = vset.pattern.permute.xlu0 5
          %2475 = vperm.xlu0 %2474, %v417
          %v2476 = vpop.permute.xlu0 %2475
          %2477 = vset.pattern.permute.xlu0 5
          %2478 = vperm.xlu0 %2477, %v418
          %v2479 = vpop.permute.xlu0 %2478
          %2480 = vset.pattern.permute.xlu0 5
          %2481 = vperm.xlu0 %2480, %v419
          %v2482 = vpop.permute.xlu0 %2481
          %2483 = vset.pattern.permute.xlu0 5
          %2484 = vperm.xlu0 %2483, %v420
          %v2485 = vpop.permute.xlu0 %2484
          %2486 = vset.pattern.permute.xlu0 5
          %2487 = vperm.xlu0 %2486, %v421
          %v2488 = vpop.permute.xlu0 %2487
          %2489 = vset.pattern.permute.xlu0 5
          %2490 = vperm.xlu0 %2489, %v422
          %v2491 = vpop.permute.xlu0 %2490
          %2492 = vset.pattern.permute.xlu0 5
          %2493 = vperm.xlu0 %2492, %v423
          %v2494 = vpop.permute.xlu0 %2493
          %2495 = vset.pattern.permute.xlu0 5
          %2496 = vperm.xlu0 %2495, %v424
          %v2497 = vpop.permute.xlu0 %2496
          %2498 = vset.pattern.permute.xlu0 5
          %2499 = vperm.xlu0 %2498, %v425
          %v2500 = vpop.permute.xlu0 %2499
          %2501 = vset.pattern.permute.xlu0 5
          %2502 = vperm.xlu0 %2501, %v426
          %v2503 = vpop.permute.xlu0 %2502
          %2504 = vset.pattern.permute.xlu0 5
          %2505 = vperm.xlu0 %2504, %v427
          %v2506 = vpop.permute.xlu0 %2505
          %2507 = vset.pattern.permute.xlu0 5
          %2508 = vperm.xlu0 %2507, %v428
          %v2509 = vpop.permute.xlu0 %2508
          %2510 = vset.pattern.permute.xlu0 5
          %2511 = vperm.xlu0 %2510, %v429
          %v2512 = vpop.permute.xlu0 %2511
          %vm2513 = vcmp.eq.s32.totalorder %v2467, %v463
          %vm2514 = vcmp.eq.s32.totalorder %v2467, %v464
          %vm2515 = vcmp.eq.s32.totalorder %v2470, %v463
          %vm2516 = vcmp.eq.s32.totalorder %v2470, %v464
          %vm2517 = vcmp.eq.s32.totalorder %v2473, %v463
          %vm2518 = vcmp.eq.s32.totalorder %v2473, %v464
          %vm2519 = vcmp.eq.s32.totalorder %v2476, %v463
          %vm2520 = vcmp.eq.s32.totalorder %v2476, %v464
          %vm2521 = vcmp.eq.s32.totalorder %v2479, %v463
          %vm2522 = vcmp.eq.s32.totalorder %v2479, %v464
          %vm2523 = vcmp.eq.s32.totalorder %v2482, %v463
          %vm2524 = vcmp.eq.s32.totalorder %v2482, %v464
          %vm2525 = vcmp.eq.s32.totalorder %v2485, %v463
          %vm2526 = vcmp.eq.s32.totalorder %v2485, %v464
          %vm2527 = vcmp.eq.s32.totalorder %v2488, %v463
          %vm2528 = vcmp.eq.s32.totalorder %v2488, %v464
          %vm2529 = vcmp.eq.s32.totalorder %v2491, %v463
          %vm2530 = vcmp.eq.s32.totalorder %v2491, %v464
          %vm2531 = vcmp.eq.s32.totalorder %v2494, %v463
          %vm2532 = vcmp.eq.s32.totalorder %v2494, %v464
          %vm2533 = vcmp.eq.s32.totalorder %v2497, %v463
          %vm2534 = vcmp.eq.s32.totalorder %v2497, %v464
          %vm2535 = vcmp.eq.s32.totalorder %v2500, %v463
          %vm2536 = vcmp.eq.s32.totalorder %v2500, %v464
          %vm2537 = vcmp.eq.s32.totalorder %v2503, %v463
          %vm2538 = vcmp.eq.s32.totalorder %v2503, %v464
          %vm2539 = vcmp.eq.s32.totalorder %v2506, %v463
          %vm2540 = vcmp.eq.s32.totalorder %v2506, %v464
          %vm2541 = vcmp.eq.s32.totalorder %v2509, %v463
          %vm2542 = vcmp.eq.s32.totalorder %v2509, %v464
          %vm2543 = vcmp.eq.s32.totalorder %v2512, %v463
          %vm2544 = vcmp.eq.s32.totalorder %v2512, %v464
          %v2545 = vsel %vm2513, 1, 0
          %v2546 = vsel %vm2514, 1, 0
          %v2547 = vsel %vm2515, 1, 0
          %v2548 = vsel %vm2516, 1, 0
          %v2549 = vsel %vm2517, 1, 0
          %v2550 = vsel %vm2518, 1, 0
          %v2551 = vsel %vm2519, 1, 0
          %v2552 = vsel %vm2520, 1, 0
          %v2553 = vsel %vm2521, 1, 0
          %v2554 = vsel %vm2522, 1, 0
          %v2555 = vsel %vm2523, 1, 0
          %v2556 = vsel %vm2524, 1, 0
          %v2557 = vsel %vm2525, 1, 0
          %v2558 = vsel %vm2526, 1, 0
          %v2559 = vsel %vm2527, 1, 0
          %v2560 = vsel %vm2528, 1, 0
          %v2561 = vsel %vm2529, 1, 0
          %v2562 = vsel %vm2530, 1, 0
          %v2563 = vsel %vm2531, 1, 0
          %v2564 = vsel %vm2532, 1, 0
          %v2565 = vsel %vm2533, 1, 0
          %v2566 = vsel %vm2534, 1, 0
          %v2567 = vsel %vm2535, 1, 0
          %v2568 = vsel %vm2536, 1, 0
          %v2569 = vsel %vm2537, 1, 0
          %v2570 = vsel %vm2538, 1, 0
          %v2571 = vsel %vm2539, 1, 0
          %v2572 = vsel %vm2540, 1, 0
          %v2573 = vsel %vm2541, 1, 0
          %v2574 = vsel %vm2542, 1, 0
          %v2575 = vsel %vm2543, 1, 0
          %v2576 = vsel %vm2544, 1, 0
          %v2577 = vcvt.s32.f32 %v2545
          %v2578 = vcvt.s32.f32 %v2546
          %v2579 = vcvt.s32.f32 %v2547
          %v2580 = vcvt.s32.f32 %v2548
          %v2581 = vcvt.s32.f32 %v2549
          %v2582 = vcvt.s32.f32 %v2550
          %v2583 = vcvt.s32.f32 %v2551
          %v2584 = vcvt.s32.f32 %v2552
          %v2585 = vcvt.s32.f32 %v2553
          %v2586 = vcvt.s32.f32 %v2554
          %v2587 = vcvt.s32.f32 %v2555
          %v2588 = vcvt.s32.f32 %v2556
          %v2589 = vcvt.s32.f32 %v2557
          %v2590 = vcvt.s32.f32 %v2558
          %v2591 = vcvt.s32.f32 %v2559
          %v2592 = vcvt.s32.f32 %v2560
          %v2593 = vcvt.s32.f32 %v2561
          %v2594 = vcvt.s32.f32 %v2562
          %v2595 = vcvt.s32.f32 %v2563
          %v2596 = vcvt.s32.f32 %v2564
          %v2597 = vcvt.s32.f32 %v2565
          %v2598 = vcvt.s32.f32 %v2566
          %v2599 = vcvt.s32.f32 %v2567
          %v2600 = vcvt.s32.f32 %v2568
          %v2601 = vcvt.s32.f32 %v2569
          %v2602 = vcvt.s32.f32 %v2570
          %v2603 = vcvt.s32.f32 %v2571
          %v2604 = vcvt.s32.f32 %v2572
          %v2605 = vcvt.s32.f32 %v2573
          %v2606 = vcvt.s32.f32 %v2574
          %v2607 = vcvt.s32.f32 %v2575
          %v2608 = vcvt.s32.f32 %v2576
          %v2609 = vpack.c.bf16 %v2579, %v2577
          %v2610 = vpack.c.bf16 %v2580, %v2578
          %v2611 = vpack.c.bf16 %v2583, %v2581
          %v2612 = vpack.c.bf16 %v2584, %v2582
          %v2613 = vpack.c.bf16 %v2587, %v2585
          %v2614 = vpack.c.bf16 %v2588, %v2586
          %v2615 = vpack.c.bf16 %v2591, %v2589
          %v2616 = vpack.c.bf16 %v2592, %v2590
          %v2617 = vpack.c.bf16 %v2595, %v2593
          %v2618 = vpack.c.bf16 %v2596, %v2594
          %v2619 = vpack.c.bf16 %v2599, %v2597
          %v2620 = vpack.c.bf16 %v2600, %v2598
          %v2621 = vpack.c.bf16 %v2603, %v2601
          %v2622 = vpack.c.bf16 %v2604, %v2602
          %v2623 = vpack.c.bf16 %v2607, %v2605
          %v2624 = vpack.c.bf16 %v2608, %v2606
          %2625 = vmatpush.bf16.msra.mxu0 %v696
          %2626 = vmatpush.bf16.msra.mxu0 %v695
          %2627 = vmatpush.bf16.msra.mxu0 %v694
          %2628 = vmatpush.bf16.msra.mxu0 %v693
          %2629 = vmatpush.bf16.msra.mxu0 %v692
          %2630 = vmatpush.bf16.msra.mxu0 %v691
          %2631 = vmatpush.bf16.msra.mxu0 %v690
          %2632 = vmatpush.bf16.msra.mxu0 %v689
          %2633 = vmatmul.bf16.gmra.mxu0 %v2609
          %v2634 = vpop.f32.mrf.mxu0
          %v2635 = vadd.f32 0.0, %v2634
          %v2636 = vpop.f32.mrf.mxu0
          %v2637 = vadd.f32 0.0, %v2636
          %2638 = vmatmul.bf16.gmra.mxu0 %v2611
          %v2639 = vpop.f32.mrf.mxu0
          %v2640 = vadd.f32 0.0, %v2639
          %v2641 = vpop.f32.mrf.mxu0
          %v2642 = vadd.f32 0.0, %v2641
          %2643 = vmatmul.bf16.gmra.mxu0 %v2613
          %v2644 = vpop.f32.mrf.mxu0
          %v2645 = vadd.f32 0.0, %v2644
          %v2646 = vpop.f32.mrf.mxu0
          %v2647 = vadd.f32 0.0, %v2646
          %2648 = vmatmul.bf16.gmra.mxu0 %v2615
          %v2649 = vpop.f32.mrf.mxu0
          %v2650 = vadd.f32 0.0, %v2649
          %v2651 = vpop.f32.mrf.mxu0
          %v2652 = vadd.f32 0.0, %v2651
          %2653 = vmatmul.bf16.gmra.mxu0 %v2617
          %v2654 = vpop.f32.mrf.mxu0
          %v2655 = vadd.f32 0.0, %v2654
          %v2656 = vpop.f32.mrf.mxu0
          %v2657 = vadd.f32 0.0, %v2656
          %2658 = vmatmul.bf16.gmra.mxu0 %v2619
          %v2659 = vpop.f32.mrf.mxu0
          %v2660 = vadd.f32 0.0, %v2659
          %v2661 = vpop.f32.mrf.mxu0
          %v2662 = vadd.f32 0.0, %v2661
          %2663 = vmatmul.bf16.gmra.mxu0 %v2621
          %v2664 = vpop.f32.mrf.mxu0
          %v2665 = vadd.f32 0.0, %v2664
          %v2666 = vpop.f32.mrf.mxu0
          %v2667 = vadd.f32 0.0, %v2666
          %2668 = vmatmul.bf16.gmra.mxu0 %v2623
          %v2669 = vpop.f32.mrf.mxu0
          %v2670 = vadd.f32 0.0, %v2669
          %v2671 = vpop.f32.mrf.mxu0
          %v2672 = vadd.f32 0.0, %v2671
          %2673 = vdwg.mxu0
          %2674 = vmatpush.bf16.msra.mxu0 %v704
          %2675 = vmatpush.bf16.msra.mxu0 %v703
          %2676 = vmatpush.bf16.msra.mxu0 %v702
          %2677 = vmatpush.bf16.msra.mxu0 %v701
          %2678 = vmatpush.bf16.msra.mxu0 %v700
          %2679 = vmatpush.bf16.msra.mxu0 %v699
          %2680 = vmatpush.bf16.msra.mxu0 %v698
          %2681 = vmatpush.bf16.msra.mxu0 %v697
          %2682 = vmatmul.bf16.gmra.mxu0 %v2610
          %v2683 = vpop.f32.mrf.mxu0
          %v2684 = vadd.f32 %v2635, %v2683
          %v2685 = vpop.f32.mrf.mxu0
          %v2686 = vadd.f32 %v2637, %v2685
          %2687 = vmatmul.bf16.gmra.mxu0 %v2612
          %v2688 = vpop.f32.mrf.mxu0
          %v2689 = vadd.f32 %v2640, %v2688
          %v2690 = vpop.f32.mrf.mxu0
          %v2691 = vadd.f32 %v2642, %v2690
          %2692 = vmatmul.bf16.gmra.mxu0 %v2614
          %v2693 = vpop.f32.mrf.mxu0
          %v2694 = vadd.f32 %v2645, %v2693
          %v2695 = vpop.f32.mrf.mxu0
          %v2696 = vadd.f32 %v2647, %v2695
          %2697 = vmatmul.bf16.gmra.mxu0 %v2616
          %v2698 = vpop.f32.mrf.mxu0
          %v2699 = vadd.f32 %v2650, %v2698
          %v2700 = vpop.f32.mrf.mxu0
          %v2701 = vadd.f32 %v2652, %v2700
          %2702 = vmatmul.bf16.gmra.mxu0 %v2618
          %v2703 = vpop.f32.mrf.mxu0
          %v2704 = vadd.f32 %v2655, %v2703
          %v2705 = vpop.f32.mrf.mxu0
          %v2706 = vadd.f32 %v2657, %v2705
          %2707 = vmatmul.bf16.gmra.mxu0 %v2620
          %v2708 = vpop.f32.mrf.mxu0
          %v2709 = vadd.f32 %v2660, %v2708
          %v2710 = vpop.f32.mrf.mxu0
          %v2711 = vadd.f32 %v2662, %v2710
          %2712 = vmatmul.bf16.gmra.mxu0 %v2622
          %v2713 = vpop.f32.mrf.mxu0
          %v2714 = vadd.f32 %v2665, %v2713
          %v2715 = vpop.f32.mrf.mxu0
          %v2716 = vadd.f32 %v2667, %v2715
          %2717 = vmatmul.bf16.gmra.mxu0 %v2624
          %v2718 = vpop.f32.mrf.mxu0
          %v2719 = vadd.f32 %v2670, %v2718
          %v2720 = vpop.f32.mrf.mxu0
          %v2721 = vadd.f32 %v2672, %v2720
          %2722 = vdwg.mxu0
          %v2723 = vpack.c.bf16 %v2686, %v2684
          %v2724 = vpack.c.bf16 %v2691, %v2689
          %v2725 = vpack.c.bf16 %v2696, %v2694
          %v2726 = vpack.c.bf16 %v2701, %v2699
          %v2727 = vpack.c.bf16 %v2706, %v2704
          %v2728 = vpack.c.bf16 %v2711, %v2709
          %v2729 = vpack.c.bf16 %v2716, %v2714
          %v2730 = vpack.c.bf16 %v2721, %v2719
          %v2731 = vld [vmem:[%s2 + $0xa0] sm:$0xf]
          %v2732 = vld [vmem:[%s2 + $0xa4] sm:$0xf]
          %v2733 = vld [vmem:[%s2 + $0xa8] sm:$0xf]
          %v2734 = vld [vmem:[%s2 + $0xac] sm:$0xf]
          %v2735 = vld [vmem:[%s2 + $0xb0] sm:$0xf]
          %v2736 = vld [vmem:[%s2 + $0xb4] sm:$0xf]
          %v2737 = vld [vmem:[%s2 + $0xb8] sm:$0xf]
          %v2738 = vld [vmem:[%s2 + $0xbc] sm:$0xf]
          %v2747 = vunpack.c.l.b16 %v2731
          %v2748 = vunpack.c.l.b16 %v2732
          %v2749 = vunpack.c.l.b16 %v2733
          %v2750 = vunpack.c.l.b16 %v2734
          %v2751 = vunpack.c.l.b16 %v2735
          %v2752 = vunpack.c.l.b16 %v2736
          %v2753 = vunpack.c.l.b16 %v2737
          %v2754 = vunpack.c.l.b16 %v2738
          %v2755 = vpack.c.b16 %v2748, %v2747
          %v2756 = vpack.c.b16 %v2750, %v2749
          %v2757 = vpack.c.b16 %v2752, %v2751
          %v2758 = vpack.c.b16 %v2754, %v2753
          %v2764 = vsel %vm1133, %v2723, 0
          %v2767 = vsel %vm1133, %v2724, 0
          %v2770 = vsel %vm1133, %v2725, 0
          %v2773 = vsel %vm1133, %v2726, 0
          %v2776 = vsel %vm1133, %v2727, 0
          %v2779 = vsel %vm1133, %v2728, 0
          %v2782 = vsel %vm1133, %v2729, 0
          %v2785 = vsel %vm1133, %v2730, 0
          %2787 = vmatpush.bf16.msra.mxu0 0
          %2788 = vmatpush.bf16.msra.mxu0 0
          %2789 = vmatpush.bf16.msra.mxu0 0
          %2790 = vmatpush.bf16.msra.mxu0 0
          %2791 = vmatpush.bf16.msra.mxu0 %v2758
          %2792 = vmatpush.bf16.msra.mxu0 %v2757
          %2793 = vmatpush.bf16.msra.mxu0 %v2756
          %2794 = vmatpush.bf16.msra.mxu0 %v2755
          %2795 = vmatmul.bf16.gmra.mxu0 %v2764
          %v2796 = vpop.f32.mrf.mxu0
          %v2797 = vadd.f32 0.0, %v2796
          %v2798 = vpop.f32.mrf.mxu0
          %v2799 = vadd.f32 0.0, %v2798
          %2800 = vmatmul.bf16.gmra.mxu0 %v2767
          %v2801 = vpop.f32.mrf.mxu0
          %v2802 = vadd.f32 0.0, %v2801
          %v2803 = vpop.f32.mrf.mxu0
          %v2804 = vadd.f32 0.0, %v2803
          %2805 = vmatmul.bf16.gmra.mxu0 %v2770
          %v2806 = vpop.f32.mrf.mxu0
          %v2807 = vadd.f32 0.0, %v2806
          %v2808 = vpop.f32.mrf.mxu0
          %v2809 = vadd.f32 0.0, %v2808
          %2810 = vmatmul.bf16.gmra.mxu0 %v2773
          %v2811 = vpop.f32.mrf.mxu0
          %v2812 = vadd.f32 0.0, %v2811
          %v2813 = vpop.f32.mrf.mxu0
          %v2814 = vadd.f32 0.0, %v2813
          %2815 = vmatmul.bf16.gmra.mxu0 %v2776
          %v2816 = vpop.f32.mrf.mxu0
          %v2817 = vadd.f32 0.0, %v2816
          %v2818 = vpop.f32.mrf.mxu0
          %v2819 = vadd.f32 0.0, %v2818
          %2820 = vmatmul.bf16.gmra.mxu0 %v2779
          %v2821 = vpop.f32.mrf.mxu0
          %v2822 = vadd.f32 0.0, %v2821
          %v2823 = vpop.f32.mrf.mxu0
          %v2824 = vadd.f32 0.0, %v2823
          %2825 = vmatmul.bf16.gmra.mxu0 %v2782
          %v2826 = vpop.f32.mrf.mxu0
          %v2827 = vadd.f32 0.0, %v2826
          %v2828 = vpop.f32.mrf.mxu0
          %v2829 = vadd.f32 0.0, %v2828
          %2830 = vmatmul.bf16.gmra.mxu0 %v2785
          %v2831 = vpop.f32.mrf.mxu0
          %v2832 = vadd.f32 0.0, %v2831
          %v2833 = vpop.f32.mrf.mxu0
          %v2834 = vadd.f32 0.0, %v2833
          %2835 = vdwg.mxu0
          %v2836 = vadd.f32 %v2449, %v2797
          %v2837 = vadd.f32 %v2450, %v2799
          %v2838 = vadd.f32 %v2451, %v2802
          %v2839 = vadd.f32 %v2452, %v2804
          %v2840 = vadd.f32 %v2453, %v2807
          %v2841 = vadd.f32 %v2454, %v2809
          %v2842 = vadd.f32 %v2455, %v2812
          %v2843 = vadd.f32 %v2456, %v2814
          %v2844 = vadd.f32 %v2457, %v2817
          %v2845 = vadd.f32 %v2458, %v2819
          %v2846 = vadd.f32 %v2459, %v2822
          %v2847 = vadd.f32 %v2460, %v2824
          %v2848 = vadd.f32 %v2461, %v2827
          %v2849 = vadd.f32 %v2462, %v2829
          %v2850 = vadd.f32 %v2463, %v2832
          %v2851 = vadd.f32 %v2464, %v2834
          %2852 = vset.pattern.permute.xlu0 6
          %2853 = vperm.xlu0 %2852, %v414
          %v2854 = vpop.permute.xlu0 %2853
          %2855 = vset.pattern.permute.xlu0 6
          %2856 = vperm.xlu0 %2855, %v415
          %v2857 = vpop.permute.xlu0 %2856
          %2858 = vset.pattern.permute.xlu0 6
          %2859 = vperm.xlu0 %2858, %v416
          %v2860 = vpop.permute.xlu0 %2859
          %2861 = vset.pattern.permute.xlu0 6
          %2862 = vperm.xlu0 %2861, %v417
          %v2863 = vpop.permute.xlu0 %2862
          %2864 = vset.pattern.permute.xlu0 6
          %2865 = vperm.xlu0 %2864, %v418
          %v2866 = vpop.permute.xlu0 %2865
          %2867 = vset.pattern.permute.xlu0 6
          %2868 = vperm.xlu0 %2867, %v419
          %v2869 = vpop.permute.xlu0 %2868
          %2870 = vset.pattern.permute.xlu0 6
          %2871 = vperm.xlu0 %2870, %v420
          %v2872 = vpop.permute.xlu0 %2871
          %2873 = vset.pattern.permute.xlu0 6
          %2874 = vperm.xlu0 %2873, %v421
          %v2875 = vpop.permute.xlu0 %2874
          %2876 = vset.pattern.permute.xlu0 6
          %2877 = vperm.xlu0 %2876, %v422
          %v2878 = vpop.permute.xlu0 %2877
          %2879 = vset.pattern.permute.xlu0 6
          %2880 = vperm.xlu0 %2879, %v423
          %v2881 = vpop.permute.xlu0 %2880
          %2882 = vset.pattern.permute.xlu0 6
          %2883 = vperm.xlu0 %2882, %v424
          %v2884 = vpop.permute.xlu0 %2883
          %2885 = vset.pattern.permute.xlu0 6
          %2886 = vperm.xlu0 %2885, %v425
          %v2887 = vpop.permute.xlu0 %2886
          %2888 = vset.pattern.permute.xlu0 6
          %2889 = vperm.xlu0 %2888, %v426
          %v2890 = vpop.permute.xlu0 %2889
          %2891 = vset.pattern.permute.xlu0 6
          %2892 = vperm.xlu0 %2891, %v427
          %v2893 = vpop.permute.xlu0 %2892
          %2894 = vset.pattern.permute.xlu0 6
          %2895 = vperm.xlu0 %2894, %v428
          %v2896 = vpop.permute.xlu0 %2895
          %2897 = vset.pattern.permute.xlu0 6
          %2898 = vperm.xlu0 %2897, %v429
          %v2899 = vpop.permute.xlu0 %2898
          %vm2900 = vcmp.eq.s32.totalorder %v2854, %v463
          %vm2901 = vcmp.eq.s32.totalorder %v2854, %v464
          %vm2902 = vcmp.eq.s32.totalorder %v2857, %v463
          %vm2903 = vcmp.eq.s32.totalorder %v2857, %v464
          %vm2904 = vcmp.eq.s32.totalorder %v2860, %v463
          %vm2905 = vcmp.eq.s32.totalorder %v2860, %v464
          %vm2906 = vcmp.eq.s32.totalorder %v2863, %v463
          %vm2907 = vcmp.eq.s32.totalorder %v2863, %v464
          %vm2908 = vcmp.eq.s32.totalorder %v2866, %v463
          %vm2909 = vcmp.eq.s32.totalorder %v2866, %v464
          %vm2910 = vcmp.eq.s32.totalorder %v2869, %v463
          %vm2911 = vcmp.eq.s32.totalorder %v2869, %v464
          %vm2912 = vcmp.eq.s32.totalorder %v2872, %v463
          %vm2913 = vcmp.eq.s32.totalorder %v2872, %v464
          %vm2914 = vcmp.eq.s32.totalorder %v2875, %v463
          %vm2915 = vcmp.eq.s32.totalorder %v2875, %v464
          %vm2916 = vcmp.eq.s32.totalorder %v2878, %v463
          %vm2917 = vcmp.eq.s32.totalorder %v2878, %v464
          %vm2918 = vcmp.eq.s32.totalorder %v2881, %v463
          %vm2919 = vcmp.eq.s32.totalorder %v2881, %v464
          %vm2920 = vcmp.eq.s32.totalorder %v2884, %v463
          %vm2921 = vcmp.eq.s32.totalorder %v2884, %v464
          %vm2922 = vcmp.eq.s32.totalorder %v2887, %v463
          %vm2923 = vcmp.eq.s32.totalorder %v2887, %v464
          %vm2924 = vcmp.eq.s32.totalorder %v2890, %v463
          %vm2925 = vcmp.eq.s32.totalorder %v2890, %v464
          %vm2926 = vcmp.eq.s32.totalorder %v2893, %v463
          %vm2927 = vcmp.eq.s32.totalorder %v2893, %v464
          %vm2928 = vcmp.eq.s32.totalorder %v2896, %v463
          %vm2929 = vcmp.eq.s32.totalorder %v2896, %v464
          %vm2930 = vcmp.eq.s32.totalorder %v2899, %v463
          %vm2931 = vcmp.eq.s32.totalorder %v2899, %v464
          %v2932 = vsel %vm2900, 1, 0
          %v2933 = vsel %vm2901, 1, 0
          %v2934 = vsel %vm2902, 1, 0
          %v2935 = vsel %vm2903, 1, 0
          %v2936 = vsel %vm2904, 1, 0
          %v2937 = vsel %vm2905, 1, 0
          %v2938 = vsel %vm2906, 1, 0
          %v2939 = vsel %vm2907, 1, 0
          %v2940 = vsel %vm2908, 1, 0
          %v2941 = vsel %vm2909, 1, 0
          %v2942 = vsel %vm2910, 1, 0
          %v2943 = vsel %vm2911, 1, 0
          %v2944 = vsel %vm2912, 1, 0
          %v2945 = vsel %vm2913, 1, 0
          %v2946 = vsel %vm2914, 1, 0
          %v2947 = vsel %vm2915, 1, 0
          %v2948 = vsel %vm2916, 1, 0
          %v2949 = vsel %vm2917, 1, 0
          %v2950 = vsel %vm2918, 1, 0
          %v2951 = vsel %vm2919, 1, 0
          %v2952 = vsel %vm2920, 1, 0
          %v2953 = vsel %vm2921, 1, 0
          %v2954 = vsel %vm2922, 1, 0
          %v2955 = vsel %vm2923, 1, 0
          %v2956 = vsel %vm2924, 1, 0
          %v2957 = vsel %vm2925, 1, 0
          %v2958 = vsel %vm2926, 1, 0
          %v2959 = vsel %vm2927, 1, 0
          %v2960 = vsel %vm2928, 1, 0
          %v2961 = vsel %vm2929, 1, 0
          %v2962 = vsel %vm2930, 1, 0
          %v2963 = vsel %vm2931, 1, 0
          %v2964 = vcvt.s32.f32 %v2932
          %v2965 = vcvt.s32.f32 %v2933
          %v2966 = vcvt.s32.f32 %v2934
          %v2967 = vcvt.s32.f32 %v2935
          %v2968 = vcvt.s32.f32 %v2936
          %v2969 = vcvt.s32.f32 %v2937
          %v2970 = vcvt.s32.f32 %v2938
          %v2971 = vcvt.s32.f32 %v2939
          %v2972 = vcvt.s32.f32 %v2940
          %v2973 = vcvt.s32.f32 %v2941
          %v2974 = vcvt.s32.f32 %v2942
          %v2975 = vcvt.s32.f32 %v2943
          %v2976 = vcvt.s32.f32 %v2944
          %v2977 = vcvt.s32.f32 %v2945
          %v2978 = vcvt.s32.f32 %v2946
          %v2979 = vcvt.s32.f32 %v2947
          %v2980 = vcvt.s32.f32 %v2948
          %v2981 = vcvt.s32.f32 %v2949
          %v2982 = vcvt.s32.f32 %v2950
          %v2983 = vcvt.s32.f32 %v2951
          %v2984 = vcvt.s32.f32 %v2952
          %v2985 = vcvt.s32.f32 %v2953
          %v2986 = vcvt.s32.f32 %v2954
          %v2987 = vcvt.s32.f32 %v2955
          %v2988 = vcvt.s32.f32 %v2956
          %v2989 = vcvt.s32.f32 %v2957
          %v2990 = vcvt.s32.f32 %v2958
          %v2991 = vcvt.s32.f32 %v2959
          %v2992 = vcvt.s32.f32 %v2960
          %v2993 = vcvt.s32.f32 %v2961
          %v2994 = vcvt.s32.f32 %v2962
          %v2995 = vcvt.s32.f32 %v2963
          %v2996 = vpack.c.bf16 %v2966, %v2964
          %v2997 = vpack.c.bf16 %v2967, %v2965
          %v2998 = vpack.c.bf16 %v2970, %v2968
          %v2999 = vpack.c.bf16 %v2971, %v2969
          %v3000 = vpack.c.bf16 %v2974, %v2972
          %v3001 = vpack.c.bf16 %v2975, %v2973
          %v3002 = vpack.c.bf16 %v2978, %v2976
          %v3003 = vpack.c.bf16 %v2979, %v2977
          %v3004 = vpack.c.bf16 %v2982, %v2980
          %v3005 = vpack.c.bf16 %v2983, %v2981
          %v3006 = vpack.c.bf16 %v2986, %v2984
          %v3007 = vpack.c.bf16 %v2987, %v2985
          %v3008 = vpack.c.bf16 %v2990, %v2988
          %v3009 = vpack.c.bf16 %v2991, %v2989
          %v3010 = vpack.c.bf16 %v2994, %v2992
          %v3011 = vpack.c.bf16 %v2995, %v2993
          %3012 = vmatpush.bf16.msra.mxu0 %v696
          %3013 = vmatpush.bf16.msra.mxu0 %v695
          %3014 = vmatpush.bf16.msra.mxu0 %v694
          %3015 = vmatpush.bf16.msra.mxu0 %v693
          %3016 = vmatpush.bf16.msra.mxu0 %v692
          %3017 = vmatpush.bf16.msra.mxu0 %v691
          %3018 = vmatpush.bf16.msra.mxu0 %v690
          %3019 = vmatpush.bf16.msra.mxu0 %v689
          %3020 = vmatmul.bf16.gmra.mxu0 %v2996
          %v3021 = vpop.f32.mrf.mxu0
          %v3022 = vadd.f32 0.0, %v3021
          %v3023 = vpop.f32.mrf.mxu0
          %v3024 = vadd.f32 0.0, %v3023
          %3025 = vmatmul.bf16.gmra.mxu0 %v2998
          %v3026 = vpop.f32.mrf.mxu0
          %v3027 = vadd.f32 0.0, %v3026
          %v3028 = vpop.f32.mrf.mxu0
          %v3029 = vadd.f32 0.0, %v3028
          %3030 = vmatmul.bf16.gmra.mxu0 %v3000
          %v3031 = vpop.f32.mrf.mxu0
          %v3032 = vadd.f32 0.0, %v3031
          %v3033 = vpop.f32.mrf.mxu0
          %v3034 = vadd.f32 0.0, %v3033
          %3035 = vmatmul.bf16.gmra.mxu0 %v3002
          %v3036 = vpop.f32.mrf.mxu0
          %v3037 = vadd.f32 0.0, %v3036
          %v3038 = vpop.f32.mrf.mxu0
          %v3039 = vadd.f32 0.0, %v3038
          %3040 = vmatmul.bf16.gmra.mxu0 %v3004
          %v3041 = vpop.f32.mrf.mxu0
          %v3042 = vadd.f32 0.0, %v3041
          %v3043 = vpop.f32.mrf.mxu0
          %v3044 = vadd.f32 0.0, %v3043
          %3045 = vmatmul.bf16.gmra.mxu0 %v3006
          %v3046 = vpop.f32.mrf.mxu0
          %v3047 = vadd.f32 0.0, %v3046
          %v3048 = vpop.f32.mrf.mxu0
          %v3049 = vadd.f32 0.0, %v3048
          %3050 = vmatmul.bf16.gmra.mxu0 %v3008
          %v3051 = vpop.f32.mrf.mxu0
          %v3052 = vadd.f32 0.0, %v3051
          %v3053 = vpop.f32.mrf.mxu0
          %v3054 = vadd.f32 0.0, %v3053
          %3055 = vmatmul.bf16.gmra.mxu0 %v3010
          %v3056 = vpop.f32.mrf.mxu0
          %v3057 = vadd.f32 0.0, %v3056
          %v3058 = vpop.f32.mrf.mxu0
          %v3059 = vadd.f32 0.0, %v3058
          %3060 = vdwg.mxu0
          %3061 = vmatpush.bf16.msra.mxu0 %v704
          %3062 = vmatpush.bf16.msra.mxu0 %v703
          %3063 = vmatpush.bf16.msra.mxu0 %v702
          %3064 = vmatpush.bf16.msra.mxu0 %v701
          %3065 = vmatpush.bf16.msra.mxu0 %v700
          %3066 = vmatpush.bf16.msra.mxu0 %v699
          %3067 = vmatpush.bf16.msra.mxu0 %v698
          %3068 = vmatpush.bf16.msra.mxu0 %v697
          %3069 = vmatmul.bf16.gmra.mxu0 %v2997
          %v3070 = vpop.f32.mrf.mxu0
          %v3071 = vadd.f32 %v3022, %v3070
          %v3072 = vpop.f32.mrf.mxu0
          %v3073 = vadd.f32 %v3024, %v3072
          %3074 = vmatmul.bf16.gmra.mxu0 %v2999
          %v3075 = vpop.f32.mrf.mxu0
          %v3076 = vadd.f32 %v3027, %v3075
          %v3077 = vpop.f32.mrf.mxu0
          %v3078 = vadd.f32 %v3029, %v3077
          %3079 = vmatmul.bf16.gmra.mxu0 %v3001
          %v3080 = vpop.f32.mrf.mxu0
          %v3081 = vadd.f32 %v3032, %v3080
          %v3082 = vpop.f32.mrf.mxu0
          %v3083 = vadd.f32 %v3034, %v3082
          %3084 = vmatmul.bf16.gmra.mxu0 %v3003
          %v3085 = vpop.f32.mrf.mxu0
          %v3086 = vadd.f32 %v3037, %v3085
          %v3087 = vpop.f32.mrf.mxu0
          %v3088 = vadd.f32 %v3039, %v3087
          %3089 = vmatmul.bf16.gmra.mxu0 %v3005
          %v3090 = vpop.f32.mrf.mxu0
          %v3091 = vadd.f32 %v3042, %v3090
          %v3092 = vpop.f32.mrf.mxu0
          %v3093 = vadd.f32 %v3044, %v3092
          %3094 = vmatmul.bf16.gmra.mxu0 %v3007
          %v3095 = vpop.f32.mrf.mxu0
          %v3096 = vadd.f32 %v3047, %v3095
          %v3097 = vpop.f32.mrf.mxu0
          %v3098 = vadd.f32 %v3049, %v3097
          %3099 = vmatmul.bf16.gmra.mxu0 %v3009
          %v3100 = vpop.f32.mrf.mxu0
          %v3101 = vadd.f32 %v3052, %v3100
          %v3102 = vpop.f32.mrf.mxu0
          %v3103 = vadd.f32 %v3054, %v3102
          %3104 = vmatmul.bf16.gmra.mxu0 %v3011
          %v3105 = vpop.f32.mrf.mxu0
          %v3106 = vadd.f32 %v3057, %v3105
          %v3107 = vpop.f32.mrf.mxu0
          %v3108 = vadd.f32 %v3059, %v3107
          %3109 = vdwg.mxu0
          %v3110 = vpack.c.bf16 %v3073, %v3071
          %v3111 = vpack.c.bf16 %v3078, %v3076
          %v3112 = vpack.c.bf16 %v3083, %v3081
          %v3113 = vpack.c.bf16 %v3088, %v3086
          %v3114 = vpack.c.bf16 %v3093, %v3091
          %v3115 = vpack.c.bf16 %v3098, %v3096
          %v3116 = vpack.c.bf16 %v3103, %v3101
          %v3117 = vpack.c.bf16 %v3108, %v3106
          %v3118 = vld [vmem:[%s2 + $0xc0] sm:$0xf]
          %v3119 = vld [vmem:[%s2 + $0xc4] sm:$0xf]
          %v3120 = vld [vmem:[%s2 + $0xc8] sm:$0xf]
          %v3121 = vld [vmem:[%s2 + $0xcc] sm:$0xf]
          %v3122 = vld [vmem:[%s2 + $0xd0] sm:$0xf]
          %v3123 = vld [vmem:[%s2 + $0xd4] sm:$0xf]
          %v3124 = vld [vmem:[%s2 + $0xd8] sm:$0xf]
          %v3125 = vld [vmem:[%s2 + $0xdc] sm:$0xf]
          %v3134 = vunpack.c.l.b16 %v3118
          %v3135 = vunpack.c.l.b16 %v3119
          %v3136 = vunpack.c.l.b16 %v3120
          %v3137 = vunpack.c.l.b16 %v3121
          %v3138 = vunpack.c.l.b16 %v3122
          %v3139 = vunpack.c.l.b16 %v3123
          %v3140 = vunpack.c.l.b16 %v3124
          %v3141 = vunpack.c.l.b16 %v3125
          %v3142 = vpack.c.b16 %v3135, %v3134
          %v3143 = vpack.c.b16 %v3137, %v3136
          %v3144 = vpack.c.b16 %v3139, %v3138
          %v3145 = vpack.c.b16 %v3141, %v3140
          %v3151 = vsel %vm1133, %v3110, 0
          %v3154 = vsel %vm1133, %v3111, 0
          %v3157 = vsel %vm1133, %v3112, 0
          %v3160 = vsel %vm1133, %v3113, 0
          %v3163 = vsel %vm1133, %v3114, 0
          %v3166 = vsel %vm1133, %v3115, 0
          %v3169 = vsel %vm1133, %v3116, 0
          %v3172 = vsel %vm1133, %v3117, 0
          %3174 = vmatpush.bf16.msra.mxu0 0
          %3175 = vmatpush.bf16.msra.mxu0 0
          %3176 = vmatpush.bf16.msra.mxu0 0
          %3177 = vmatpush.bf16.msra.mxu0 0
          %3178 = vmatpush.bf16.msra.mxu0 %v3145
          %3179 = vmatpush.bf16.msra.mxu0 %v3144
          %3180 = vmatpush.bf16.msra.mxu0 %v3143
          %3181 = vmatpush.bf16.msra.mxu0 %v3142
          %3182 = vmatmul.bf16.gmra.mxu0 %v3151
          %v3183 = vpop.f32.mrf.mxu0
          %v3184 = vadd.f32 0.0, %v3183
          %v3185 = vpop.f32.mrf.mxu0
          %v3186 = vadd.f32 0.0, %v3185
          %3187 = vmatmul.bf16.gmra.mxu0 %v3154
          %v3188 = vpop.f32.mrf.mxu0
          %v3189 = vadd.f32 0.0, %v3188
          %v3190 = vpop.f32.mrf.mxu0
          %v3191 = vadd.f32 0.0, %v3190
          %3192 = vmatmul.bf16.gmra.mxu0 %v3157
          %v3193 = vpop.f32.mrf.mxu0
          %v3194 = vadd.f32 0.0, %v3193
          %v3195 = vpop.f32.mrf.mxu0
          %v3196 = vadd.f32 0.0, %v3195
          %3197 = vmatmul.bf16.gmra.mxu0 %v3160
          %v3198 = vpop.f32.mrf.mxu0
          %v3199 = vadd.f32 0.0, %v3198
          %v3200 = vpop.f32.mrf.mxu0
          %v3201 = vadd.f32 0.0, %v3200
          %3202 = vmatmul.bf16.gmra.mxu0 %v3163
          %v3203 = vpop.f32.mrf.mxu0
          %v3204 = vadd.f32 0.0, %v3203
          %v3205 = vpop.f32.mrf.mxu0
          %v3206 = vadd.f32 0.0, %v3205
          %3207 = vmatmul.bf16.gmra.mxu0 %v3166
          %v3208 = vpop.f32.mrf.mxu0
          %v3209 = vadd.f32 0.0, %v3208
          %v3210 = vpop.f32.mrf.mxu0
          %v3211 = vadd.f32 0.0, %v3210
          %3212 = vmatmul.bf16.gmra.mxu0 %v3169
          %v3213 = vpop.f32.mrf.mxu0
          %v3214 = vadd.f32 0.0, %v3213
          %v3215 = vpop.f32.mrf.mxu0
          %v3216 = vadd.f32 0.0, %v3215
          %3217 = vmatmul.bf16.gmra.mxu0 %v3172
          %v3218 = vpop.f32.mrf.mxu0
          %v3219 = vadd.f32 0.0, %v3218
          %v3220 = vpop.f32.mrf.mxu0
          %v3221 = vadd.f32 0.0, %v3220
          %3222 = vdwg.mxu0
          %v3223 = vadd.f32 %v2836, %v3184
          %v3224 = vadd.f32 %v2837, %v3186
          %v3225 = vadd.f32 %v2838, %v3189
          %v3226 = vadd.f32 %v2839, %v3191
          %v3227 = vadd.f32 %v2840, %v3194
          %v3228 = vadd.f32 %v2841, %v3196
          %v3229 = vadd.f32 %v2842, %v3199
          %v3230 = vadd.f32 %v2843, %v3201
          %v3231 = vadd.f32 %v2844, %v3204
          %v3232 = vadd.f32 %v2845, %v3206
          %v3233 = vadd.f32 %v2846, %v3209
          %v3234 = vadd.f32 %v2847, %v3211
          %v3235 = vadd.f32 %v2848, %v3214
          %v3236 = vadd.f32 %v2849, %v3216
          %v3237 = vadd.f32 %v2850, %v3219
          %v3238 = vadd.f32 %v2851, %v3221
          %3239 = vset.pattern.permute.xlu0 7
          %3240 = vperm.xlu0 %3239, %v414
          %v3241 = vpop.permute.xlu0 %3240
          %3242 = vset.pattern.permute.xlu0 7
          %3243 = vperm.xlu0 %3242, %v415
          %v3244 = vpop.permute.xlu0 %3243
          %3245 = vset.pattern.permute.xlu0 7
          %3246 = vperm.xlu0 %3245, %v416
          %v3247 = vpop.permute.xlu0 %3246
          %3248 = vset.pattern.permute.xlu0 7
          %3249 = vperm.xlu0 %3248, %v417
          %v3250 = vpop.permute.xlu0 %3249
          %3251 = vset.pattern.permute.xlu0 7
          %3252 = vperm.xlu0 %3251, %v418
          %v3253 = vpop.permute.xlu0 %3252
          %3254 = vset.pattern.permute.xlu0 7
          %3255 = vperm.xlu0 %3254, %v419
          %v3256 = vpop.permute.xlu0 %3255
          %3257 = vset.pattern.permute.xlu0 7
          %3258 = vperm.xlu0 %3257, %v420
          %v3259 = vpop.permute.xlu0 %3258
          %3260 = vset.pattern.permute.xlu0 7
          %3261 = vperm.xlu0 %3260, %v421
          %v3262 = vpop.permute.xlu0 %3261
          %3263 = vset.pattern.permute.xlu0 7
          %3264 = vperm.xlu0 %3263, %v422
          %v3265 = vpop.permute.xlu0 %3264
          %3266 = vset.pattern.permute.xlu0 7
          %3267 = vperm.xlu0 %3266, %v423
          %v3268 = vpop.permute.xlu0 %3267
          %3269 = vset.pattern.permute.xlu0 7
          %3270 = vperm.xlu0 %3269, %v424
          %v3271 = vpop.permute.xlu0 %3270
          %3272 = vset.pattern.permute.xlu0 7
          %3273 = vperm.xlu0 %3272, %v425
          %v3274 = vpop.permute.xlu0 %3273
          %3275 = vset.pattern.permute.xlu0 7
          %3276 = vperm.xlu0 %3275, %v426
          %v3277 = vpop.permute.xlu0 %3276
          %3278 = vset.pattern.permute.xlu0 7
          %3279 = vperm.xlu0 %3278, %v427
          %v3280 = vpop.permute.xlu0 %3279
          %3281 = vset.pattern.permute.xlu0 7
          %3282 = vperm.xlu0 %3281, %v428
          %v3283 = vpop.permute.xlu0 %3282
          %3284 = vset.pattern.permute.xlu0 7
          %3285 = vperm.xlu0 %3284, %v429
          %v3286 = vpop.permute.xlu0 %3285
          %vm3287 = vcmp.eq.s32.totalorder %v3241, %v463
          %vm3288 = vcmp.eq.s32.totalorder %v3241, %v464
          %vm3289 = vcmp.eq.s32.totalorder %v3244, %v463
          %vm3290 = vcmp.eq.s32.totalorder %v3244, %v464
          %vm3291 = vcmp.eq.s32.totalorder %v3247, %v463
          %vm3292 = vcmp.eq.s32.totalorder %v3247, %v464
          %vm3293 = vcmp.eq.s32.totalorder %v3250, %v463
          %vm3294 = vcmp.eq.s32.totalorder %v3250, %v464
          %vm3295 = vcmp.eq.s32.totalorder %v3253, %v463
          %vm3296 = vcmp.eq.s32.totalorder %v3253, %v464
          %vm3297 = vcmp.eq.s32.totalorder %v3256, %v463
          %vm3298 = vcmp.eq.s32.totalorder %v3256, %v464
          %vm3299 = vcmp.eq.s32.totalorder %v3259, %v463
          %vm3300 = vcmp.eq.s32.totalorder %v3259, %v464
          %vm3301 = vcmp.eq.s32.totalorder %v3262, %v463
          %vm3302 = vcmp.eq.s32.totalorder %v3262, %v464
          %vm3303 = vcmp.eq.s32.totalorder %v3265, %v463
          %vm3304 = vcmp.eq.s32.totalorder %v3265, %v464
          %vm3305 = vcmp.eq.s32.totalorder %v3268, %v463
          %vm3306 = vcmp.eq.s32.totalorder %v3268, %v464
          %vm3307 = vcmp.eq.s32.totalorder %v3271, %v463
          %vm3308 = vcmp.eq.s32.totalorder %v3271, %v464
          %vm3309 = vcmp.eq.s32.totalorder %v3274, %v463
          %vm3310 = vcmp.eq.s32.totalorder %v3274, %v464
          %vm3311 = vcmp.eq.s32.totalorder %v3277, %v463
          %vm3312 = vcmp.eq.s32.totalorder %v3277, %v464
          %vm3313 = vcmp.eq.s32.totalorder %v3280, %v463
          %vm3314 = vcmp.eq.s32.totalorder %v3280, %v464
          %vm3315 = vcmp.eq.s32.totalorder %v3283, %v463
          %vm3316 = vcmp.eq.s32.totalorder %v3283, %v464
          %vm3317 = vcmp.eq.s32.totalorder %v3286, %v463
          %vm3318 = vcmp.eq.s32.totalorder %v3286, %v464
          %v3319 = vsel %vm3287, 1, 0
          %v3320 = vsel %vm3288, 1, 0
          %v3321 = vsel %vm3289, 1, 0
          %v3322 = vsel %vm3290, 1, 0
          %v3323 = vsel %vm3291, 1, 0
          %v3324 = vsel %vm3292, 1, 0
          %v3325 = vsel %vm3293, 1, 0
          %v3326 = vsel %vm3294, 1, 0
          %v3327 = vsel %vm3295, 1, 0
          %v3328 = vsel %vm3296, 1, 0
          %v3329 = vsel %vm3297, 1, 0
          %v3330 = vsel %vm3298, 1, 0
          %v3331 = vsel %vm3299, 1, 0
          %v3332 = vsel %vm3300, 1, 0
          %v3333 = vsel %vm3301, 1, 0
          %v3334 = vsel %vm3302, 1, 0
          %v3335 = vsel %vm3303, 1, 0
          %v3336 = vsel %vm3304, 1, 0
          %v3337 = vsel %vm3305, 1, 0
          %v3338 = vsel %vm3306, 1, 0
          %v3339 = vsel %vm3307, 1, 0
          %v3340 = vsel %vm3308, 1, 0
          %v3341 = vsel %vm3309, 1, 0
          %v3342 = vsel %vm3310, 1, 0
          %v3343 = vsel %vm3311, 1, 0
          %v3344 = vsel %vm3312, 1, 0
          %v3345 = vsel %vm3313, 1, 0
          %v3346 = vsel %vm3314, 1, 0
          %v3347 = vsel %vm3315, 1, 0
          %v3348 = vsel %vm3316, 1, 0
          %v3349 = vsel %vm3317, 1, 0
          %v3350 = vsel %vm3318, 1, 0
          %v3351 = vcvt.s32.f32 %v3319
          %v3352 = vcvt.s32.f32 %v3320
          %v3353 = vcvt.s32.f32 %v3321
          %v3354 = vcvt.s32.f32 %v3322
          %v3355 = vcvt.s32.f32 %v3323
          %v3356 = vcvt.s32.f32 %v3324
          %v3357 = vcvt.s32.f32 %v3325
          %v3358 = vcvt.s32.f32 %v3326
          %v3359 = vcvt.s32.f32 %v3327
          %v3360 = vcvt.s32.f32 %v3328
          %v3361 = vcvt.s32.f32 %v3329
          %v3362 = vcvt.s32.f32 %v3330
          %v3363 = vcvt.s32.f32 %v3331
          %v3364 = vcvt.s32.f32 %v3332
          %v3365 = vcvt.s32.f32 %v3333
          %v3366 = vcvt.s32.f32 %v3334
          %v3367 = vcvt.s32.f32 %v3335
          %v3368 = vcvt.s32.f32 %v3336
          %v3369 = vcvt.s32.f32 %v3337
          %v3370 = vcvt.s32.f32 %v3338
          %v3371 = vcvt.s32.f32 %v3339
          %v3372 = vcvt.s32.f32 %v3340
          %v3373 = vcvt.s32.f32 %v3341
          %v3374 = vcvt.s32.f32 %v3342
          %v3375 = vcvt.s32.f32 %v3343
          %v3376 = vcvt.s32.f32 %v3344
          %v3377 = vcvt.s32.f32 %v3345
          %v3378 = vcvt.s32.f32 %v3346
          %v3379 = vcvt.s32.f32 %v3347
          %v3380 = vcvt.s32.f32 %v3348
          %v3381 = vcvt.s32.f32 %v3349
          %v3382 = vcvt.s32.f32 %v3350
          %v3383 = vpack.c.bf16 %v3353, %v3351
          %v3384 = vpack.c.bf16 %v3354, %v3352
          %v3385 = vpack.c.bf16 %v3357, %v3355
          %v3386 = vpack.c.bf16 %v3358, %v3356
          %v3387 = vpack.c.bf16 %v3361, %v3359
          %v3388 = vpack.c.bf16 %v3362, %v3360
          %v3389 = vpack.c.bf16 %v3365, %v3363
          %v3390 = vpack.c.bf16 %v3366, %v3364
          %v3391 = vpack.c.bf16 %v3369, %v3367
          %v3392 = vpack.c.bf16 %v3370, %v3368
          %v3393 = vpack.c.bf16 %v3373, %v3371
          %v3394 = vpack.c.bf16 %v3374, %v3372
          %v3395 = vpack.c.bf16 %v3377, %v3375
          %v3396 = vpack.c.bf16 %v3378, %v3376
          %v3397 = vpack.c.bf16 %v3381, %v3379
          %v3398 = vpack.c.bf16 %v3382, %v3380
          %3399 = vmatpush.bf16.msra.mxu0 %v696
          %3400 = vmatpush.bf16.msra.mxu0 %v695
          %3401 = vmatpush.bf16.msra.mxu0 %v694
          %3402 = vmatpush.bf16.msra.mxu0 %v693
          %3403 = vmatpush.bf16.msra.mxu0 %v692
          %3404 = vmatpush.bf16.msra.mxu0 %v691
          %3405 = vmatpush.bf16.msra.mxu0 %v690
          %3406 = vmatpush.bf16.msra.mxu0 %v689
          %3407 = vmatmul.bf16.gmra.mxu0 %v3383
          %v3408 = vpop.f32.mrf.mxu0
          %v3409 = vadd.f32 0.0, %v3408
          %v3410 = vpop.f32.mrf.mxu0
          %v3411 = vadd.f32 0.0, %v3410
          %3412 = vmatmul.bf16.gmra.mxu0 %v3385
          %v3413 = vpop.f32.mrf.mxu0
          %v3414 = vadd.f32 0.0, %v3413
          %v3415 = vpop.f32.mrf.mxu0
          %v3416 = vadd.f32 0.0, %v3415
          %3417 = vmatmul.bf16.gmra.mxu0 %v3387
          %v3418 = vpop.f32.mrf.mxu0
          %v3419 = vadd.f32 0.0, %v3418
          %v3420 = vpop.f32.mrf.mxu0
          %v3421 = vadd.f32 0.0, %v3420
          %3422 = vmatmul.bf16.gmra.mxu0 %v3389
          %v3423 = vpop.f32.mrf.mxu0
          %v3424 = vadd.f32 0.0, %v3423
          %v3425 = vpop.f32.mrf.mxu0
          %v3426 = vadd.f32 0.0, %v3425
          %3427 = vmatmul.bf16.gmra.mxu0 %v3391
          %v3428 = vpop.f32.mrf.mxu0
          %v3429 = vadd.f32 0.0, %v3428
          %v3430 = vpop.f32.mrf.mxu0
          %v3431 = vadd.f32 0.0, %v3430
          %3432 = vmatmul.bf16.gmra.mxu0 %v3393
          %v3433 = vpop.f32.mrf.mxu0
          %v3434 = vadd.f32 0.0, %v3433
          %v3435 = vpop.f32.mrf.mxu0
          %v3436 = vadd.f32 0.0, %v3435
          %3437 = vmatmul.bf16.gmra.mxu0 %v3395
          %v3438 = vpop.f32.mrf.mxu0
          %v3439 = vadd.f32 0.0, %v3438
          %v3440 = vpop.f32.mrf.mxu0
          %v3441 = vadd.f32 0.0, %v3440
          %3442 = vmatmul.bf16.gmra.mxu0 %v3397
          %v3443 = vpop.f32.mrf.mxu0
          %v3444 = vadd.f32 0.0, %v3443
          %v3445 = vpop.f32.mrf.mxu0
          %v3446 = vadd.f32 0.0, %v3445
          %3447 = vdwg.mxu0
          %3448 = vmatpush.bf16.msra.mxu0 %v704
          %3449 = vmatpush.bf16.msra.mxu0 %v703
          %3450 = vmatpush.bf16.msra.mxu0 %v702
          %3451 = vmatpush.bf16.msra.mxu0 %v701
          %3452 = vmatpush.bf16.msra.mxu0 %v700
          %3453 = vmatpush.bf16.msra.mxu0 %v699
          %3454 = vmatpush.bf16.msra.mxu0 %v698
          %3455 = vmatpush.bf16.msra.mxu0 %v697
          %3456 = vmatmul.bf16.gmra.mxu0 %v3384
          %v3457 = vpop.f32.mrf.mxu0
          %v3458 = vadd.f32 %v3409, %v3457
          %v3459 = vpop.f32.mrf.mxu0
          %v3460 = vadd.f32 %v3411, %v3459
          %3461 = vmatmul.bf16.gmra.mxu0 %v3386
          %v3462 = vpop.f32.mrf.mxu0
          %v3463 = vadd.f32 %v3414, %v3462
          %v3464 = vpop.f32.mrf.mxu0
          %v3465 = vadd.f32 %v3416, %v3464
          %3466 = vmatmul.bf16.gmra.mxu0 %v3388
          %v3467 = vpop.f32.mrf.mxu0
          %v3468 = vadd.f32 %v3419, %v3467
          %v3469 = vpop.f32.mrf.mxu0
          %v3470 = vadd.f32 %v3421, %v3469
          %3471 = vmatmul.bf16.gmra.mxu0 %v3390
          %v3472 = vpop.f32.mrf.mxu0
          %v3473 = vadd.f32 %v3424, %v3472
          %v3474 = vpop.f32.mrf.mxu0
          %v3475 = vadd.f32 %v3426, %v3474
          %3476 = vmatmul.bf16.gmra.mxu0 %v3392
          %v3477 = vpop.f32.mrf.mxu0
          %v3478 = vadd.f32 %v3429, %v3477
          %v3479 = vpop.f32.mrf.mxu0
          %v3480 = vadd.f32 %v3431, %v3479
          %3481 = vmatmul.bf16.gmra.mxu0 %v3394
          %v3482 = vpop.f32.mrf.mxu0
          %v3483 = vadd.f32 %v3434, %v3482
          %v3484 = vpop.f32.mrf.mxu0
          %v3485 = vadd.f32 %v3436, %v3484
          %3486 = vmatmul.bf16.gmra.mxu0 %v3396
          %v3487 = vpop.f32.mrf.mxu0
          %v3488 = vadd.f32 %v3439, %v3487
          %v3489 = vpop.f32.mrf.mxu0
          %v3490 = vadd.f32 %v3441, %v3489
          %3491 = vmatmul.bf16.gmra.mxu0 %v3398
          %v3492 = vpop.f32.mrf.mxu0
          %v3493 = vadd.f32 %v3444, %v3492
          %v3494 = vpop.f32.mrf.mxu0
          %v3495 = vadd.f32 %v3446, %v3494
          %3496 = vdwg.mxu0
          %v3497 = vpack.c.bf16 %v3460, %v3458
          %v3498 = vpack.c.bf16 %v3465, %v3463
          %v3499 = vpack.c.bf16 %v3470, %v3468
          %v3500 = vpack.c.bf16 %v3475, %v3473
          %v3501 = vpack.c.bf16 %v3480, %v3478
          %v3502 = vpack.c.bf16 %v3485, %v3483
          %v3503 = vpack.c.bf16 %v3490, %v3488
          %v3504 = vpack.c.bf16 %v3495, %v3493
          %v3505 = vld [vmem:[%s2 + $0xe0] sm:$0xf]
          %v3506 = vld [vmem:[%s2 + $0xe4] sm:$0xf]
          %v3507 = vld [vmem:[%s2 + $0xe8] sm:$0xf]
          %v3508 = vld [vmem:[%s2 + $0xec] sm:$0xf]
          %v3509 = vld [vmem:[%s2 + $0xf0] sm:$0xf]
          %v3510 = vld [vmem:[%s2 + $0xf4] sm:$0xf]
          %v3511 = vld [vmem:[%s2 + $0xf8] sm:$0xf]
          %v3512 = vld [vmem:[%s2 + $0xfc] sm:$0xf]
          %v3521 = vunpack.c.l.b16 %v3505
          %v3522 = vunpack.c.l.b16 %v3506
          %v3523 = vunpack.c.l.b16 %v3507
          %v3524 = vunpack.c.l.b16 %v3508
          %v3525 = vunpack.c.l.b16 %v3509
          %v3526 = vunpack.c.l.b16 %v3510
          %v3527 = vunpack.c.l.b16 %v3511
          %v3528 = vunpack.c.l.b16 %v3512
          %v3529 = vpack.c.b16 %v3522, %v3521
          %v3530 = vpack.c.b16 %v3524, %v3523
          %v3531 = vpack.c.b16 %v3526, %v3525
          %v3532 = vpack.c.b16 %v3528, %v3527
          %v3538 = vsel %vm1133, %v3497, 0
          %v3541 = vsel %vm1133, %v3498, 0
          %v3544 = vsel %vm1133, %v3499, 0
          %v3547 = vsel %vm1133, %v3500, 0
          %v3550 = vsel %vm1133, %v3501, 0
          %v3553 = vsel %vm1133, %v3502, 0
          %v3556 = vsel %vm1133, %v3503, 0
          %v3559 = vsel %vm1133, %v3504, 0
          %3561 = vmatpush.bf16.msra.mxu0 0
          %3562 = vmatpush.bf16.msra.mxu0 0
          %3563 = vmatpush.bf16.msra.mxu0 0
          %3564 = vmatpush.bf16.msra.mxu0 0
          %3565 = vmatpush.bf16.msra.mxu0 %v3532
          %3566 = vmatpush.bf16.msra.mxu0 %v3531
          %3567 = vmatpush.bf16.msra.mxu0 %v3530
          %3568 = vmatpush.bf16.msra.mxu0 %v3529
          %3569 = vmatmul.bf16.gmra.mxu0 %v3538
          %v3570 = vpop.f32.mrf.mxu0
          %v3571 = vadd.f32 0.0, %v3570
          %v3572 = vpop.f32.mrf.mxu0
          %v3573 = vadd.f32 0.0, %v3572
          %3574 = vmatmul.bf16.gmra.mxu0 %v3541
          %v3575 = vpop.f32.mrf.mxu0
          %v3576 = vadd.f32 0.0, %v3575
          %v3577 = vpop.f32.mrf.mxu0
          %v3578 = vadd.f32 0.0, %v3577
          %3579 = vmatmul.bf16.gmra.mxu0 %v3544
          %v3580 = vpop.f32.mrf.mxu0
          %v3581 = vadd.f32 0.0, %v3580
          %v3582 = vpop.f32.mrf.mxu0
          %v3583 = vadd.f32 0.0, %v3582
          %3584 = vmatmul.bf16.gmra.mxu0 %v3547
          %v3585 = vpop.f32.mrf.mxu0
          %v3586 = vadd.f32 0.0, %v3585
          %v3587 = vpop.f32.mrf.mxu0
          %v3588 = vadd.f32 0.0, %v3587
          %3589 = vmatmul.bf16.gmra.mxu0 %v3550
          %v3590 = vpop.f32.mrf.mxu0
          %v3591 = vadd.f32 0.0, %v3590
          %v3592 = vpop.f32.mrf.mxu0
          %v3593 = vadd.f32 0.0, %v3592
          %3594 = vmatmul.bf16.gmra.mxu0 %v3553
          %v3595 = vpop.f32.mrf.mxu0
          %v3596 = vadd.f32 0.0, %v3595
          %v3597 = vpop.f32.mrf.mxu0
          %v3598 = vadd.f32 0.0, %v3597
          %3599 = vmatmul.bf16.gmra.mxu0 %v3556
          %v3600 = vpop.f32.mrf.mxu0
          %v3601 = vadd.f32 0.0, %v3600
          %v3602 = vpop.f32.mrf.mxu0
          %v3603 = vadd.f32 0.0, %v3602
          %3604 = vmatmul.bf16.gmra.mxu0 %v3559
          %v3605 = vpop.f32.mrf.mxu0
          %v3606 = vadd.f32 0.0, %v3605
          %v3607 = vpop.f32.mrf.mxu0
          %v3608 = vadd.f32 0.0, %v3607
          %3609 = vdwg.mxu0
          %v3610 = vadd.f32 %v3223, %v3571
          %v3611 = vadd.f32 %v3224, %v3573
          %v3612 = vadd.f32 %v3225, %v3576
          %v3613 = vadd.f32 %v3226, %v3578
          %v3614 = vadd.f32 %v3227, %v3581
          %v3615 = vadd.f32 %v3228, %v3583
          %v3616 = vadd.f32 %v3229, %v3586
          %v3617 = vadd.f32 %v3230, %v3588
          %v3618 = vadd.f32 %v3231, %v3591
          %v3619 = vadd.f32 %v3232, %v3593
          %v3620 = vadd.f32 %v3233, %v3596
          %v3621 = vadd.f32 %v3234, %v3598
          %v3622 = vadd.f32 %v3235, %v3601
          %v3623 = vadd.f32 %v3236, %v3603
          %v3624 = vadd.f32 %v3237, %v3606
          %v3625 = vadd.f32 %v3238, %v3608
          %3626 = vset.pattern.permute.xlu0 8
          %3627 = vperm.xlu0 %3626, %v414
          %v3628 = vpop.permute.xlu0 %3627
          %3629 = vset.pattern.permute.xlu0 8
          %3630 = vperm.xlu0 %3629, %v415
          %v3631 = vpop.permute.xlu0 %3630
          %3632 = vset.pattern.permute.xlu0 8
          %3633 = vperm.xlu0 %3632, %v416
          %v3634 = vpop.permute.xlu0 %3633
          %3635 = vset.pattern.permute.xlu0 8
          %3636 = vperm.xlu0 %3635, %v417
          %v3637 = vpop.permute.xlu0 %3636
          %3638 = vset.pattern.permute.xlu0 8
          %3639 = vperm.xlu0 %3638, %v418
          %v3640 = vpop.permute.xlu0 %3639
          %3641 = vset.pattern.permute.xlu0 8
          %3642 = vperm.xlu0 %3641, %v419
          %v3643 = vpop.permute.xlu0 %3642
          %3644 = vset.pattern.permute.xlu0 8
          %3645 = vperm.xlu0 %3644, %v420
          %v3646 = vpop.permute.xlu0 %3645
          %3647 = vset.pattern.permute.xlu0 8
          %3648 = vperm.xlu0 %3647, %v421
          %v3649 = vpop.permute.xlu0 %3648
          %3650 = vset.pattern.permute.xlu0 8
          %3651 = vperm.xlu0 %3650, %v422
          %v3652 = vpop.permute.xlu0 %3651
          %3653 = vset.pattern.permute.xlu0 8
          %3654 = vperm.xlu0 %3653, %v423
          %v3655 = vpop.permute.xlu0 %3654
          %3656 = vset.pattern.permute.xlu0 8
          %3657 = vperm.xlu0 %3656, %v424
          %v3658 = vpop.permute.xlu0 %3657
          %3659 = vset.pattern.permute.xlu0 8
          %3660 = vperm.xlu0 %3659, %v425
          %v3661 = vpop.permute.xlu0 %3660
          %3662 = vset.pattern.permute.xlu0 8
          %3663 = vperm.xlu0 %3662, %v426
          %v3664 = vpop.permute.xlu0 %3663
          %3665 = vset.pattern.permute.xlu0 8
          %3666 = vperm.xlu0 %3665, %v427
          %v3667 = vpop.permute.xlu0 %3666
          %3668 = vset.pattern.permute.xlu0 8
          %3669 = vperm.xlu0 %3668, %v428
          %v3670 = vpop.permute.xlu0 %3669
          %3671 = vset.pattern.permute.xlu0 8
          %3672 = vperm.xlu0 %3671, %v429
          %v3673 = vpop.permute.xlu0 %3672
          %vm3674 = vcmp.eq.s32.totalorder %v3628, %v463
          %vm3675 = vcmp.eq.s32.totalorder %v3628, %v464
          %vm3676 = vcmp.eq.s32.totalorder %v3631, %v463
          %vm3677 = vcmp.eq.s32.totalorder %v3631, %v464
          %vm3678 = vcmp.eq.s32.totalorder %v3634, %v463
          %vm3679 = vcmp.eq.s32.totalorder %v3634, %v464
          %vm3680 = vcmp.eq.s32.totalorder %v3637, %v463
          %vm3681 = vcmp.eq.s32.totalorder %v3637, %v464
          %vm3682 = vcmp.eq.s32.totalorder %v3640, %v463
          %vm3683 = vcmp.eq.s32.totalorder %v3640, %v464
          %vm3684 = vcmp.eq.s32.totalorder %v3643, %v463
          %vm3685 = vcmp.eq.s32.totalorder %v3643, %v464
          %vm3686 = vcmp.eq.s32.totalorder %v3646, %v463
          %vm3687 = vcmp.eq.s32.totalorder %v3646, %v464
          %vm3688 = vcmp.eq.s32.totalorder %v3649, %v463
          %vm3689 = vcmp.eq.s32.totalorder %v3649, %v464
          %vm3690 = vcmp.eq.s32.totalorder %v3652, %v463
          %vm3691 = vcmp.eq.s32.totalorder %v3652, %v464
          %vm3692 = vcmp.eq.s32.totalorder %v3655, %v463
          %vm3693 = vcmp.eq.s32.totalorder %v3655, %v464
          %vm3694 = vcmp.eq.s32.totalorder %v3658, %v463
          %vm3695 = vcmp.eq.s32.totalorder %v3658, %v464
          %vm3696 = vcmp.eq.s32.totalorder %v3661, %v463
          %vm3697 = vcmp.eq.s32.totalorder %v3661, %v464
          %vm3698 = vcmp.eq.s32.totalorder %v3664, %v463
          %vm3699 = vcmp.eq.s32.totalorder %v3664, %v464
          %vm3700 = vcmp.eq.s32.totalorder %v3667, %v463
          %vm3701 = vcmp.eq.s32.totalorder %v3667, %v464
          %vm3702 = vcmp.eq.s32.totalorder %v3670, %v463
          %vm3703 = vcmp.eq.s32.totalorder %v3670, %v464
          %vm3704 = vcmp.eq.s32.totalorder %v3673, %v463
          %vm3705 = vcmp.eq.s32.totalorder %v3673, %v464
          %v3706 = vsel %vm3674, 1, 0
          %v3707 = vsel %vm3675, 1, 0
          %v3708 = vsel %vm3676, 1, 0
          %v3709 = vsel %vm3677, 1, 0
          %v3710 = vsel %vm3678, 1, 0
          %v3711 = vsel %vm3679, 1, 0
          %v3712 = vsel %vm3680, 1, 0
          %v3713 = vsel %vm3681, 1, 0
          %v3714 = vsel %vm3682, 1, 0
          %v3715 = vsel %vm3683, 1, 0
          %v3716 = vsel %vm3684, 1, 0
          %v3717 = vsel %vm3685, 1, 0
          %v3718 = vsel %vm3686, 1, 0
          %v3719 = vsel %vm3687, 1, 0
          %v3720 = vsel %vm3688, 1, 0
          %v3721 = vsel %vm3689, 1, 0
          %v3722 = vsel %vm3690, 1, 0
          %v3723 = vsel %vm3691, 1, 0
          %v3724 = vsel %vm3692, 1, 0
          %v3725 = vsel %vm3693, 1, 0
          %v3726 = vsel %vm3694, 1, 0
          %v3727 = vsel %vm3695, 1, 0
          %v3728 = vsel %vm3696, 1, 0
          %v3729 = vsel %vm3697, 1, 0
          %v3730 = vsel %vm3698, 1, 0
          %v3731 = vsel %vm3699, 1, 0
          %v3732 = vsel %vm3700, 1, 0
          %v3733 = vsel %vm3701, 1, 0
          %v3734 = vsel %vm3702, 1, 0
          %v3735 = vsel %vm3703, 1, 0
          %v3736 = vsel %vm3704, 1, 0
          %v3737 = vsel %vm3705, 1, 0
          %v3738 = vcvt.s32.f32 %v3706
          %v3739 = vcvt.s32.f32 %v3707
          %v3740 = vcvt.s32.f32 %v3708
          %v3741 = vcvt.s32.f32 %v3709
          %v3742 = vcvt.s32.f32 %v3710
          %v3743 = vcvt.s32.f32 %v3711
          %v3744 = vcvt.s32.f32 %v3712
          %v3745 = vcvt.s32.f32 %v3713
          %v3746 = vcvt.s32.f32 %v3714
          %v3747 = vcvt.s32.f32 %v3715
          %v3748 = vcvt.s32.f32 %v3716
          %v3749 = vcvt.s32.f32 %v3717
          %v3750 = vcvt.s32.f32 %v3718
          %v3751 = vcvt.s32.f32 %v3719
          %v3752 = vcvt.s32.f32 %v3720
          %v3753 = vcvt.s32.f32 %v3721
          %v3754 = vcvt.s32.f32 %v3722
          %v3755 = vcvt.s32.f32 %v3723
          %v3756 = vcvt.s32.f32 %v3724
          %v3757 = vcvt.s32.f32 %v3725
          %v3758 = vcvt.s32.f32 %v3726
          %v3759 = vcvt.s32.f32 %v3727
          %v3760 = vcvt.s32.f32 %v3728
          %v3761 = vcvt.s32.f32 %v3729
          %v3762 = vcvt.s32.f32 %v3730
          %v3763 = vcvt.s32.f32 %v3731
          %v3764 = vcvt.s32.f32 %v3732
          %v3765 = vcvt.s32.f32 %v3733
          %v3766 = vcvt.s32.f32 %v3734
          %v3767 = vcvt.s32.f32 %v3735
          %v3768 = vcvt.s32.f32 %v3736
          %v3769 = vcvt.s32.f32 %v3737
          %v3770 = vpack.c.bf16 %v3740, %v3738
          %v3771 = vpack.c.bf16 %v3741, %v3739
          %v3772 = vpack.c.bf16 %v3744, %v3742
          %v3773 = vpack.c.bf16 %v3745, %v3743
          %v3774 = vpack.c.bf16 %v3748, %v3746
          %v3775 = vpack.c.bf16 %v3749, %v3747
          %v3776 = vpack.c.bf16 %v3752, %v3750
          %v3777 = vpack.c.bf16 %v3753, %v3751
          %v3778 = vpack.c.bf16 %v3756, %v3754
          %v3779 = vpack.c.bf16 %v3757, %v3755
          %v3780 = vpack.c.bf16 %v3760, %v3758
          %v3781 = vpack.c.bf16 %v3761, %v3759
          %v3782 = vpack.c.bf16 %v3764, %v3762
          %v3783 = vpack.c.bf16 %v3765, %v3763
          %v3784 = vpack.c.bf16 %v3768, %v3766
          %v3785 = vpack.c.bf16 %v3769, %v3767
          %3786 = vmatpush.bf16.msra.mxu0 %v696
          %3787 = vmatpush.bf16.msra.mxu0 %v695
          %3788 = vmatpush.bf16.msra.mxu0 %v694
          %3789 = vmatpush.bf16.msra.mxu0 %v693
          %3790 = vmatpush.bf16.msra.mxu0 %v692
          %3791 = vmatpush.bf16.msra.mxu0 %v691
          %3792 = vmatpush.bf16.msra.mxu0 %v690
          %3793 = vmatpush.bf16.msra.mxu0 %v689
          %3794 = vmatmul.bf16.gmra.mxu0 %v3770
          %v3795 = vpop.f32.mrf.mxu0
          %v3796 = vadd.f32 0.0, %v3795
          %v3797 = vpop.f32.mrf.mxu0
          %v3798 = vadd.f32 0.0, %v3797
          %3799 = vmatmul.bf16.gmra.mxu0 %v3772
          %v3800 = vpop.f32.mrf.mxu0
          %v3801 = vadd.f32 0.0, %v3800
          %v3802 = vpop.f32.mrf.mxu0
          %v3803 = vadd.f32 0.0, %v3802
          %3804 = vmatmul.bf16.gmra.mxu0 %v3774
          %v3805 = vpop.f32.mrf.mxu0
          %v3806 = vadd.f32 0.0, %v3805
          %v3807 = vpop.f32.mrf.mxu0
          %v3808 = vadd.f32 0.0, %v3807
          %3809 = vmatmul.bf16.gmra.mxu0 %v3776
          %v3810 = vpop.f32.mrf.mxu0
          %v3811 = vadd.f32 0.0, %v3810
          %v3812 = vpop.f32.mrf.mxu0
          %v3813 = vadd.f32 0.0, %v3812
          %3814 = vmatmul.bf16.gmra.mxu0 %v3778
          %v3815 = vpop.f32.mrf.mxu0
          %v3816 = vadd.f32 0.0, %v3815
          %v3817 = vpop.f32.mrf.mxu0
          %v3818 = vadd.f32 0.0, %v3817
          %3819 = vmatmul.bf16.gmra.mxu0 %v3780
          %v3820 = vpop.f32.mrf.mxu0
          %v3821 = vadd.f32 0.0, %v3820
          %v3822 = vpop.f32.mrf.mxu0
          %v3823 = vadd.f32 0.0, %v3822
          %3824 = vmatmul.bf16.gmra.mxu0 %v3782
          %v3825 = vpop.f32.mrf.mxu0
          %v3826 = vadd.f32 0.0, %v3825
          %v3827 = vpop.f32.mrf.mxu0
          %v3828 = vadd.f32 0.0, %v3827
          %3829 = vmatmul.bf16.gmra.mxu0 %v3784
          %v3830 = vpop.f32.mrf.mxu0
          %v3831 = vadd.f32 0.0, %v3830
          %v3832 = vpop.f32.mrf.mxu0
          %v3833 = vadd.f32 0.0, %v3832
          %3834 = vdwg.mxu0
          %3835 = vmatpush.bf16.msra.mxu0 %v704
          %3836 = vmatpush.bf16.msra.mxu0 %v703
          %3837 = vmatpush.bf16.msra.mxu0 %v702
          %3838 = vmatpush.bf16.msra.mxu0 %v701
          %3839 = vmatpush.bf16.msra.mxu0 %v700
          %3840 = vmatpush.bf16.msra.mxu0 %v699
          %3841 = vmatpush.bf16.msra.mxu0 %v698
          %3842 = vmatpush.bf16.msra.mxu0 %v697
          %3843 = vmatmul.bf16.gmra.mxu0 %v3771
          %v3844 = vpop.f32.mrf.mxu0
          %v3845 = vadd.f32 %v3796, %v3844
          %v3846 = vpop.f32.mrf.mxu0
          %v3847 = vadd.f32 %v3798, %v3846
          %3848 = vmatmul.bf16.gmra.mxu0 %v3773
          %v3849 = vpop.f32.mrf.mxu0
          %v3850 = vadd.f32 %v3801, %v3849
          %v3851 = vpop.f32.mrf.mxu0
          %v3852 = vadd.f32 %v3803, %v3851
          %3853 = vmatmul.bf16.gmra.mxu0 %v3775
          %v3854 = vpop.f32.mrf.mxu0
          %v3855 = vadd.f32 %v3806, %v3854
          %v3856 = vpop.f32.mrf.mxu0
          %v3857 = vadd.f32 %v3808, %v3856
          %3858 = vmatmul.bf16.gmra.mxu0 %v3777
          %v3859 = vpop.f32.mrf.mxu0
          %v3860 = vadd.f32 %v3811, %v3859
          %v3861 = vpop.f32.mrf.mxu0
          %v3862 = vadd.f32 %v3813, %v3861
          %3863 = vmatmul.bf16.gmra.mxu0 %v3779
          %v3864 = vpop.f32.mrf.mxu0
          %v3865 = vadd.f32 %v3816, %v3864
          %v3866 = vpop.f32.mrf.mxu0
          %v3867 = vadd.f32 %v3818, %v3866
          %3868 = vmatmul.bf16.gmra.mxu0 %v3781
          %v3869 = vpop.f32.mrf.mxu0
          %v3870 = vadd.f32 %v3821, %v3869
          %v3871 = vpop.f32.mrf.mxu0
          %v3872 = vadd.f32 %v3823, %v3871
          %3873 = vmatmul.bf16.gmra.mxu0 %v3783
          %v3874 = vpop.f32.mrf.mxu0
          %v3875 = vadd.f32 %v3826, %v3874
          %v3876 = vpop.f32.mrf.mxu0
          %v3877 = vadd.f32 %v3828, %v3876
          %3878 = vmatmul.bf16.gmra.mxu0 %v3785
          %v3879 = vpop.f32.mrf.mxu0
          %v3880 = vadd.f32 %v3831, %v3879
          %v3881 = vpop.f32.mrf.mxu0
          %v3882 = vadd.f32 %v3833, %v3881
          %3883 = vdwg.mxu0
          %v3884 = vpack.c.bf16 %v3847, %v3845
          %v3885 = vpack.c.bf16 %v3852, %v3850
          %v3886 = vpack.c.bf16 %v3857, %v3855
          %v3887 = vpack.c.bf16 %v3862, %v3860
          %v3888 = vpack.c.bf16 %v3867, %v3865
          %v3889 = vpack.c.bf16 %v3872, %v3870
          %v3890 = vpack.c.bf16 %v3877, %v3875
          %v3891 = vpack.c.bf16 %v3882, %v3880
          %v3892 = vld [vmem:[%s2 + $0x100] sm:$0xf]
          %v3893 = vld [vmem:[%s2 + $0x104] sm:$0xf]
          %v3894 = vld [vmem:[%s2 + $0x108] sm:$0xf]
          %v3895 = vld [vmem:[%s2 + $0x10c] sm:$0xf]
          %v3896 = vld [vmem:[%s2 + $0x110] sm:$0xf]
          %v3897 = vld [vmem:[%s2 + $0x114] sm:$0xf]
          %v3898 = vld [vmem:[%s2 + $0x118] sm:$0xf]
          %v3899 = vld [vmem:[%s2 + $0x11c] sm:$0xf]
          %v3908 = vunpack.c.l.b16 %v3892
          %v3909 = vunpack.c.l.b16 %v3893
          %v3910 = vunpack.c.l.b16 %v3894
          %v3911 = vunpack.c.l.b16 %v3895
          %v3912 = vunpack.c.l.b16 %v3896
          %v3913 = vunpack.c.l.b16 %v3897
          %v3914 = vunpack.c.l.b16 %v3898
          %v3915 = vunpack.c.l.b16 %v3899
          %v3916 = vpack.c.b16 %v3909, %v3908
          %v3917 = vpack.c.b16 %v3911, %v3910
          %v3918 = vpack.c.b16 %v3913, %v3912
          %v3919 = vpack.c.b16 %v3915, %v3914
          %v3925 = vsel %vm1133, %v3884, 0
          %v3928 = vsel %vm1133, %v3885, 0
          %v3931 = vsel %vm1133, %v3886, 0
          %v3934 = vsel %vm1133, %v3887, 0
          %v3937 = vsel %vm1133, %v3888, 0
          %v3940 = vsel %vm1133, %v3889, 0
          %v3943 = vsel %vm1133, %v3890, 0
          %v3946 = vsel %vm1133, %v3891, 0
          %3948 = vmatpush.bf16.msra.mxu0 0
          %3949 = vmatpush.bf16.msra.mxu0 0
          %3950 = vmatpush.bf16.msra.mxu0 0
          %3951 = vmatpush.bf16.msra.mxu0 0
          %3952 = vmatpush.bf16.msra.mxu0 %v3919
          %3953 = vmatpush.bf16.msra.mxu0 %v3918
          %3954 = vmatpush.bf16.msra.mxu0 %v3917
          %3955 = vmatpush.bf16.msra.mxu0 %v3916
          %3956 = vmatmul.bf16.gmra.mxu0 %v3925
          %v3957 = vpop.f32.mrf.mxu0
          %v3958 = vadd.f32 0.0, %v3957
          %v3959 = vpop.f32.mrf.mxu0
          %v3960 = vadd.f32 0.0, %v3959
          %3961 = vmatmul.bf16.gmra.mxu0 %v3928
          %v3962 = vpop.f32.mrf.mxu0
          %v3963 = vadd.f32 0.0, %v3962
          %v3964 = vpop.f32.mrf.mxu0
          %v3965 = vadd.f32 0.0, %v3964
          %3966 = vmatmul.bf16.gmra.mxu0 %v3931
          %v3967 = vpop.f32.mrf.mxu0
          %v3968 = vadd.f32 0.0, %v3967
          %v3969 = vpop.f32.mrf.mxu0
          %v3970 = vadd.f32 0.0, %v3969
          %3971 = vmatmul.bf16.gmra.mxu0 %v3934
          %v3972 = vpop.f32.mrf.mxu0
          %v3973 = vadd.f32 0.0, %v3972
          %v3974 = vpop.f32.mrf.mxu0
          %v3975 = vadd.f32 0.0, %v3974
          %3976 = vmatmul.bf16.gmra.mxu0 %v3937
          %v3977 = vpop.f32.mrf.mxu0
          %v3978 = vadd.f32 0.0, %v3977
          %v3979 = vpop.f32.mrf.mxu0
          %v3980 = vadd.f32 0.0, %v3979
          %3981 = vmatmul.bf16.gmra.mxu0 %v3940
          %v3982 = vpop.f32.mrf.mxu0
          %v3983 = vadd.f32 0.0, %v3982
          %v3984 = vpop.f32.mrf.mxu0
          %v3985 = vadd.f32 0.0, %v3984
          %3986 = vmatmul.bf16.gmra.mxu0 %v3943
          %v3987 = vpop.f32.mrf.mxu0
          %v3988 = vadd.f32 0.0, %v3987
          %v3989 = vpop.f32.mrf.mxu0
          %v3990 = vadd.f32 0.0, %v3989
          %3991 = vmatmul.bf16.gmra.mxu0 %v3946
          %v3992 = vpop.f32.mrf.mxu0
          %v3993 = vadd.f32 0.0, %v3992
          %v3994 = vpop.f32.mrf.mxu0
          %v3995 = vadd.f32 0.0, %v3994
          %3996 = vdwg.mxu0
          %v3997 = vadd.f32 %v3610, %v3958
          %v3998 = vadd.f32 %v3611, %v3960
          %v3999 = vadd.f32 %v3612, %v3963
          %v4000 = vadd.f32 %v3613, %v3965
          %v4001 = vadd.f32 %v3614, %v3968
          %v4002 = vadd.f32 %v3615, %v3970
          %v4003 = vadd.f32 %v3616, %v3973
          %v4004 = vadd.f32 %v3617, %v3975
          %v4005 = vadd.f32 %v3618, %v3978
          %v4006 = vadd.f32 %v3619, %v3980
          %v4007 = vadd.f32 %v3620, %v3983
          %v4008 = vadd.f32 %v3621, %v3985
          %v4009 = vadd.f32 %v3622, %v3988
          %v4010 = vadd.f32 %v3623, %v3990
          %v4011 = vadd.f32 %v3624, %v3993
          %v4012 = vadd.f32 %v3625, %v3995
          %4013 = vset.pattern.permute.xlu0 9
          %4014 = vperm.xlu0 %4013, %v414
          %v4015 = vpop.permute.xlu0 %4014
          %4016 = vset.pattern.permute.xlu0 9
          %4017 = vperm.xlu0 %4016, %v415
          %v4018 = vpop.permute.xlu0 %4017
          %4019 = vset.pattern.permute.xlu0 9
          %4020 = vperm.xlu0 %4019, %v416
          %v4021 = vpop.permute.xlu0 %4020
          %4022 = vset.pattern.permute.xlu0 9
          %4023 = vperm.xlu0 %4022, %v417
          %v4024 = vpop.permute.xlu0 %4023
          %4025 = vset.pattern.permute.xlu0 9
          %4026 = vperm.xlu0 %4025, %v418
          %v4027 = vpop.permute.xlu0 %4026
          %4028 = vset.pattern.permute.xlu0 9
          %4029 = vperm.xlu0 %4028, %v419
          %v4030 = vpop.permute.xlu0 %4029
          %4031 = vset.pattern.permute.xlu0 9
          %4032 = vperm.xlu0 %4031, %v420
          %v4033 = vpop.permute.xlu0 %4032
          %4034 = vset.pattern.permute.xlu0 9
          %4035 = vperm.xlu0 %4034, %v421
          %v4036 = vpop.permute.xlu0 %4035
          %4037 = vset.pattern.permute.xlu0 9
          %4038 = vperm.xlu0 %4037, %v422
          %v4039 = vpop.permute.xlu0 %4038
          %4040 = vset.pattern.permute.xlu0 9
          %4041 = vperm.xlu0 %4040, %v423
          %v4042 = vpop.permute.xlu0 %4041
          %4043 = vset.pattern.permute.xlu0 9
          %4044 = vperm.xlu0 %4043, %v424
          %v4045 = vpop.permute.xlu0 %4044
          %4046 = vset.pattern.permute.xlu0 9
          %4047 = vperm.xlu0 %4046, %v425
          %v4048 = vpop.permute.xlu0 %4047
          %4049 = vset.pattern.permute.xlu0 9
          %4050 = vperm.xlu0 %4049, %v426
          %v4051 = vpop.permute.xlu0 %4050
          %4052 = vset.pattern.permute.xlu0 9
          %4053 = vperm.xlu0 %4052, %v427
          %v4054 = vpop.permute.xlu0 %4053
          %4055 = vset.pattern.permute.xlu0 9
          %4056 = vperm.xlu0 %4055, %v428
          %v4057 = vpop.permute.xlu0 %4056
          %4058 = vset.pattern.permute.xlu0 9
          %4059 = vperm.xlu0 %4058, %v429
          %v4060 = vpop.permute.xlu0 %4059
          %vm4061 = vcmp.eq.s32.totalorder %v4015, %v463
          %vm4062 = vcmp.eq.s32.totalorder %v4015, %v464
          %vm4063 = vcmp.eq.s32.totalorder %v4018, %v463
          %vm4064 = vcmp.eq.s32.totalorder %v4018, %v464
          %vm4065 = vcmp.eq.s32.totalorder %v4021, %v463
          %vm4066 = vcmp.eq.s32.totalorder %v4021, %v464
          %vm4067 = vcmp.eq.s32.totalorder %v4024, %v463
          %vm4068 = vcmp.eq.s32.totalorder %v4024, %v464
          %vm4069 = vcmp.eq.s32.totalorder %v4027, %v463
          %vm4070 = vcmp.eq.s32.totalorder %v4027, %v464
          %vm4071 = vcmp.eq.s32.totalorder %v4030, %v463
          %vm4072 = vcmp.eq.s32.totalorder %v4030, %v464
          %vm4073 = vcmp.eq.s32.totalorder %v4033, %v463
          %vm4074 = vcmp.eq.s32.totalorder %v4033, %v464
          %vm4075 = vcmp.eq.s32.totalorder %v4036, %v463
          %vm4076 = vcmp.eq.s32.totalorder %v4036, %v464
          %vm4077 = vcmp.eq.s32.totalorder %v4039, %v463
          %vm4078 = vcmp.eq.s32.totalorder %v4039, %v464
          %vm4079 = vcmp.eq.s32.totalorder %v4042, %v463
          %vm4080 = vcmp.eq.s32.totalorder %v4042, %v464
          %vm4081 = vcmp.eq.s32.totalorder %v4045, %v463
          %vm4082 = vcmp.eq.s32.totalorder %v4045, %v464
          %vm4083 = vcmp.eq.s32.totalorder %v4048, %v463
          %vm4084 = vcmp.eq.s32.totalorder %v4048, %v464
          %vm4085 = vcmp.eq.s32.totalorder %v4051, %v463
          %vm4086 = vcmp.eq.s32.totalorder %v4051, %v464
          %vm4087 = vcmp.eq.s32.totalorder %v4054, %v463
          %vm4088 = vcmp.eq.s32.totalorder %v4054, %v464
          %vm4089 = vcmp.eq.s32.totalorder %v4057, %v463
          %vm4090 = vcmp.eq.s32.totalorder %v4057, %v464
          %vm4091 = vcmp.eq.s32.totalorder %v4060, %v463
          %vm4092 = vcmp.eq.s32.totalorder %v4060, %v464
          %v4093 = vsel %vm4061, 1, 0
          %v4094 = vsel %vm4062, 1, 0
          %v4095 = vsel %vm4063, 1, 0
          %v4096 = vsel %vm4064, 1, 0
          %v4097 = vsel %vm4065, 1, 0
          %v4098 = vsel %vm4066, 1, 0
          %v4099 = vsel %vm4067, 1, 0
          %v4100 = vsel %vm4068, 1, 0
          %v4101 = vsel %vm4069, 1, 0
          %v4102 = vsel %vm4070, 1, 0
          %v4103 = vsel %vm4071, 1, 0
          %v4104 = vsel %vm4072, 1, 0
          %v4105 = vsel %vm4073, 1, 0
          %v4106 = vsel %vm4074, 1, 0
          %v4107 = vsel %vm4075, 1, 0
          %v4108 = vsel %vm4076, 1, 0
          %v4109 = vsel %vm4077, 1, 0
          %v4110 = vsel %vm4078, 1, 0
          %v4111 = vsel %vm4079, 1, 0
          %v4112 = vsel %vm4080, 1, 0
          %v4113 = vsel %vm4081, 1, 0
          %v4114 = vsel %vm4082, 1, 0
          %v4115 = vsel %vm4083, 1, 0
          %v4116 = vsel %vm4084, 1, 0
          %v4117 = vsel %vm4085, 1, 0
          %v4118 = vsel %vm4086, 1, 0
          %v4119 = vsel %vm4087, 1, 0
          %v4120 = vsel %vm4088, 1, 0
          %v4121 = vsel %vm4089, 1, 0
          %v4122 = vsel %vm4090, 1, 0
          %v4123 = vsel %vm4091, 1, 0
          %v4124 = vsel %vm4092, 1, 0
          %v4125 = vcvt.s32.f32 %v4093
          %v4126 = vcvt.s32.f32 %v4094
          %v4127 = vcvt.s32.f32 %v4095
          %v4128 = vcvt.s32.f32 %v4096
          %v4129 = vcvt.s32.f32 %v4097
          %v4130 = vcvt.s32.f32 %v4098
          %v4131 = vcvt.s32.f32 %v4099
          %v4132 = vcvt.s32.f32 %v4100
          %v4133 = vcvt.s32.f32 %v4101
          %v4134 = vcvt.s32.f32 %v4102
          %v4135 = vcvt.s32.f32 %v4103
          %v4136 = vcvt.s32.f32 %v4104
          %v4137 = vcvt.s32.f32 %v4105
          %v4138 = vcvt.s32.f32 %v4106
          %v4139 = vcvt.s32.f32 %v4107
          %v4140 = vcvt.s32.f32 %v4108
          %v4141 = vcvt.s32.f32 %v4109
          %v4142 = vcvt.s32.f32 %v4110
          %v4143 = vcvt.s32.f32 %v4111
          %v4144 = vcvt.s32.f32 %v4112
          %v4145 = vcvt.s32.f32 %v4113
          %v4146 = vcvt.s32.f32 %v4114
          %v4147 = vcvt.s32.f32 %v4115
          %v4148 = vcvt.s32.f32 %v4116
          %v4149 = vcvt.s32.f32 %v4117
          %v4150 = vcvt.s32.f32 %v4118
          %v4151 = vcvt.s32.f32 %v4119
          %v4152 = vcvt.s32.f32 %v4120
          %v4153 = vcvt.s32.f32 %v4121
          %v4154 = vcvt.s32.f32 %v4122
          %v4155 = vcvt.s32.f32 %v4123
          %v4156 = vcvt.s32.f32 %v4124
          %v4157 = vpack.c.bf16 %v4127, %v4125
          %v4158 = vpack.c.bf16 %v4128, %v4126
          %v4159 = vpack.c.bf16 %v4131, %v4129
          %v4160 = vpack.c.bf16 %v4132, %v4130
          %v4161 = vpack.c.bf16 %v4135, %v4133
          %v4162 = vpack.c.bf16 %v4136, %v4134
          %v4163 = vpack.c.bf16 %v4139, %v4137
          %v4164 = vpack.c.bf16 %v4140, %v4138
          %v4165 = vpack.c.bf16 %v4143, %v4141
          %v4166 = vpack.c.bf16 %v4144, %v4142
          %v4167 = vpack.c.bf16 %v4147, %v4145
          %v4168 = vpack.c.bf16 %v4148, %v4146
          %v4169 = vpack.c.bf16 %v4151, %v4149
          %v4170 = vpack.c.bf16 %v4152, %v4150
          %v4171 = vpack.c.bf16 %v4155, %v4153
          %v4172 = vpack.c.bf16 %v4156, %v4154
          %4173 = vmatpush.bf16.msra.mxu0 %v696
          %4174 = vmatpush.bf16.msra.mxu0 %v695
          %4175 = vmatpush.bf16.msra.mxu0 %v694
          %4176 = vmatpush.bf16.msra.mxu0 %v693
          %4177 = vmatpush.bf16.msra.mxu0 %v692
          %4178 = vmatpush.bf16.msra.mxu0 %v691
          %4179 = vmatpush.bf16.msra.mxu0 %v690
          %4180 = vmatpush.bf16.msra.mxu0 %v689
          %4181 = vmatmul.bf16.gmra.mxu0 %v4157
          %v4182 = vpop.f32.mrf.mxu0
          %v4183 = vadd.f32 0.0, %v4182
          %v4184 = vpop.f32.mrf.mxu0
          %v4185 = vadd.f32 0.0, %v4184
          %4186 = vmatmul.bf16.gmra.mxu0 %v4159
          %v4187 = vpop.f32.mrf.mxu0
          %v4188 = vadd.f32 0.0, %v4187
          %v4189 = vpop.f32.mrf.mxu0
          %v4190 = vadd.f32 0.0, %v4189
          %4191 = vmatmul.bf16.gmra.mxu0 %v4161
          %v4192 = vpop.f32.mrf.mxu0
          %v4193 = vadd.f32 0.0, %v4192
          %v4194 = vpop.f32.mrf.mxu0
          %v4195 = vadd.f32 0.0, %v4194
          %4196 = vmatmul.bf16.gmra.mxu0 %v4163
          %v4197 = vpop.f32.mrf.mxu0
          %v4198 = vadd.f32 0.0, %v4197
          %v4199 = vpop.f32.mrf.mxu0
          %v4200 = vadd.f32 0.0, %v4199
          %4201 = vmatmul.bf16.gmra.mxu0 %v4165
          %v4202 = vpop.f32.mrf.mxu0
          %v4203 = vadd.f32 0.0, %v4202
          %v4204 = vpop.f32.mrf.mxu0
          %v4205 = vadd.f32 0.0, %v4204
          %4206 = vmatmul.bf16.gmra.mxu0 %v4167
          %v4207 = vpop.f32.mrf.mxu0
          %v4208 = vadd.f32 0.0, %v4207
          %v4209 = vpop.f32.mrf.mxu0
          %v4210 = vadd.f32 0.0, %v4209
          %4211 = vmatmul.bf16.gmra.mxu0 %v4169
          %v4212 = vpop.f32.mrf.mxu0
          %v4213 = vadd.f32 0.0, %v4212
          %v4214 = vpop.f32.mrf.mxu0
          %v4215 = vadd.f32 0.0, %v4214
          %4216 = vmatmul.bf16.gmra.mxu0 %v4171
          %v4217 = vpop.f32.mrf.mxu0
          %v4218 = vadd.f32 0.0, %v4217
          %v4219 = vpop.f32.mrf.mxu0
          %v4220 = vadd.f32 0.0, %v4219
          %4221 = vdwg.mxu0
          %4222 = vmatpush.bf16.msra.mxu0 %v704
          %4223 = vmatpush.bf16.msra.mxu0 %v703
          %4224 = vmatpush.bf16.msra.mxu0 %v702
          %4225 = vmatpush.bf16.msra.mxu0 %v701
          %4226 = vmatpush.bf16.msra.mxu0 %v700
          %4227 = vmatpush.bf16.msra.mxu0 %v699
          %4228 = vmatpush.bf16.msra.mxu0 %v698
          %4229 = vmatpush.bf16.msra.mxu0 %v697
          %4230 = vmatmul.bf16.gmra.mxu0 %v4158
          %v4231 = vpop.f32.mrf.mxu0
          %v4232 = vadd.f32 %v4183, %v4231
          %v4233 = vpop.f32.mrf.mxu0
          %v4234 = vadd.f32 %v4185, %v4233
          %4235 = vmatmul.bf16.gmra.mxu0 %v4160
          %v4236 = vpop.f32.mrf.mxu0
          %v4237 = vadd.f32 %v4188, %v4236
          %v4238 = vpop.f32.mrf.mxu0
          %v4239 = vadd.f32 %v4190, %v4238
          %4240 = vmatmul.bf16.gmra.mxu0 %v4162
          %v4241 = vpop.f32.mrf.mxu0
          %v4242 = vadd.f32 %v4193, %v4241
          %v4243 = vpop.f32.mrf.mxu0
          %v4244 = vadd.f32 %v4195, %v4243
          %4245 = vmatmul.bf16.gmra.mxu0 %v4164
          %v4246 = vpop.f32.mrf.mxu0
          %v4247 = vadd.f32 %v4198, %v4246
          %v4248 = vpop.f32.mrf.mxu0
          %v4249 = vadd.f32 %v4200, %v4248
          %4250 = vmatmul.bf16.gmra.mxu0 %v4166
          %v4251 = vpop.f32.mrf.mxu0
          %v4252 = vadd.f32 %v4203, %v4251
          %v4253 = vpop.f32.mrf.mxu0
          %v4254 = vadd.f32 %v4205, %v4253
          %4255 = vmatmul.bf16.gmra.mxu0 %v4168
          %v4256 = vpop.f32.mrf.mxu0
          %v4257 = vadd.f32 %v4208, %v4256
          %v4258 = vpop.f32.mrf.mxu0
          %v4259 = vadd.f32 %v4210, %v4258
          %4260 = vmatmul.bf16.gmra.mxu0 %v4170
          %v4261 = vpop.f32.mrf.mxu0
          %v4262 = vadd.f32 %v4213, %v4261
          %v4263 = vpop.f32.mrf.mxu0
          %v4264 = vadd.f32 %v4215, %v4263
          %4265 = vmatmul.bf16.gmra.mxu0 %v4172
          %v4266 = vpop.f32.mrf.mxu0
          %v4267 = vadd.f32 %v4218, %v4266
          %v4268 = vpop.f32.mrf.mxu0
          %v4269 = vadd.f32 %v4220, %v4268
          %4270 = vdwg.mxu0
          %v4271 = vpack.c.bf16 %v4234, %v4232
          %v4272 = vpack.c.bf16 %v4239, %v4237
          %v4273 = vpack.c.bf16 %v4244, %v4242
          %v4274 = vpack.c.bf16 %v4249, %v4247
          %v4275 = vpack.c.bf16 %v4254, %v4252
          %v4276 = vpack.c.bf16 %v4259, %v4257
          %v4277 = vpack.c.bf16 %v4264, %v4262
          %v4278 = vpack.c.bf16 %v4269, %v4267
          %v4279 = vld [vmem:[%s2 + $0x120] sm:$0xf]
          %v4280 = vld [vmem:[%s2 + $0x124] sm:$0xf]
          %v4281 = vld [vmem:[%s2 + $0x128] sm:$0xf]
          %v4282 = vld [vmem:[%s2 + $0x12c] sm:$0xf]
          %v4283 = vld [vmem:[%s2 + $0x130] sm:$0xf]
          %v4284 = vld [vmem:[%s2 + $0x134] sm:$0xf]
          %v4285 = vld [vmem:[%s2 + $0x138] sm:$0xf]
          %v4286 = vld [vmem:[%s2 + $0x13c] sm:$0xf]
          %v4295 = vunpack.c.l.b16 %v4279
          %v4296 = vunpack.c.l.b16 %v4280
          %v4297 = vunpack.c.l.b16 %v4281
          %v4298 = vunpack.c.l.b16 %v4282
          %v4299 = vunpack.c.l.b16 %v4283
          %v4300 = vunpack.c.l.b16 %v4284
          %v4301 = vunpack.c.l.b16 %v4285
          %v4302 = vunpack.c.l.b16 %v4286
          %v4303 = vpack.c.b16 %v4296, %v4295
          %v4304 = vpack.c.b16 %v4298, %v4297
          %v4305 = vpack.c.b16 %v4300, %v4299
          %v4306 = vpack.c.b16 %v4302, %v4301
          %v4312 = vsel %vm1133, %v4271, 0
          %v4315 = vsel %vm1133, %v4272, 0
          %v4318 = vsel %vm1133, %v4273, 0
          %v4321 = vsel %vm1133, %v4274, 0
          %v4324 = vsel %vm1133, %v4275, 0
          %v4327 = vsel %vm1133, %v4276, 0
          %v4330 = vsel %vm1133, %v4277, 0
          %v4333 = vsel %vm1133, %v4278, 0
          %4335 = vmatpush.bf16.msra.mxu0 0
          %4336 = vmatpush.bf16.msra.mxu0 0
          %4337 = vmatpush.bf16.msra.mxu0 0
          %4338 = vmatpush.bf16.msra.mxu0 0
          %4339 = vmatpush.bf16.msra.mxu0 %v4306
          %4340 = vmatpush.bf16.msra.mxu0 %v4305
          %4341 = vmatpush.bf16.msra.mxu0 %v4304
          %4342 = vmatpush.bf16.msra.mxu0 %v4303
          %4343 = vmatmul.bf16.gmra.mxu0 %v4312
          %v4344 = vpop.f32.mrf.mxu0
          %v4345 = vadd.f32 0.0, %v4344
          %v4346 = vpop.f32.mrf.mxu0
          %v4347 = vadd.f32 0.0, %v4346
          %4348 = vmatmul.bf16.gmra.mxu0 %v4315
          %v4349 = vpop.f32.mrf.mxu0
          %v4350 = vadd.f32 0.0, %v4349
          %v4351 = vpop.f32.mrf.mxu0
          %v4352 = vadd.f32 0.0, %v4351
          %4353 = vmatmul.bf16.gmra.mxu0 %v4318
          %v4354 = vpop.f32.mrf.mxu0
          %v4355 = vadd.f32 0.0, %v4354
          %v4356 = vpop.f32.mrf.mxu0
          %v4357 = vadd.f32 0.0, %v4356
          %4358 = vmatmul.bf16.gmra.mxu0 %v4321
          %v4359 = vpop.f32.mrf.mxu0
          %v4360 = vadd.f32 0.0, %v4359
          %v4361 = vpop.f32.mrf.mxu0
          %v4362 = vadd.f32 0.0, %v4361
          %4363 = vmatmul.bf16.gmra.mxu0 %v4324
          %v4364 = vpop.f32.mrf.mxu0
          %v4365 = vadd.f32 0.0, %v4364
          %v4366 = vpop.f32.mrf.mxu0
          %v4367 = vadd.f32 0.0, %v4366
          %4368 = vmatmul.bf16.gmra.mxu0 %v4327
          %v4369 = vpop.f32.mrf.mxu0
          %v4370 = vadd.f32 0.0, %v4369
          %v4371 = vpop.f32.mrf.mxu0
          %v4372 = vadd.f32 0.0, %v4371
          %4373 = vmatmul.bf16.gmra.mxu0 %v4330
          %v4374 = vpop.f32.mrf.mxu0
          %v4375 = vadd.f32 0.0, %v4374
          %v4376 = vpop.f32.mrf.mxu0
          %v4377 = vadd.f32 0.0, %v4376
          %4378 = vmatmul.bf16.gmra.mxu0 %v4333
          %v4379 = vpop.f32.mrf.mxu0
          %v4380 = vadd.f32 0.0, %v4379
          %v4381 = vpop.f32.mrf.mxu0
          %v4382 = vadd.f32 0.0, %v4381
          %4383 = vdwg.mxu0
          %v4384 = vadd.f32 %v3997, %v4345
          %v4385 = vadd.f32 %v3998, %v4347
          %v4386 = vadd.f32 %v3999, %v4350
          %v4387 = vadd.f32 %v4000, %v4352
          %v4388 = vadd.f32 %v4001, %v4355
          %v4389 = vadd.f32 %v4002, %v4357
          %v4390 = vadd.f32 %v4003, %v4360
          %v4391 = vadd.f32 %v4004, %v4362
          %v4392 = vadd.f32 %v4005, %v4365
          %v4393 = vadd.f32 %v4006, %v4367
          %v4394 = vadd.f32 %v4007, %v4370
          %v4395 = vadd.f32 %v4008, %v4372
          %v4396 = vadd.f32 %v4009, %v4375
          %v4397 = vadd.f32 %v4010, %v4377
          %v4398 = vadd.f32 %v4011, %v4380
          %v4399 = vadd.f32 %v4012, %v4382
          %v4400 = vld [vmem:[#allocation3] sm:$0x1]
          %v4402 = vperm.slane %v4400, 0
          %v4404 = vadd.f32 %v4384, %v4402
          %v4405 = vadd.f32 %v4385, %v4402
          %v4406 = vadd.f32 %v4386, %v4402
          %v4407 = vadd.f32 %v4387, %v4402
          %v4408 = vadd.f32 %v4388, %v4402
          %v4409 = vadd.f32 %v4389, %v4402
          %v4410 = vadd.f32 %v4390, %v4402
          %v4411 = vadd.f32 %v4391, %v4402
          %v4412 = vadd.f32 %v4392, %v4402
          %v4413 = vadd.f32 %v4393, %v4402
          %v4414 = vadd.f32 %v4394, %v4402
          %v4415 = vadd.f32 %v4395, %v4402
          %v4416 = vadd.f32 %v4396, %v4402
          %v4417 = vadd.f32 %v4397, %v4402
          %v4418 = vadd.f32 %v4398, %v4402
          %v4419 = vadd.f32 %v4399, %v4402
          %v4420 = vmax.f32 %v4404, 0.0
          %v4421 = vmax.f32 %v4405, 0.0
          %v4422 = vmax.f32 %v4406, 0.0
          %v4423 = vmax.f32 %v4407, 0.0
          %v4424 = vmax.f32 %v4408, 0.0
          %v4425 = vmax.f32 %v4409, 0.0
          %v4426 = vmax.f32 %v4410, 0.0
          %v4427 = vmax.f32 %v4411, 0.0
          %v4428 = vmax.f32 %v4412, 0.0
          %v4429 = vmax.f32 %v4413, 0.0
          %v4430 = vmax.f32 %v4414, 0.0
          %v4431 = vmax.f32 %v4415, 0.0
          %v4432 = vmax.f32 %v4416, 0.0
          %v4433 = vmax.f32 %v4417, 0.0
          %v4434 = vmax.f32 %v4418, 0.0
          %v4435 = vmax.f32 %v4419, 0.0
          %v4436 = vpack.c.bf16 %v4421, %v4420
          %v4437 = vpack.c.bf16 %v4423, %v4422
          %v4438 = vpack.c.bf16 %v4425, %v4424
          %v4439 = vpack.c.bf16 %v4427, %v4426
          %v4440 = vpack.c.bf16 %v4429, %v4428
          %v4441 = vpack.c.bf16 %v4431, %v4430
          %v4442 = vpack.c.bf16 %v4433, %v4432
          %v4443 = vpack.c.bf16 %v4435, %v4434
          %v4444 = vld [vmem:[#allocation6] sm:$0xf]
          %v4445 = vld [vmem:[#allocation6 + $0x4] sm:$0xf]
          %v4446 = vld [vmem:[#allocation6 + $0x8] sm:$0xf]
          %v4447 = vld [vmem:[#allocation6 + $0xc] sm:$0xf]
          %v4448 = vld [vmem:[#allocation6 + $0x10] sm:$0xf]
          %v4449 = vld [vmem:[#allocation6 + $0x14] sm:$0xf]
          %v4450 = vld [vmem:[#allocation6 + $0x18] sm:$0xf]
          %v4451 = vld [vmem:[#allocation6 + $0x1c] sm:$0xf]
          %v4452 = vld [vmem:[#allocation6 + $0x20] sm:$0xf]
          %v4453 = vld [vmem:[#allocation6 + $0x24] sm:$0xf]
          %v4454 = vld [vmem:[#allocation6 + $0x28] sm:$0xf]
          %v4455 = vld [vmem:[#allocation6 + $0x2c] sm:$0xf]
          %v4456 = vld [vmem:[#allocation6 + $0x30] sm:$0xf]
          %v4457 = vld [vmem:[#allocation6 + $0x34] sm:$0xf]
          %v4458 = vld [vmem:[#allocation6 + $0x38] sm:$0xf]
          %v4459 = vld [vmem:[#allocation6 + $0x3c] sm:$0xf]
          %v4460 = vld [vmem:[#allocation8] sm:$0x1]
          %v4462 = vperm.slane %v4460, 0
          %v4480 = vunpack.c.l.b16 %v4444
          %v4481 = vunpack.c.l.b16 %v4445
          %v4482 = vunpack.c.l.b16 %v4446
          %v4483 = vunpack.c.l.b16 %v4447
          %v4484 = vunpack.c.l.b16 %v4448
          %v4485 = vunpack.c.l.b16 %v4449
          %v4486 = vunpack.c.l.b16 %v4450
          %v4487 = vunpack.c.l.b16 %v4451
          %v4488 = vunpack.c.l.b16 %v4452
          %v4489 = vunpack.c.l.b16 %v4453
          %v4490 = vunpack.c.l.b16 %v4454
          %v4491 = vunpack.c.l.b16 %v4455
          %v4492 = vunpack.c.l.b16 %v4456
          %v4493 = vunpack.c.l.b16 %v4457
          %v4494 = vunpack.c.l.b16 %v4458
          %v4495 = vunpack.c.l.b16 %v4459
          %v4496 = vpack.c.b16 %v4481, %v4480
          %v4497 = vpack.c.b16 %v4483, %v4482
          %v4498 = vpack.c.b16 %v4485, %v4484
          %v4499 = vpack.c.b16 %v4487, %v4486
          %v4500 = vpack.c.b16 %v4489, %v4488
          %v4501 = vpack.c.b16 %v4491, %v4490
          %v4502 = vpack.c.b16 %v4493, %v4492
          %v4503 = vpack.c.b16 %v4495, %v4494
          %4512 = vmatpush.bf16.msra.mxu0 %v4503
          %4513 = vmatpush.bf16.msra.mxu0 %v4502
          %4514 = vmatpush.bf16.msra.mxu0 %v4501
          %4515 = vmatpush.bf16.msra.mxu0 %v4500
          %4516 = vmatpush.bf16.msra.mxu0 %v4499
          %4517 = vmatpush.bf16.msra.mxu0 %v4498
          %4518 = vmatpush.bf16.msra.mxu0 %v4497
          %4519 = vmatpush.bf16.msra.mxu0 %v4496
          %4520 = vmatmul.bf16.gmra.mxu0 %v4436
          %v4521 = vpop.f32.mrf.mxu0
          %v4522 = vadd.f32 %v4462, %v4521
          %v4523 = vpop.f32.mrf.mxu0
          %v4524 = vadd.f32 %v4462, %v4523
          %4525 = vmatmul.bf16.gmra.mxu0 %v4437
          %v4526 = vpop.f32.mrf.mxu0
          %v4527 = vadd.f32 %v4462, %v4526
          %v4528 = vpop.f32.mrf.mxu0
          %v4529 = vadd.f32 %v4462, %v4528
          %4530 = vmatmul.bf16.gmra.mxu0 %v4438
          %v4531 = vpop.f32.mrf.mxu0
          %v4532 = vadd.f32 %v4462, %v4531
          %v4533 = vpop.f32.mrf.mxu0
          %v4534 = vadd.f32 %v4462, %v4533
          %4535 = vmatmul.bf16.gmra.mxu0 %v4439
          %v4536 = vpop.f32.mrf.mxu0
          %v4537 = vadd.f32 %v4462, %v4536
          %v4538 = vpop.f32.mrf.mxu0
          %v4539 = vadd.f32 %v4462, %v4538
          %4540 = vmatmul.bf16.gmra.mxu0 %v4440
          %v4541 = vpop.f32.mrf.mxu0
          %v4542 = vadd.f32 %v4462, %v4541
          %v4543 = vpop.f32.mrf.mxu0
          %v4544 = vadd.f32 %v4462, %v4543
          %4545 = vmatmul.bf16.gmra.mxu0 %v4441
          %v4546 = vpop.f32.mrf.mxu0
          %v4547 = vadd.f32 %v4462, %v4546
          %v4548 = vpop.f32.mrf.mxu0
          %v4549 = vadd.f32 %v4462, %v4548
          %4550 = vmatmul.bf16.gmra.mxu0 %v4442
          %v4551 = vpop.f32.mrf.mxu0
          %v4552 = vadd.f32 %v4462, %v4551
          %v4553 = vpop.f32.mrf.mxu0
          %v4554 = vadd.f32 %v4462, %v4553
          %4555 = vmatmul.bf16.gmra.mxu0 %v4443
          %v4556 = vpop.f32.mrf.mxu0
          %v4557 = vadd.f32 %v4462, %v4556
          %v4558 = vpop.f32.mrf.mxu0
          %v4559 = vadd.f32 %v4462, %v4558
          %4560 = vdwg.mxu0
          %v4561 = vmax.f32 %v4522, 0.0
          %v4562 = vmax.f32 %v4524, 0.0
          %v4563 = vmax.f32 %v4527, 0.0
          %v4564 = vmax.f32 %v4529, 0.0
          %v4565 = vmax.f32 %v4532, 0.0
          %v4566 = vmax.f32 %v4534, 0.0
          %v4567 = vmax.f32 %v4537, 0.0
          %v4568 = vmax.f32 %v4539, 0.0
          %v4569 = vmax.f32 %v4542, 0.0
          %v4570 = vmax.f32 %v4544, 0.0
          %v4571 = vmax.f32 %v4547, 0.0
          %v4572 = vmax.f32 %v4549, 0.0
          %v4573 = vmax.f32 %v4552, 0.0
          %v4574 = vmax.f32 %v4554, 0.0
          %v4575 = vmax.f32 %v4557, 0.0
          %v4576 = vmax.f32 %v4559, 0.0
          %v4577 = vpack.c.bf16 %v4561, %v4561
          %v4578 = vpack.c.bf16 %v4562, %v4562
          %v4579 = vpack.c.bf16 %v4563, %v4563
          %v4580 = vpack.c.bf16 %v4564, %v4564
          %v4581 = vpack.c.bf16 %v4565, %v4565
          %v4582 = vpack.c.bf16 %v4566, %v4566
          %v4583 = vpack.c.bf16 %v4567, %v4567
          %v4584 = vpack.c.bf16 %v4568, %v4568
          %v4585 = vpack.c.bf16 %v4569, %v4569
          %v4586 = vpack.c.bf16 %v4570, %v4570
          %v4587 = vpack.c.bf16 %v4571, %v4571
          %v4588 = vpack.c.bf16 %v4572, %v4572
          %v4589 = vpack.c.bf16 %v4573, %v4573
          %v4590 = vpack.c.bf16 %v4574, %v4574
          %v4591 = vpack.c.bf16 %v4575, %v4575
          %v4592 = vpack.c.bf16 %v4576, %v4576
          %4593 = vst [vmem:[#allocation2] sm:$0xf] %v4577
          %4594 = vst [vmem:[#allocation2 + $0x4] sm:$0xf] %v4578
          %4595 = vst [vmem:[#allocation2 + $0x8] sm:$0xf] %v4579
          %4596 = vst [vmem:[#allocation2 + $0xc] sm:$0xf] %v4580
          %4597 = vst [vmem:[#allocation2 + $0x10] sm:$0xf] %v4581
          %4598 = vst [vmem:[#allocation2 + $0x14] sm:$0xf] %v4582
          %4599 = vst [vmem:[#allocation2 + $0x18] sm:$0xf] %v4583
          %4600 = vst [vmem:[#allocation2 + $0x1c] sm:$0xf] %v4584
          %4601 = vst [vmem:[#allocation2 + $0x20] sm:$0xf] %v4585
          %4602 = vst [vmem:[#allocation2 + $0x24] sm:$0xf] %v4586
          %4603 = vst [vmem:[#allocation2 + $0x28] sm:$0xf] %v4587
          %4604 = vst [vmem:[#allocation2 + $0x2c] sm:$0xf] %v4588
          %4605 = vst [vmem:[#allocation2 + $0x30] sm:$0xf] %v4589
          %4606 = vst [vmem:[#allocation2 + $0x34] sm:$0xf] %v4590
          %4607 = vst [vmem:[#allocation2 + $0x38] sm:$0xf] %v4591
          %4608 = vst [vmem:[#allocation2 + $0x3c] sm:$0xf] %v4592
        $region68: #{tpu_custom_call.1} parent=51 // pred_fallthru
          _
        %v4609 = vld [vmem:[#allocation2] sm:$0xf]
        %v4610 = vld [vmem:[#allocation2 + $0x4] sm:$0xf]
        %v4611 = vld [vmem:[#allocation2 + $0x8] sm:$0xf]
        %v4612 = vld [vmem:[#allocation2 + $0xc] sm:$0xf]
        %v4613 = vld [vmem:[#allocation2 + $0x10] sm:$0xf]
        %v4614 = vld [vmem:[#allocation2 + $0x14] sm:$0xf]
        %v4615 = vld [vmem:[#allocation2 + $0x18] sm:$0xf]
        %v4616 = vld [vmem:[#allocation2 + $0x1c] sm:$0xf]
        %v4617 = vld [vmem:[#allocation2 + $0x20] sm:$0xf]
        %v4618 = vld [vmem:[#allocation2 + $0x24] sm:$0xf]
        %v4619 = vld [vmem:[#allocation2 + $0x28] sm:$0xf]
        %v4620 = vld [vmem:[#allocation2 + $0x2c] sm:$0xf]
        %v4621 = vld [vmem:[#allocation2 + $0x30] sm:$0xf]
        %v4622 = vld [vmem:[#allocation2 + $0x34] sm:$0xf]
        %v4623 = vld [vmem:[#allocation2 + $0x38] sm:$0xf]
        %v4624 = vld [vmem:[#allocation2 + $0x3c] sm:$0xf]
        %v4625 = vld [vmem:[%s400] sm:$0xff]
        %v4626 = vld [vmem:[%s400 + $0x8] sm:$0xff]
        %v4627 = vld [vmem:[%s400 + $0x10] sm:$0xff]
        %v4628 = vld [vmem:[%s400 + $0x18] sm:$0xff]
        %v4629 = vld [vmem:[%s400 + $0x20] sm:$0xff]
        %v4630 = vld [vmem:[%s400 + $0x28] sm:$0xff]
        %v4631 = vld [vmem:[%s400 + $0x30] sm:$0xff]
        %v4632 = vld [vmem:[%s400 + $0x38] sm:$0xff]
        %v4633 = vld [vmem:[%s400 + $0x40] sm:$0xff]
        %v4634 = vld [vmem:[%s400 + $0x48] sm:$0xff]
        %v4635 = vld [vmem:[%s400 + $0x50] sm:$0xff]
        %v4636 = vld [vmem:[%s400 + $0x58] sm:$0xff]
        %v4637 = vld [vmem:[%s400 + $0x60] sm:$0xff]
        %v4638 = vld [vmem:[%s400 + $0x68] sm:$0xff]
        %v4639 = vld [vmem:[%s400 + $0x70] sm:$0xff]
        %v4640 = vld [vmem:[%s400 + $0x78] sm:$0xff]
        %v4641 = vld [vmem:[%s405] sm:$0x3]
        %v4643 = vperm.slane %v4641, 0
        %v4644 = vperm.slane %v4641, 1
        %v4663 = vunpack.c.l.b16 %v4609
        %v4664 = vunpack.c.l.b16 %v4610
        %v4665 = vunpack.c.l.b16 %v4611
        %v4666 = vunpack.c.l.b16 %v4612
        %v4667 = vunpack.c.l.b16 %v4613
        %v4668 = vunpack.c.l.b16 %v4614
        %v4669 = vunpack.c.l.b16 %v4615
        %v4670 = vunpack.c.l.b16 %v4616
        %v4671 = vunpack.c.l.b16 %v4617
        %v4672 = vunpack.c.l.b16 %v4618
        %v4673 = vunpack.c.l.b16 %v4619
        %v4674 = vunpack.c.l.b16 %v4620
        %v4675 = vunpack.c.l.b16 %v4621
        %v4676 = vunpack.c.l.b16 %v4622
        %v4677 = vunpack.c.l.b16 %v4623
        %v4678 = vunpack.c.l.b16 %v4624
        %v4679 = vpack.c.b16 %v4664, %v4663
        %v4680 = vpack.c.b16 %v4666, %v4665
        %v4681 = vpack.c.b16 %v4668, %v4667
        %v4682 = vpack.c.b16 %v4670, %v4669
        %v4683 = vpack.c.b16 %v4672, %v4671
        %v4684 = vpack.c.b16 %v4674, %v4673
        %v4685 = vpack.c.b16 %v4676, %v4675
        %v4686 = vpack.c.b16 %v4678, %v4677
        %v4711 = vunpack.c.l.b16 %v4625
        %v4712 = vunpack.c.h.b16 %v4625
        %v4713 = vunpack.c.l.b16 %v4626
        %v4714 = vunpack.c.h.b16 %v4626
        %v4715 = vunpack.c.l.b16 %v4627
        %v4716 = vunpack.c.h.b16 %v4627
        %v4717 = vunpack.c.l.b16 %v4628
        %v4718 = vunpack.c.h.b16 %v4628
        %v4719 = vunpack.c.l.b16 %v4629
        %v4720 = vunpack.c.h.b16 %v4629
        %v4721 = vunpack.c.l.b16 %v4630
        %v4722 = vunpack.c.h.b16 %v4630
        %v4723 = vunpack.c.l.b16 %v4631
        %v4724 = vunpack.c.h.b16 %v4631
        %v4725 = vunpack.c.l.b16 %v4632
        %v4726 = vunpack.c.h.b16 %v4632
        %v4727 = vunpack.c.l.b16 %v4633
        %v4728 = vunpack.c.h.b16 %v4633
        %v4729 = vunpack.c.l.b16 %v4634
        %v4730 = vunpack.c.h.b16 %v4634
        %v4731 = vunpack.c.l.b16 %v4635
        %v4732 = vunpack.c.h.b16 %v4635
        %v4733 = vunpack.c.l.b16 %v4636
        %v4734 = vunpack.c.h.b16 %v4636
        %v4735 = vunpack.c.l.b16 %v4637
        %v4736 = vunpack.c.h.b16 %v4637
        %v4737 = vunpack.c.l.b16 %v4638
        %v4738 = vunpack.c.h.b16 %v4638
        %v4739 = vunpack.c.l.b16 %v4639
        %v4740 = vunpack.c.h.b16 %v4639
        %v4741 = vunpack.c.l.b16 %v4640
        %v4742 = vunpack.c.h.b16 %v4640
        %v4743 = vpack.c.b16 %v4713, %v4711
        %v4744 = vpack.c.b16 %v4714, %v4712
        %v4745 = vpack.c.b16 %v4717, %v4715
        %v4746 = vpack.c.b16 %v4718, %v4716
        %v4747 = vpack.c.b16 %v4721, %v4719
        %v4748 = vpack.c.b16 %v4722, %v4720
        %v4749 = vpack.c.b16 %v4725, %v4723
        %v4750 = vpack.c.b16 %v4726, %v4724
        %v4751 = vpack.c.b16 %v4729, %v4727
        %v4752 = vpack.c.b16 %v4730, %v4728
        %v4753 = vpack.c.b16 %v4733, %v4731
        %v4754 = vpack.c.b16 %v4734, %v4732
        %v4755 = vpack.c.b16 %v4737, %v4735
        %v4756 = vpack.c.b16 %v4738, %v4736
        %v4757 = vpack.c.b16 %v4741, %v4739
        %v4758 = vpack.c.b16 %v4742, %v4740
        %4775 = vmatpush.bf16.msra.mxu0 %v4757
        %4776 = vmatpush.bf16.msra.mxu0 %v4755
        %4777 = vmatpush.bf16.msra.mxu0 %v4753
        %4778 = vmatpush.bf16.msra.mxu0 %v4751
        %4779 = vmatpush.bf16.msra.mxu0 %v4749
        %4780 = vmatpush.bf16.msra.mxu0 %v4747
        %4781 = vmatpush.bf16.msra.mxu0 %v4745
        %4782 = vmatpush.bf16.msra.mxu0 %v4743
        %4783 = vmatmul.bf16.gmra.mxu0 %v4679
        %v4784 = vpop.f32.mrf.mxu0
        %v4785 = vadd.f32 %v4643, %v4784
        %v4786 = vpop.f32.mrf.mxu0
        %v4787 = vadd.f32 %v4643, %v4786
        %4788 = vmatmul.bf16.gmra.mxu0 %v4680
        %v4789 = vpop.f32.mrf.mxu0
        %v4790 = vadd.f32 %v4643, %v4789
        %v4791 = vpop.f32.mrf.mxu0
        %v4792 = vadd.f32 %v4643, %v4791
        %4793 = vmatmul.bf16.gmra.mxu0 %v4681
        %v4794 = vpop.f32.mrf.mxu0
        %v4795 = vadd.f32 %v4643, %v4794
        %v4796 = vpop.f32.mrf.mxu0
        %v4797 = vadd.f32 %v4643, %v4796
        %4798 = vmatmul.bf16.gmra.mxu0 %v4682
        %v4799 = vpop.f32.mrf.mxu0
        %v4800 = vadd.f32 %v4643, %v4799
        %v4801 = vpop.f32.mrf.mxu0
        %v4802 = vadd.f32 %v4643, %v4801
        %4803 = vmatmul.bf16.gmra.mxu0 %v4683
        %v4804 = vpop.f32.mrf.mxu0
        %v4805 = vadd.f32 %v4643, %v4804
        %v4806 = vpop.f32.mrf.mxu0
        %v4807 = vadd.f32 %v4643, %v4806
        %4808 = vmatmul.bf16.gmra.mxu0 %v4684
        %v4809 = vpop.f32.mrf.mxu0
        %v4810 = vadd.f32 %v4643, %v4809
        %v4811 = vpop.f32.mrf.mxu0
        %v4812 = vadd.f32 %v4643, %v4811
        %4813 = vmatmul.bf16.gmra.mxu0 %v4685
        %v4814 = vpop.f32.mrf.mxu0
        %v4815 = vadd.f32 %v4643, %v4814
        %v4816 = vpop.f32.mrf.mxu0
        %v4817 = vadd.f32 %v4643, %v4816
        %4818 = vmatmul.bf16.gmra.mxu0 %v4686
        %v4819 = vpop.f32.mrf.mxu0
        %v4820 = vadd.f32 %v4643, %v4819
        %v4821 = vpop.f32.mrf.mxu0
        %v4822 = vadd.f32 %v4643, %v4821
        %4823 = vdwg.mxu0
        %4824 = vmatpush.bf16.msra.mxu0 %v4758
        %4825 = vmatpush.bf16.msra.mxu0 %v4756
        %4826 = vmatpush.bf16.msra.mxu0 %v4754
        %4827 = vmatpush.bf16.msra.mxu0 %v4752
        %4828 = vmatpush.bf16.msra.mxu0 %v4750
        %4829 = vmatpush.bf16.msra.mxu0 %v4748
        %4830 = vmatpush.bf16.msra.mxu0 %v4746
        %4831 = vmatpush.bf16.msra.mxu0 %v4744
        %4832 = vmatmul.bf16.gmra.mxu0 %v4679
        %v4833 = vpop.f32.mrf.mxu0
        %v4834 = vadd.f32 %v4644, %v4833
        %v4835 = vpop.f32.mrf.mxu0
        %v4836 = vadd.f32 %v4644, %v4835
        %4837 = vmatmul.bf16.gmra.mxu0 %v4680
        %v4838 = vpop.f32.mrf.mxu0
        %v4839 = vadd.f32 %v4644, %v4838
        %v4840 = vpop.f32.mrf.mxu0
        %v4841 = vadd.f32 %v4644, %v4840
        %4842 = vmatmul.bf16.gmra.mxu0 %v4681
        %v4843 = vpop.f32.mrf.mxu0
        %v4844 = vadd.f32 %v4644, %v4843
        %v4845 = vpop.f32.mrf.mxu0
        %v4846 = vadd.f32 %v4644, %v4845
        %4847 = vmatmul.bf16.gmra.mxu0 %v4682
        %v4848 = vpop.f32.mrf.mxu0
        %v4849 = vadd.f32 %v4644, %v4848
        %v4850 = vpop.f32.mrf.mxu0
        %v4851 = vadd.f32 %v4644, %v4850
        %4852 = vmatmul.bf16.gmra.mxu0 %v4683
        %v4853 = vpop.f32.mrf.mxu0
        %v4854 = vadd.f32 %v4644, %v4853
        %v4855 = vpop.f32.mrf.mxu0
        %v4856 = vadd.f32 %v4644, %v4855
        %4857 = vmatmul.bf16.gmra.mxu0 %v4684
        %v4858 = vpop.f32.mrf.mxu0
        %v4859 = vadd.f32 %v4644, %v4858
        %v4860 = vpop.f32.mrf.mxu0
        %v4861 = vadd.f32 %v4644, %v4860
        %4862 = vmatmul.bf16.gmra.mxu0 %v4685
        %v4863 = vpop.f32.mrf.mxu0
        %v4864 = vadd.f32 %v4644, %v4863
        %v4865 = vpop.f32.mrf.mxu0
        %v4866 = vadd.f32 %v4644, %v4865
        %4867 = vmatmul.bf16.gmra.mxu0 %v4686
        %v4868 = vpop.f32.mrf.mxu0
        %v4869 = vadd.f32 %v4644, %v4868
        %v4870 = vpop.f32.mrf.mxu0
        %v4871 = vadd.f32 %v4644, %v4870
        %4872 = vdwg.mxu0
        %4873 = vst [vmem:[%s389] sm:$0xff] %v4785
        %4874 = vst [vmem:[%s389 + $0x8] sm:$0xff] %v4834
        %4875 = vst [vmem:[%s389 + $0x10] sm:$0xff] %v4787
        %4876 = vst [vmem:[%s389 + $0x18] sm:$0xff] %v4836
        %4877 = vst [vmem:[%s389 + $0x20] sm:$0xff] %v4790
        %4878 = vst [vmem:[%s389 + $0x28] sm:$0xff] %v4839
        %4879 = vst [vmem:[%s389 + $0x30] sm:$0xff] %v4792
        %4880 = vst [vmem:[%s389 + $0x38] sm:$0xff] %v4841
        %4881 = vst [vmem:[%s389 + $0x40] sm:$0xff] %v4795
        %4882 = vst [vmem:[%s389 + $0x48] sm:$0xff] %v4844
        %4883 = vst [vmem:[%s389 + $0x50] sm:$0xff] %v4797
        %4884 = vst [vmem:[%s389 + $0x58] sm:$0xff] %v4846
        %4885 = vst [vmem:[%s389 + $0x60] sm:$0xff] %v4800
        %4886 = vst [vmem:[%s389 + $0x68] sm:$0xff] %v4849
        %4887 = vst [vmem:[%s389 + $0x70] sm:$0xff] %v4802
        %4888 = vst [vmem:[%s389 + $0x78] sm:$0xff] %v4851
        %4889 = vst [vmem:[%s389 + $0x80] sm:$0xff] %v4805
        %4890 = vst [vmem:[%s389 + $0x88] sm:$0xff] %v4854
        %4891 = vst [vmem:[%s389 + $0x90] sm:$0xff] %v4807
        %4892 = vst [vmem:[%s389 + $0x98] sm:$0xff] %v4856
        %4893 = vst [vmem:[%s389 + $0xa0] sm:$0xff] %v4810
        %4894 = vst [vmem:[%s389 + $0xa8] sm:$0xff] %v4859
        %4895 = vst [vmem:[%s389 + $0xb0] sm:$0xff] %v4812
        %4896 = vst [vmem:[%s389 + $0xb8] sm:$0xff] %v4861
        %4897 = vst [vmem:[%s389 + $0xc0] sm:$0xff] %v4815
        %4898 = vst [vmem:[%s389 + $0xc8] sm:$0xff] %v4864
        %4899 = vst [vmem:[%s389 + $0xd0] sm:$0xff] %v4817
        %4900 = vst [vmem:[%s389 + $0xd8] sm:$0xff] %v4866
        %4901 = vst [vmem:[%s389 + $0xe0] sm:$0xff] %v4820
        %4902 = vst [vmem:[%s389 + $0xe8] sm:$0xff] %v4869
        %4903 = vst [vmem:[%s389 + $0xf0] sm:$0xff] %v4822
        %4904 = vst [vmem:[%s389 + $0xf8] sm:$0xff] %v4871
        %s4905 = sand.u32 %s229, 1
        %s4906 = scalar_lea.sflag [#allocation5], %s4905
        %s4907 = sand.u32 %s229, 1
        %s4908 = smul.addr %s4907, 256
        %s4909 = scalar_lea.vmem [#allocation9], %s4908
        // Predicated region
        $region69: #{tpu_custom_call.1} parent=51 // pred_check
          %p4910 = pneg %p239
        $region70: #{tpu_custom_call.1} parent=51 // pred_check_branch
          %4912 = sbr.rel (%p4910) target = $region72
        $region71: #{tpu_custom_call.1} parent=51 // pred_region
          %s4913 = smul.u32 16, %s28
          %s4914 = smul.u32 2, %s29
          %4916 = vsyncadd %s4906, 0
          %s4917 = smul.addr %s4913, 2
          %s4918 = sadd.s32 %s4914, %s4917
          %s4919 = smul.addr %s4918, 8
          %s4920 = scalar_lea.hbm %s8, %s4919
          %s4921 = sshll.u32 %s4909, 4
          %s4922 = int_to_ptr.vmem [resolvable:$true] %s4921
          %s4923 = sshll.u32 %s4920, 4
          %s4924 = int_to_ptr.hbm [resolvable:$true] %s4923
          %4929 = dma.vmem_to_hbm [thread:$0]  %s4922, 4096, %s4924, %s4906, 256, 256, 16
        $region72: #{tpu_custom_call.1} parent=51 // pred_fallthru
          _
      $region52: #{tpu_custom_call.1} parent=5 // pred_fallthru
        _
      %p4930 = scmp.le.s32.totalorder 2, %s19
      // Predicated region
      $region73: #{tpu_custom_call.1} parent=5 // pred_check
        %p4931 = pneg %p4930
      $region74: #{tpu_custom_call.1} parent=5 // pred_check_branch
        %4933 = sbr.rel (%p4931) target = $region76
      $region75: #{tpu_custom_call.1} parent=5 // pred_region
        %s4934 = ssub.s32 %s19, 2
        // Predicated region
        $region77: #{tpu_custom_call.1} parent=75 // pred_check
          %p4935 = pneg %p245
        $region78: #{tpu_custom_call.1} parent=75 // pred_check_branch
          %4937 = sbr.rel (%p4935) target = $region80
        $region79: #{tpu_custom_call.1} parent=75 // pred_region
          %s4938 = sand.u32 %s230, 1
          %s4939 = scalar_lea.sflag [#allocation5], %s4938
          %s4940 = sand.u32 %s230, 1
          %s4941 = smul.addr %s4940, 256
          %s4942 = scalar_lea.vmem [#allocation9], %s4941
          %4944 = dma.done %s4939, 4096
        $region80: #{tpu_custom_call.1} parent=75 // pred_fallthru
          _
      $region76: #{tpu_custom_call.1} parent=5 // pred_fallthru
        _
    $region6: #{tpu_custom_call.1} parent=1 // loop_footer
      %s23 = sadd.s32 1, %s19
    $region7: #{tpu_custom_call.1} parent=1 // loop_footer_branch
      %18 = sbr.rel target = $region3
    $region8: #{tpu_custom_call.1} parent=1 // loop_exit
      _
    %4945 = vsyncpa [#allocation4], 1
    %s4946 = scalar_lea.sflag [#allocation4], 1
    %4947 = vsyncpa %s4946, 1
    %4948 = vsyncpa [#allocation7], 1
    %4949 = vsyncpa [#allocation5], 1
    %s4950 = scalar_lea.sflag [#allocation5], 1
    %4951 = vsyncpa %s4950, 1

</llo_original>
